<compile_context>
chip_gen: v7x
topology: tpu7x:2x2x1
jax: 0.10.0
libtpu: 0.0.40
codegen_flags: <defaults>
</compile_context>

<pallas_src>
import math
from functools import partial

import jax
import jax.numpy as jnp
from jax.experimental import pallas as pl
from jax.experimental.pallas import tpu as pltpu

EPS_LN = 1e-12   # SegmentEncoding / Encoder LayerNorms are built with eps=1e-12
OUT_PAD = 128    # lane-dense padded width for the 3-way classifier scores


def _gelu(x):
    # Exact erf-based gelu, matching the PyTorch `gelu` helper.
    return x * 0.5 * (1.0 + jax.lax.erf(x / math.sqrt(2.0)))


def _layernorm(x, w, b, eps):
    mean = jnp.mean(x, axis=-1, keepdims=True)
    xc = x - mean                                   # centered value reused
    var = jnp.mean(xc * xc, axis=-1, keepdims=True)
    return w * (xc * jax.lax.rsqrt(var + eps)) + b  # rsqrt -> EUP slot


def _softmax(x):
    m = jnp.max(x, axis=-1, keepdims=True)
    e = jnp.exp(x - m)
    return e * pl.reciprocal(jnp.sum(e, axis=-1, keepdims=True), approx=True)


def bertse_kernel(
    x_ref, pos_ref, seg_ref,
    hw_w_ref, hw_b_ref, hw_fw_ref, hw_fb_ref,
    seg_ln_ref,
    wqkv_ref, bqkv_ref, wo_ref, w1_ref, b1_ref, w2_ref, lvec_ref,
    fln_ref, cls_w_ref, cls_b_ref, sim_w_ref, sim_b_ref,
    out_ref,
    *, num_layers, heads, num_hw_layers,
):
    xb = x_ref[...].astype(jnp.float32)              # [bb, T, D]
    bb, T, D = xb.shape
    M = bb * T
    dk = D // heads
    scale = 1.0 / math.sqrt(dk)

    x = xb.reshape(M, D)                             # row-wise 2D view

    # ---------------- Highway: fused (transform | gate) matmul + fc ------
    for i in range(num_hw_layers):
        hg = jnp.dot(x, hw_w_ref[i], preferred_element_type=jnp.float32) + hw_b_ref[i]
        h = _gelu(hg[:, :D])
        t = jax.nn.sigmoid(hg[:, D:])
        x = t * h + (1.0 - t) * x
    x = jnp.dot(x, hw_fw_ref[...], preferred_element_type=jnp.float32) + hw_fb_ref[...]

    # ---------------- Positional + segment encodings ---------------------
    x = (x.reshape(bb, T, D) + pos_ref[...] + seg_ref[...]).reshape(M, D)
    x = _layernorm(x, seg_ln_ref[0:1], seg_ln_ref[1:2], EPS_LN)

    def split_heads(t2d):                            # [M, D] -> [bb*heads, T, dk]
        t4 = t2d.reshape(bb, T, heads, dk)
        return jnp.transpose(t4, (0, 2, 1, 3)).reshape(bb * heads, T, dk)

    # ---------------- Transformer encoder layers -------------------------
    for l in range(num_layers):
        lv = lvec_ref[l]                             # [6, D]: niw,nib,now,nob,bo,b2
        niw, nib = lv[0:1], lv[1:2]
        now, nob = lv[2:3], lv[3:4]
        bo, b2 = lv[4:5], lv[5:6]

        # --- self-attention (fused QKV projection, batched per-head einsum)
        res = _layernorm(x, niw, nib, EPS_LN)
        qkv = jnp.dot(res, wqkv_ref[l], preferred_element_type=jnp.float32) + bqkv_ref[l]
        q = split_heads(qkv[:, 0 * D:1 * D])
        k = split_heads(qkv[:, 1 * D:2 * D])
        v = split_heads(qkv[:, 2 * D:3 * D])

        s = jnp.einsum("bqd,bkd->bqk", q, k,
                       preferred_element_type=jnp.float32) * scale
        p = _softmax(s)
        o = jnp.einsum("bqk,bkd->bqd", p, v,
                       preferred_element_type=jnp.float32)       # [bb*heads, T, dk]
        attn = jnp.transpose(o.reshape(bb, heads, T, dk),
                             (0, 2, 1, 3)).reshape(M, D)
        attn = jnp.dot(attn, wo_ref[l], preferred_element_type=jnp.float32) + bo
        x = x + attn

        # --- feed-forward
        res = _layernorm(x, now, nob, EPS_LN)
        ff = _gelu(jnp.dot(res, w1_ref[l], preferred_element_type=jnp.float32)
                   + b1_ref[l])
        ff = jnp.dot(ff, w2_ref[l], preferred_element_type=jnp.float32) + b2
        x = x + ff

    x = _layernorm(x, fln_ref[0:1], fln_ref[1:2], EPS_LN)

    # ---------------- Pooling: [CLS], max over T, mean over T ------------
    x3 = x.reshape(bb, T, D)
    pool = x3[:, 0, :]
    xmax = jnp.max(x3, axis=1)
    xave = jnp.mean(x3, axis=1)
    feat = jnp.concatenate([pool, xmax, xave], axis=-1)          # [bb, 3D]

    # ---------------- Classifier (lane-dense padded output) --------------
    hcls = jnp.tanh(jnp.dot(feat, cls_w_ref[...],
                            preferred_element_type=jnp.float32) + cls_b_ref[...])
    score = jnp.dot(hcls, sim_w_ref[...],
                    preferred_element_type=jnp.float32) + sim_b_ref[...]   # [bb, 128]
    out_ref[...] = score.reshape(bb, 1, score.shape[-1])


def bertse_forward(qa, segment_ids, position_ids, params, *, num_layers, heads):
    """qa: [B, T, D] float32, segment_ids: [B, T] int32, position_ids unused
    (the PyTorch PositionalEncoding regenerates arange(T) internally)."""
    del position_ids
    B, T, D = qa.shape

    # Embedding lookups are glue (gather) done in plain JAX.
    pos_emb = params["pos_table"][:T]                                   # [T, D]
    seg_emb = jnp.take(params["seg_table"], segment_ids, axis=0)        # [B, T, D]

    # Pack small per-layer tensors into a few contiguous refs (fewer DMAs).
    hw_w = jnp.concatenate([params["hw_lw"], params["hw_gw"]], axis=-1)     # [2, D, 2D]
    hw_b = jnp.concatenate([params["hw_lb"], params["hw_gb"]], axis=-1)     # [2, 1, 2D]
    seg_ln = jnp.concatenate([params["seg_lnw"], params["seg_lnb"]], axis=0)  # [2, D]
    wqkv = jnp.concatenate([params["wq"], params["wk"], params["wv"]], axis=-1)  # [N, D, 3D]
    bqkv = jnp.concatenate([params["bq"], params["bk"], params["bv"]], axis=-1)  # [N, 1, 3D]
    lvec = jnp.concatenate([params["niw"], params["nib"], params["now"],
                            params["nob"], params["bo"], params["b2"]], axis=1)  # [N, 6, D]
    fln = jnp.concatenate([params["fln_w"], params["fln_b"]], axis=0)       # [2, D]
    sim_w = jnp.pad(params["sim_w"],
                    ((0, 0), (0, OUT_PAD - params["sim_w"].shape[-1])))      # [3D, 128]
    sim_b = jnp.pad(params["sim_b"],
                    ((0, 0), (0, OUT_PAD - params["sim_b"].shape[-1])))      # [1, 128]

    weights = [hw_w, hw_b, params["hw_fw"], params["hw_fb"], seg_ln,
               wqkv, bqkv, params["wo"], params["w1"], params["b1"], params["w2"],
               lvec, fln, params["cls_w"], params["cls_b"], sim_w, sim_b]

    # At most 2 grid steps: keeps both v7x TensorCores busy while costing only
    # ~2 grid-step overheads on single-core chips.
    num_steps = 2 if (B >= 2 and B % 2 == 0) else 1
    bb = B // num_steps

    def full_spec(shape):
        nd = len(shape)
        return pl.BlockSpec(tuple(shape), lambda b, nd=nd: (0,) * nd)

    def batch_spec(shape):
        nd = len(shape)
        return pl.BlockSpec((bb,) + tuple(shape[1:]),
                            lambda b, nd=nd: (b,) + (0,) * (nd - 1))

    in_specs = ([batch_spec(qa.shape),            # x block [bb, T, D]
                 full_spec(pos_emb.shape),        # positional embedding slice
                 batch_spec(seg_emb.shape)]       # gathered segment embedding
                + [full_spec(w.shape) for w in weights])

    out = pl.pallas_call(
        partial(bertse_kernel, num_layers=num_layers, heads=heads, num_hw_layers=2),
        grid=(num_steps,),
        in_specs=in_specs,
        out_specs=pl.BlockSpec((bb, 1, OUT_PAD), lambda b: (b, 0, 0)),
        out_shape=jax.ShapeDtypeStruct((B, 1, OUT_PAD), jnp.float32),
        compiler_params=pltpu.CompilerParams(
            dimension_semantics=("parallel",),
            vmem_limit_bytes=8 * 1024 * 1024),
    )(qa, pos_emb, seg_emb, *weights)
    return out[:, 0, :3]                                                  # [B, 3]


def init_params(key, D, FF, N):
    """Deterministic synthetic init mirroring BERTse.initialize_weights:
    Linear/Embedding weights ~ N(0, 0.02), biases 0, LayerNorm (1, 0)."""
    keys = iter(jax.random.split(key, 64))
    nrm = lambda shape: 0.02 * jax.random.normal(next(keys), shape, jnp.float32)
    zeros = lambda shape: jnp.zeros(shape, jnp.float32)
    ones = lambda shape: jnp.ones(shape, jnp.float32)
    # NOTE: linear weights stored pre-transposed as [in, out] (y = x @ W + b).
    return {
        # Highway: 2 transform + 2 gate linears, plus fc (D -> D)
        "hw_lw": nrm((2, D, D)), "hw_lb": zeros((2, 1, D)),
        "hw_gw": nrm((2, D, D)), "hw_gb": zeros((2, 1, D)),
        "hw_fw": nrm((D, D)),    "hw_fb": zeros((1, D)),
        # Positional / segment embedding tables
        "pos_table": nrm((128, D)),
        "seg_table": nrm((4, D)),
        "seg_lnw": ones((1, D)), "seg_lnb": zeros((1, D)),
        # Encoder layers (stacked along leading layer axis)
        "niw": ones((N, 1, D)), "nib": zeros((N, 1, D)),
        "wq": nrm((N, D, D)), "bq": zeros((N, 1, D)),
        "wk": nrm((N, D, D)), "bk": zeros((N, 1, D)),
        "wv": nrm((N, D, D)), "bv": zeros((N, 1, D)),
        "wo": nrm((N, D, D)), "bo": zeros((N, 1, D)),
        "now": ones((N, 1, D)), "nob": zeros((N, 1, D)),
        "w1": nrm((N, D, FF)), "b1": zeros((N, 1, FF)),
        "w2": nrm((N, FF, D)), "b2": zeros((N, 1, D)),
        "fln_w": ones((1, D)), "fln_b": zeros((1, D)),
        # Classifier: Linear(3D,3D) -> tanh -> Linear(3D,3)
        "cls_w": nrm((3 * D, 3 * D)), "cls_b": zeros((1, 3 * D)),
        "sim_w": nrm((3 * D, 3)),     "sim_b": zeros((1, 3)),
    }


if __name__ == "__main__":
    # Small shapes consistent with the module: B=2, T=8, embd_dim=32,
    # heads=4, hidden_size (d_ff)=64, num_layers=2.
    B, T, D, HEADS, FF, N = 2, 8, 32, 4, 64, 2

    root = jax.random.PRNGKey(0)
    k_param, k_x, k_seg = jax.random.split(root, 3)

    params = init_params(k_param, D, FF, N)
    qa = jax.random.normal(k_x, (B, T, D), jnp.float32)
    segment_ids = jax.random.randint(k_seg, (B, T), 0, 2, jnp.int32)
    position_ids = jnp.broadcast_to(jnp.arange(T, dtype=jnp.int32), (B, T))

    # TODO(synk): attention mask / concept-bias paths are not implemented
    # (defaults mask=None, concept=None; concept_layers=[-1] never triggers).
    score = bertse_forward(qa, segment_ids, position_ids, params,
                           num_layers=N, heads=HEADS)
    score = jax.block_until_ready(score)
    assert score.shape == (B, 3) and bool(jnp.all(jnp.isfinite(score)))
    print("KERNEL_OK")
</pallas_src>

<mosaic_0001>
module attributes {stable_mosaic.version = 11 : i64} {
  func.func @bertse_kernel(%arg0: i32, %arg1: memref<1x8x32xf32, #tpu.memory_space<vmem>>, %arg2: memref<8x32xf32, #tpu.memory_space<vmem>>, %arg3: memref<1x8x32xf32, #tpu.memory_space<vmem>>, %arg4: memref<2x32x64xf32, #tpu.memory_space<vmem>>, %arg5: memref<2x1x64xf32, #tpu.memory_space<vmem>>, %arg6: memref<32x32xf32, #tpu.memory_space<vmem>>, %arg7: memref<1x32xf32, #tpu.memory_space<vmem>>, %arg8: memref<2x32xf32, #tpu.memory_space<vmem>>, %arg9: memref<2x32x96xf32, #tpu.memory_space<vmem>>, %arg10: memref<2x1x96xf32, #tpu.memory_space<vmem>>, %arg11: memref<2x32x32xf32, #tpu.memory_space<vmem>>, %arg12: memref<2x32x64xf32, #tpu.memory_space<vmem>>, %arg13: memref<2x1x64xf32, #tpu.memory_space<vmem>>, %arg14: memref<2x64x32xf32, #tpu.memory_space<vmem>>, %arg15: memref<2x6x32xf32, #tpu.memory_space<vmem>>, %arg16: memref<2x32xf32, #tpu.memory_space<vmem>>, %arg17: memref<96x96xf32, #tpu.memory_space<vmem>>, %arg18: memref<1x96xf32, #tpu.memory_space<vmem>>, %arg19: memref<96x128xf32, #tpu.memory_space<vmem>>, %arg20: memref<1x128xf32, #tpu.memory_space<vmem>>, %arg21: memref<1x1x128xf32, #tpu.memory_space<vmem>>) attributes {dimension_semantics = [#tpu.dimension_semantics<parallel>], iteration_bounds = array<i64: 2>, scalar_prefetch = 0 : i64, scratch_operands = 0 : i64, tpu.core_type = #tpu.core_type<tc>, window_params = [{transform_indices = @transform_0, window_bounds = array<i64: 1, 8, 32>}, {pipeline_mode = #tpu.pipeline_mode<synchronous>, transform_indices = @transform_1, window_bounds = array<i64: 8, 32>}, {transform_indices = @transform_2, window_bounds = array<i64: 1, 8, 32>}, {pipeline_mode = #tpu.pipeline_mode<synchronous>, transform_indices = @transform_3, window_bounds = array<i64: 2, 32, 64>}, {pipeline_mode = #tpu.pipeline_mode<synchronous>, transform_indices = @transform_4, window_bounds = array<i64: 2, 1, 64>}, {pipeline_mode = #tpu.pipeline_mode<synchronous>, transform_indices = @transform_5, window_bounds = array<i64: 32, 32>}, {pipeline_mode = #tpu.pipeline_mode<synchronous>, transform_indices = @transform_6, window_bounds = array<i64: 1, 32>}, {pipeline_mode = #tpu.pipeline_mode<synchronous>, transform_indices = @transform_7, window_bounds = array<i64: 2, 32>}, {pipeline_mode = #tpu.pipeline_mode<synchronous>, transform_indices = @transform_8, window_bounds = array<i64: 2, 32, 96>}, {pipeline_mode = #tpu.pipeline_mode<synchronous>, transform_indices = @transform_9, window_bounds = array<i64: 2, 1, 96>}, {pipeline_mode = #tpu.pipeline_mode<synchronous>, transform_indices = @transform_10, window_bounds = array<i64: 2, 32, 32>}, {pipeline_mode = #tpu.pipeline_mode<synchronous>, transform_indices = @transform_11, window_bounds = array<i64: 2, 32, 64>}, {pipeline_mode = #tpu.pipeline_mode<synchronous>, transform_indices = @transform_12, window_bounds = array<i64: 2, 1, 64>}, {pipeline_mode = #tpu.pipeline_mode<synchronous>, transform_indices = @transform_13, window_bounds = array<i64: 2, 64, 32>}, {pipeline_mode = #tpu.pipeline_mode<synchronous>, transform_indices = @transform_14, window_bounds = array<i64: 2, 6, 32>}, {pipeline_mode = #tpu.pipeline_mode<synchronous>, transform_indices = @transform_15, window_bounds = array<i64: 2, 32>}, {pipeline_mode = #tpu.pipeline_mode<synchronous>, transform_indices = @transform_16, window_bounds = array<i64: 96, 96>}, {pipeline_mode = #tpu.pipeline_mode<synchronous>, transform_indices = @transform_17, window_bounds = array<i64: 1, 96>}, {pipeline_mode = #tpu.pipeline_mode<synchronous>, transform_indices = @transform_18, window_bounds = array<i64: 96, 128>}, {pipeline_mode = #tpu.pipeline_mode<synchronous>, transform_indices = @transform_19, window_bounds = array<i64: 1, 128>}, {transform_indices = @transform_20, window_bounds = array<i64: 1, 1, 128>}]} {
    %c0 = arith.constant 0 : index
    %c0_0 = arith.constant 0 : index
    %c0_1 = arith.constant 0 : index
    %0 = vector.load %arg1[%c0, %c0_0, %c0_1] : memref<1x8x32xf32, #tpu.memory_space<vmem>>, vector<1x8x32xf32>
    %1 = vector.shape_cast %0 : vector<1x8x32xf32> to vector<8x32xf32>
    %c0_2 = arith.constant 0 : index
    %c0_3 = arith.constant 0 : index
    %c0_4 = arith.constant 0 : index
    %2 = vector.load %arg4[%c0_2, %c0_3, %c0_4] : memref<2x32x64xf32, #tpu.memory_space<vmem>>, vector<1x32x64xf32>
    %3 = vector.shape_cast %2 : vector<1x32x64xf32> to vector<32x64xf32>
    %cst = arith.constant dense<0.000000e+00> : vector<8x64xf32>
    %4 = tpu.matmul %1, %3, %cst {dimension_numbers = #tpu.dot_dimension_numbers<[1], [0], [0], [1], [0, 0, 1, 1], [], []>} : vector<8x32xf32>, vector<32x64xf32>, vector<8x64xf32> -> vector<8x64xf32>
    %c0_5 = arith.constant 0 : index
    %c0_6 = arith.constant 0 : index
    %c0_7 = arith.constant 0 : index
    %5 = vector.load %arg5[%c0_5, %c0_6, %c0_7] : memref<2x1x64xf32, #tpu.memory_space<vmem>>, vector<1x1x64xf32>
    %6 = vector.shape_cast %5 : vector<1x1x64xf32> to vector<1x64xf32>
    %7 = vector.broadcast %6 : vector<1x64xf32> to vector<8x64xf32>
    %8 = arith.addf %4, %7 : vector<8x64xf32>
    %9 = vector.extract_strided_slice %8 {offsets = [0, 0], sizes = [8, 32], strides = [1, 1]} : vector<8x64xf32> to vector<8x32xf32>
    %cst_8 = arith.constant 5.000000e-01 : f32
    %10 = vector.broadcast %cst_8 : f32 to vector<8x32xf32>
    %11 = arith.mulf %9, %10 : vector<8x32xf32>
    %cst_9 = arith.constant 1.41421354 : f32
    %12 = vector.broadcast %cst_9 : f32 to vector<8x32xf32>
    %13 = arith.divf %9, %12 : vector<8x32xf32>
    %14 = math.erf %13 : vector<8x32xf32>
    %cst_10 = arith.constant 1.000000e+00 : f32
    %15 = vector.broadcast %cst_10 : f32 to vector<8x32xf32>
    %16 = arith.addf %15, %14 : vector<8x32xf32>
    %17 = arith.mulf %11, %16 : vector<8x32xf32>
    %18 = vector.extract_strided_slice %8 {offsets = [0, 32], sizes = [8, 32], strides = [1, 1]} : vector<8x64xf32> to vector<8x32xf32>
    %19 = arith.negf %18 : vector<8x32xf32>
    %20 = math.exp %19 : vector<8x32xf32>
    %cst_11 = arith.constant 1.000000e+00 : f32
    %21 = vector.broadcast %cst_11 : f32 to vector<8x32xf32>
    %22 = arith.addf %21, %20 : vector<8x32xf32>
    %23 = arith.divf %21, %22 : vector<8x32xf32>
    %24 = arith.mulf %23, %17 : vector<8x32xf32>
    %cst_12 = arith.constant 1.000000e+00 : f32
    %25 = vector.broadcast %cst_12 : f32 to vector<8x32xf32>
    %26 = arith.subf %25, %23 : vector<8x32xf32>
    %27 = arith.mulf %26, %1 : vector<8x32xf32>
    %28 = arith.addf %24, %27 : vector<8x32xf32>
    %c1 = arith.constant 1 : index
    %c0_13 = arith.constant 0 : index
    %c0_14 = arith.constant 0 : index
    %29 = vector.load %arg4[%c1, %c0_13, %c0_14] : memref<2x32x64xf32, #tpu.memory_space<vmem>>, vector<1x32x64xf32>
    %30 = vector.shape_cast %29 : vector<1x32x64xf32> to vector<32x64xf32>
    %cst_15 = arith.constant dense<0.000000e+00> : vector<8x64xf32>
    %31 = tpu.matmul %28, %30, %cst_15 {dimension_numbers = #tpu.dot_dimension_numbers<[1], [0], [0], [1], [0, 0, 1, 1], [], []>} : vector<8x32xf32>, vector<32x64xf32>, vector<8x64xf32> -> vector<8x64xf32>
    %c1_16 = arith.constant 1 : index
    %c0_17 = arith.constant 0 : index
    %c0_18 = arith.constant 0 : index
    %32 = vector.load %arg5[%c1_16, %c0_17, %c0_18] : memref<2x1x64xf32, #tpu.memory_space<vmem>>, vector<1x1x64xf32>
    %33 = vector.shape_cast %32 : vector<1x1x64xf32> to vector<1x64xf32>
    %34 = vector.broadcast %33 : vector<1x64xf32> to vector<8x64xf32>
    %35 = arith.addf %31, %34 : vector<8x64xf32>
    %36 = vector.extract_strided_slice %35 {offsets = [0, 0], sizes = [8, 32], strides = [1, 1]} : vector<8x64xf32> to vector<8x32xf32>
    %cst_19 = arith.constant 5.000000e-01 : f32
    %37 = vector.broadcast %cst_19 : f32 to vector<8x32xf32>
    %38 = arith.mulf %36, %37 : vector<8x32xf32>
    %cst_20 = arith.constant 1.41421354 : f32
    %39 = vector.broadcast %cst_20 : f32 to vector<8x32xf32>
    %40 = arith.divf %36, %39 : vector<8x32xf32>
    %41 = math.erf %40 : vector<8x32xf32>
    %cst_21 = arith.constant 1.000000e+00 : f32
    %42 = vector.broadcast %cst_21 : f32 to vector<8x32xf32>
    %43 = arith.addf %42, %41 : vector<8x32xf32>
    %44 = arith.mulf %38, %43 : vector<8x32xf32>
    %45 = vector.extract_strided_slice %35 {offsets = [0, 32], sizes = [8, 32], strides = [1, 1]} : vector<8x64xf32> to vector<8x32xf32>
    %46 = arith.negf %45 : vector<8x32xf32>
    %47 = math.exp %46 : vector<8x32xf32>
    %cst_22 = arith.constant 1.000000e+00 : f32
    %48 = vector.broadcast %cst_22 : f32 to vector<8x32xf32>
    %49 = arith.addf %48, %47 : vector<8x32xf32>
    %50 = arith.divf %48, %49 : vector<8x32xf32>
    %51 = arith.mulf %50, %44 : vector<8x32xf32>
    %cst_23 = arith.constant 1.000000e+00 : f32
    %52 = vector.broadcast %cst_23 : f32 to vector<8x32xf32>
    %53 = arith.subf %52, %50 : vector<8x32xf32>
    %54 = arith.mulf %53, %28 : vector<8x32xf32>
    %55 = arith.addf %51, %54 : vector<8x32xf32>
    %c0_24 = arith.constant 0 : index
    %c0_25 = arith.constant 0 : index
    %56 = vector.load %arg6[%c0_24, %c0_25] : memref<32x32xf32, #tpu.memory_space<vmem>>, vector<32x32xf32>
    %cst_26 = arith.constant dense<0.000000e+00> : vector<8x32xf32>
    %57 = tpu.matmul %55, %56, %cst_26 {dimension_numbers = #tpu.dot_dimension_numbers<[1], [0], [0], [1], [0, 0, 1, 1], [], []>} : vector<8x32xf32>, vector<32x32xf32>, vector<8x32xf32> -> vector<8x32xf32>
    %c0_27 = arith.constant 0 : index
    %c0_28 = arith.constant 0 : index
    %58 = vector.load %arg7[%c0_27, %c0_28] : memref<1x32xf32, #tpu.memory_space<vmem>>, vector<1x32xf32>
    %59 = vector.broadcast %58 : vector<1x32xf32> to vector<8x32xf32>
    %60 = arith.addf %57, %59 : vector<8x32xf32>
    %61 = vector.shape_cast %60 : vector<8x32xf32> to vector<1x8x32xf32>
    %c0_29 = arith.constant 0 : index
    %c0_30 = arith.constant 0 : index
    %62 = vector.load %arg2[%c0_29, %c0_30] : memref<8x32xf32, #tpu.memory_space<vmem>>, vector<8x32xf32>
    %63 = vector.shape_cast %62 : vector<8x32xf32> to vector<1x8x32xf32>
    %64 = arith.addf %61, %63 : vector<1x8x32xf32>
    %c0_31 = arith.constant 0 : index
    %c0_32 = arith.constant 0 : index
    %c0_33 = arith.constant 0 : index
    %65 = vector.load %arg3[%c0_31, %c0_32, %c0_33] : memref<1x8x32xf32, #tpu.memory_space<vmem>>, vector<1x8x32xf32>
    %66 = arith.addf %64, %65 : vector<1x8x32xf32>
    %67 = vector.shape_cast %66 : vector<1x8x32xf32> to vector<8x32xf32>
    %c0_34 = arith.constant 0 : index
    %c0_35 = arith.constant 0 : index
    %68 = vector.load %arg8[%c0_34, %c0_35] : memref<2x32xf32, #tpu.memory_space<vmem>>, vector<1x32xf32>
    %c1_36 = arith.constant 1 : index
    %c0_37 = arith.constant 0 : index
    %69 = vector.load %arg8[%c1_36, %c0_37] : memref<2x32xf32, #tpu.memory_space<vmem>>, vector<1x32xf32>
    %cst_38 = arith.constant dense<0.000000e+00> : vector<8xf32>
    %70 = vector.multi_reduction <add>, %67, %cst_38 [1] : vector<8x32xf32> to vector<8xf32>
    %71 = vector.shape_cast %70 : vector<8xf32> to vector<8x1xf32>
    %cst_39 = arith.constant 3.200000e+01 : f32
    %72 = vector.broadcast %cst_39 : f32 to vector<8x1xf32>
    %73 = arith.divf %71, %72 : vector<8x1xf32>
    %74 = vector.broadcast %73 : vector<8x1xf32> to vector<8x32xf32>
    %75 = arith.subf %67, %74 : vector<8x32xf32>
    %76 = arith.mulf %75, %75 : vector<8x32xf32>
    %cst_40 = arith.constant dense<0.000000e+00> : vector<8xf32>
    %77 = vector.multi_reduction <add>, %76, %cst_40 [1] : vector<8x32xf32> to vector<8xf32>
    %78 = vector.shape_cast %77 : vector<8xf32> to vector<8x1xf32>
    %cst_41 = arith.constant 3.200000e+01 : f32
    %79 = vector.broadcast %cst_41 : f32 to vector<8x1xf32>
    %80 = arith.divf %78, %79 : vector<8x1xf32>
    %cst_42 = arith.constant 9.99999996E-13 : f32
    %81 = vector.broadcast %cst_42 : f32 to vector<8x1xf32>
    %82 = arith.addf %80, %81 : vector<8x1xf32>
    %83 = math.rsqrt %82 : vector<8x1xf32>
    %84 = vector.broadcast %83 : vector<8x1xf32> to vector<8x32xf32>
    %85 = arith.mulf %75, %84 : vector<8x32xf32>
    %86 = vector.broadcast %68 : vector<1x32xf32> to vector<8x32xf32>
    %87 = arith.mulf %86, %85 : vector<8x32xf32>
    %88 = vector.broadcast %69 : vector<1x32xf32> to vector<8x32xf32>
    %89 = arith.addf %87, %88 : vector<8x32xf32>
    %c0_43 = arith.constant 0 : index
    %c0_44 = arith.constant 0 : index
    %c0_45 = arith.constant 0 : index
    %90 = vector.load %arg15[%c0_43, %c0_44, %c0_45] : memref<2x6x32xf32, #tpu.memory_space<vmem>>, vector<1x6x32xf32>
    %91 = vector.shape_cast %90 : vector<1x6x32xf32> to vector<6x32xf32>
    %92 = vector.extract_strided_slice %91 {offsets = [0, 0], sizes = [1, 32], strides = [1, 1]} : vector<6x32xf32> to vector<1x32xf32>
    %93 = vector.extract_strided_slice %91 {offsets = [1, 0], sizes = [1, 32], strides = [1, 1]} : vector<6x32xf32> to vector<1x32xf32>
    %94 = vector.extract_strided_slice %91 {offsets = [2, 0], sizes = [1, 32], strides = [1, 1]} : vector<6x32xf32> to vector<1x32xf32>
    %95 = vector.extract_strided_slice %91 {offsets = [3, 0], sizes = [1, 32], strides = [1, 1]} : vector<6x32xf32> to vector<1x32xf32>
    %96 = vector.extract_strided_slice %91 {offsets = [4, 0], sizes = [1, 32], strides = [1, 1]} : vector<6x32xf32> to vector<1x32xf32>
    %97 = vector.extract_strided_slice %91 {offsets = [5, 0], sizes = [1, 32], strides = [1, 1]} : vector<6x32xf32> to vector<1x32xf32>
    %cst_46 = arith.constant dense<0.000000e+00> : vector<8xf32>
    %98 = vector.multi_reduction <add>, %89, %cst_46 [1] : vector<8x32xf32> to vector<8xf32>
    %99 = vector.shape_cast %98 : vector<8xf32> to vector<8x1xf32>
    %cst_47 = arith.constant 3.200000e+01 : f32
    %100 = vector.broadcast %cst_47 : f32 to vector<8x1xf32>
    %101 = arith.divf %99, %100 : vector<8x1xf32>
    %102 = vector.broadcast %101 : vector<8x1xf32> to vector<8x32xf32>
    %103 = arith.subf %89, %102 : vector<8x32xf32>
    %104 = arith.mulf %103, %103 : vector<8x32xf32>
    %cst_48 = arith.constant dense<0.000000e+00> : vector<8xf32>
    %105 = vector.multi_reduction <add>, %104, %cst_48 [1] : vector<8x32xf32> to vector<8xf32>
    %106 = vector.shape_cast %105 : vector<8xf32> to vector<8x1xf32>
    %cst_49 = arith.constant 3.200000e+01 : f32
    %107 = vector.broadcast %cst_49 : f32 to vector<8x1xf32>
    %108 = arith.divf %106, %107 : vector<8x1xf32>
    %cst_50 = arith.constant 9.99999996E-13 : f32
    %109 = vector.broadcast %cst_50 : f32 to vector<8x1xf32>
    %110 = arith.addf %108, %109 : vector<8x1xf32>
    %111 = math.rsqrt %110 : vector<8x1xf32>
    %112 = vector.broadcast %111 : vector<8x1xf32> to vector<8x32xf32>
    %113 = arith.mulf %103, %112 : vector<8x32xf32>
    %114 = vector.broadcast %92 : vector<1x32xf32> to vector<8x32xf32>
    %115 = arith.mulf %114, %113 : vector<8x32xf32>
    %116 = vector.broadcast %93 : vector<1x32xf32> to vector<8x32xf32>
    %117 = arith.addf %115, %116 : vector<8x32xf32>
    %c0_51 = arith.constant 0 : index
    %c0_52 = arith.constant 0 : index
    %c0_53 = arith.constant 0 : index
    %118 = vector.load %arg9[%c0_51, %c0_52, %c0_53] : memref<2x32x96xf32, #tpu.memory_space<vmem>>, vector<1x32x96xf32>
    %119 = vector.shape_cast %118 : vector<1x32x96xf32> to vector<32x96xf32>
    %cst_54 = arith.constant dense<0.000000e+00> : vector<8x96xf32>
    %120 = tpu.matmul %117, %119, %cst_54 {dimension_numbers = #tpu.dot_dimension_numbers<[1], [0], [0], [1], [0, 0, 1, 1], [], []>} : vector<8x32xf32>, vector<32x96xf32>, vector<8x96xf32> -> vector<8x96xf32>
    %c0_55 = arith.constant 0 : index
    %c0_56 = arith.constant 0 : index
    %c0_57 = arith.constant 0 : index
    %121 = vector.load %arg10[%c0_55, %c0_56, %c0_57] : memref<2x1x96xf32, #tpu.memory_space<vmem>>, vector<1x1x96xf32>
    %122 = vector.shape_cast %121 : vector<1x1x96xf32> to vector<1x96xf32>
    %123 = vector.broadcast %122 : vector<1x96xf32> to vector<8x96xf32>
    %124 = arith.addf %120, %123 : vector<8x96xf32>
    %125 = vector.extract_strided_slice %124 {offsets = [0, 0], sizes = [8, 32], strides = [1, 1]} : vector<8x96xf32> to vector<8x32xf32>
    %126 = vector.shape_cast %125 : vector<8x32xf32> to vector<1x8x4x8xf32>
    %127 = tpu.transpose %126, [0, 2, 1, 3] : vector<1x8x4x8xf32> -> vector<1x4x8x8xf32>
    %128 = vector.shape_cast %127 : vector<1x4x8x8xf32> to vector<4x8x8xf32>
    %129 = vector.extract_strided_slice %124 {offsets = [0, 32], sizes = [8, 32], strides = [1, 1]} : vector<8x96xf32> to vector<8x32xf32>
    %130 = vector.shape_cast %129 : vector<8x32xf32> to vector<1x8x4x8xf32>
    %131 = tpu.transpose %130, [0, 2, 1, 3] : vector<1x8x4x8xf32> -> vector<1x4x8x8xf32>
    %132 = vector.shape_cast %131 : vector<1x4x8x8xf32> to vector<4x8x8xf32>
    %133 = vector.extract_strided_slice %124 {offsets = [0, 64], sizes = [8, 32], strides = [1, 1]} : vector<8x96xf32> to vector<8x32xf32>
    %134 = vector.shape_cast %133 : vector<8x32xf32> to vector<1x8x4x8xf32>
    %135 = tpu.transpose %134, [0, 2, 1, 3] : vector<1x8x4x8xf32> -> vector<1x4x8x8xf32>
    %136 = vector.shape_cast %135 : vector<1x4x8x8xf32> to vector<4x8x8xf32>
    "tpu.trace_start"() <{level = 10 : i32, message = "bqd,bkd->bqk"}> : () -> ()
    %cst_58 = arith.constant dense<0.000000e+00> : vector<4x8x8xf32>
    %137 = tpu.matmul %128, %132, %cst_58 {dimension_numbers = #tpu.dot_dimension_numbers<[2], [2], [1], [1], [0, 0, 0, 1, 1, 1], [0], [0]>} : vector<4x8x8xf32>, vector<4x8x8xf32>, vector<4x8x8xf32> -> vector<4x8x8xf32>
    "tpu.trace_stop"() : () -> ()
    %cst_59 = arith.constant 0.353553385 : f32
    %138 = vector.broadcast %cst_59 : f32 to vector<4x8x8xf32>
    %139 = arith.mulf %137, %138 : vector<4x8x8xf32>
    %cst_60 = arith.constant dense<0xFF800000> : vector<4x8xf32>
    %140 = vector.multi_reduction <maximumf>, %139, %cst_60 [2] : vector<4x8x8xf32> to vector<4x8xf32>
    %141 = vector.shape_cast %140 : vector<4x8xf32> to vector<4x8x1xf32>
    %142 = vector.broadcast %141 : vector<4x8x1xf32> to vector<4x8x8xf32>
    %143 = arith.subf %139, %142 : vector<4x8x8xf32>
    %144 = math.exp %143 : vector<4x8x8xf32>
    %cst_61 = arith.constant dense<0.000000e+00> : vector<4x8xf32>
    %145 = vector.multi_reduction <add>, %144, %cst_61 [2] : vector<4x8x8xf32> to vector<4x8xf32>
    %146 = vector.shape_cast %145 : vector<4x8xf32> to vector<4x8x1xf32>
    %147 = tpu.reciprocal %146 {approx = true} : vector<4x8x1xf32> -> vector<4x8x1xf32>
    %148 = vector.broadcast %147 : vector<4x8x1xf32> to vector<4x8x8xf32>
    %149 = arith.mulf %144, %148 : vector<4x8x8xf32>
    "tpu.trace_start"() <{level = 10 : i32, message = "bqk,bkd->bqd"}> : () -> ()
    %cst_62 = arith.constant dense<0.000000e+00> : vector<4x8x8xf32>
    %150 = tpu.matmul %149, %136, %cst_62 {dimension_numbers = #tpu.dot_dimension_numbers<[2], [1], [1], [2], [0, 0, 0, 1, 1, 2], [0], [0]>} : vector<4x8x8xf32>, vector<4x8x8xf32>, vector<4x8x8xf32> -> vector<4x8x8xf32>
    "tpu.trace_stop"() : () -> ()
    %151 = vector.shape_cast %150 : vector<4x8x8xf32> to vector<1x4x8x8xf32>
    %152 = tpu.transpose %151, [0, 2, 1, 3] : vector<1x4x8x8xf32> -> vector<1x8x4x8xf32>
    %153 = vector.shape_cast %152 : vector<1x8x4x8xf32> to vector<8x32xf32>
    %c0_63 = arith.constant 0 : index
    %c0_64 = arith.constant 0 : index
    %c0_65 = arith.constant 0 : index
    %154 = vector.load %arg11[%c0_63, %c0_64, %c0_65] : memref<2x32x32xf32, #tpu.memory_space<vmem>>, vector<1x32x32xf32>
    %155 = vector.shape_cast %154 : vector<1x32x32xf32> to vector<32x32xf32>
    %cst_66 = arith.constant dense<0.000000e+00> : vector<8x32xf32>
    %156 = tpu.matmul %153, %155, %cst_66 {dimension_numbers = #tpu.dot_dimension_numbers<[1], [0], [0], [1], [0, 0, 1, 1], [], []>} : vector<8x32xf32>, vector<32x32xf32>, vector<8x32xf32> -> vector<8x32xf32>
    %157 = vector.broadcast %96 : vector<1x32xf32> to vector<8x32xf32>
    %158 = arith.addf %156, %157 : vector<8x32xf32>
    %159 = arith.addf %89, %158 : vector<8x32xf32>
    %cst_67 = arith.constant dense<0.000000e+00> : vector<8xf32>
    %160 = vector.multi_reduction <add>, %159, %cst_67 [1] : vector<8x32xf32> to vector<8xf32>
    %161 = vector.shape_cast %160 : vector<8xf32> to vector<8x1xf32>
    %cst_68 = arith.constant 3.200000e+01 : f32
    %162 = vector.broadcast %cst_68 : f32 to vector<8x1xf32>
    %163 = arith.divf %161, %162 : vector<8x1xf32>
    %164 = vector.broadcast %163 : vector<8x1xf32> to vector<8x32xf32>
    %165 = arith.subf %159, %164 : vector<8x32xf32>
    %166 = arith.mulf %165, %165 : vector<8x32xf32>
    %cst_69 = arith.constant dense<0.000000e+00> : vector<8xf32>
    %167 = vector.multi_reduction <add>, %166, %cst_69 [1] : vector<8x32xf32> to vector<8xf32>
    %168 = vector.shape_cast %167 : vector<8xf32> to vector<8x1xf32>
    %cst_70 = arith.constant 3.200000e+01 : f32
    %169 = vector.broadcast %cst_70 : f32 to vector<8x1xf32>
    %170 = arith.divf %168, %169 : vector<8x1xf32>
    %cst_71 = arith.constant 9.99999996E-13 : f32
    %171 = vector.broadcast %cst_71 : f32 to vector<8x1xf32>
    %172 = arith.addf %170, %171 : vector<8x1xf32>
    %173 = math.rsqrt %172 : vector<8x1xf32>
    %174 = vector.broadcast %173 : vector<8x1xf32> to vector<8x32xf32>
    %175 = arith.mulf %165, %174 : vector<8x32xf32>
    %176 = vector.broadcast %94 : vector<1x32xf32> to vector<8x32xf32>
    %177 = arith.mulf %176, %175 : vector<8x32xf32>
    %178 = vector.broadcast %95 : vector<1x32xf32> to vector<8x32xf32>
    %179 = arith.addf %177, %178 : vector<8x32xf32>
    %c0_72 = arith.constant 0 : index
    %c0_73 = arith.constant 0 : index
    %c0_74 = arith.constant 0 : index
    %180 = vector.load %arg12[%c0_72, %c0_73, %c0_74] : memref<2x32x64xf32, #tpu.memory_space<vmem>>, vector<1x32x64xf32>
    %181 = vector.shape_cast %180 : vector<1x32x64xf32> to vector<32x64xf32>
    %cst_75 = arith.constant dense<0.000000e+00> : vector<8x64xf32>
    %182 = tpu.matmul %179, %181, %cst_75 {dimension_numbers = #tpu.dot_dimension_numbers<[1], [0], [0], [1], [0, 0, 1, 1], [], []>} : vector<8x32xf32>, vector<32x64xf32>, vector<8x64xf32> -> vector<8x64xf32>
    %c0_76 = arith.constant 0 : index
    %c0_77 = arith.constant 0 : index
    %c0_78 = arith.constant 0 : index
    %183 = vector.load %arg13[%c0_76, %c0_77, %c0_78] : memref<2x1x64xf32, #tpu.memory_space<vmem>>, vector<1x1x64xf32>
    %184 = vector.shape_cast %183 : vector<1x1x64xf32> to vector<1x64xf32>
    %185 = vector.broadcast %184 : vector<1x64xf32> to vector<8x64xf32>
    %186 = arith.addf %182, %185 : vector<8x64xf32>
    %cst_79 = arith.constant 5.000000e-01 : f32
    %187 = vector.broadcast %cst_79 : f32 to vector<8x64xf32>
    %188 = arith.mulf %186, %187 : vector<8x64xf32>
    %cst_80 = arith.constant 1.41421354 : f32
    %189 = vector.broadcast %cst_80 : f32 to vector<8x64xf32>
    %190 = arith.divf %186, %189 : vector<8x64xf32>
    %191 = math.erf %190 : vector<8x64xf32>
    %cst_81 = arith.constant 1.000000e+00 : f32
    %192 = vector.broadcast %cst_81 : f32 to vector<8x64xf32>
    %193 = arith.addf %192, %191 : vector<8x64xf32>
    %194 = arith.mulf %188, %193 : vector<8x64xf32>
    %c0_82 = arith.constant 0 : index
    %c0_83 = arith.constant 0 : index
    %c0_84 = arith.constant 0 : index
    %195 = vector.load %arg14[%c0_82, %c0_83, %c0_84] : memref<2x64x32xf32, #tpu.memory_space<vmem>>, vector<1x64x32xf32>
    %196 = vector.shape_cast %195 : vector<1x64x32xf32> to vector<64x32xf32>
    %cst_85 = arith.constant dense<0.000000e+00> : vector<8x32xf32>
    %197 = tpu.matmul %194, %196, %cst_85 {dimension_numbers = #tpu.dot_dimension_numbers<[1], [0], [0], [1], [0, 0, 1, 1], [], []>} : vector<8x64xf32>, vector<64x32xf32>, vector<8x32xf32> -> vector<8x32xf32>
    %198 = vector.broadcast %97 : vector<1x32xf32> to vector<8x32xf32>
    %199 = arith.addf %197, %198 : vector<8x32xf32>
    %200 = arith.addf %159, %199 : vector<8x32xf32>
    %c1_86 = arith.constant 1 : index
    %c0_87 = arith.constant 0 : index
    %c0_88 = arith.constant 0 : index
    %201 = vector.load %arg15[%c1_86, %c0_87, %c0_88] : memref<2x6x32xf32, #tpu.memory_space<vmem>>, vector<1x6x32xf32>
    %202 = vector.shape_cast %201 : vector<1x6x32xf32> to vector<6x32xf32>
    %203 = vector.extract_strided_slice %202 {offsets = [0, 0], sizes = [1, 32], strides = [1, 1]} : vector<6x32xf32> to vector<1x32xf32>
    %204 = vector.extract_strided_slice %202 {offsets = [1, 0], sizes = [1, 32], strides = [1, 1]} : vector<6x32xf32> to vector<1x32xf32>
    %205 = vector.extract_strided_slice %202 {offsets = [2, 0], sizes = [1, 32], strides = [1, 1]} : vector<6x32xf32> to vector<1x32xf32>
    %206 = vector.extract_strided_slice %202 {offsets = [3, 0], sizes = [1, 32], strides = [1, 1]} : vector<6x32xf32> to vector<1x32xf32>
    %207 = vector.extract_strided_slice %202 {offsets = [4, 0], sizes = [1, 32], strides = [1, 1]} : vector<6x32xf32> to vector<1x32xf32>
    %208 = vector.extract_strided_slice %202 {offsets = [5, 0], sizes = [1, 32], strides = [1, 1]} : vector<6x32xf32> to vector<1x32xf32>
    %cst_89 = arith.constant dense<0.000000e+00> : vector<8xf32>
    %209 = vector.multi_reduction <add>, %200, %cst_89 [1] : vector<8x32xf32> to vector<8xf32>
    %210 = vector.shape_cast %209 : vector<8xf32> to vector<8x1xf32>
    %cst_90 = arith.constant 3.200000e+01 : f32
    %211 = vector.broadcast %cst_90 : f32 to vector<8x1xf32>
    %212 = arith.divf %210, %211 : vector<8x1xf32>
    %213 = vector.broadcast %212 : vector<8x1xf32> to vector<8x32xf32>
    %214 = arith.subf %200, %213 : vector<8x32xf32>
    %215 = arith.mulf %214, %214 : vector<8x32xf32>
    %cst_91 = arith.constant dense<0.000000e+00> : vector<8xf32>
    %216 = vector.multi_reduction <add>, %215, %cst_91 [1] : vector<8x32xf32> to vector<8xf32>
    %217 = vector.shape_cast %216 : vector<8xf32> to vector<8x1xf32>
    %cst_92 = arith.constant 3.200000e+01 : f32
    %218 = vector.broadcast %cst_92 : f32 to vector<8x1xf32>
    %219 = arith.divf %217, %218 : vector<8x1xf32>
    %cst_93 = arith.constant 9.99999996E-13 : f32
    %220 = vector.broadcast %cst_93 : f32 to vector<8x1xf32>
    %221 = arith.addf %219, %220 : vector<8x1xf32>
    %222 = math.rsqrt %221 : vector<8x1xf32>
    %223 = vector.broadcast %222 : vector<8x1xf32> to vector<8x32xf32>
    %224 = arith.mulf %214, %223 : vector<8x32xf32>
    %225 = vector.broadcast %203 : vector<1x32xf32> to vector<8x32xf32>
    %226 = arith.mulf %225, %224 : vector<8x32xf32>
    %227 = vector.broadcast %204 : vector<1x32xf32> to vector<8x32xf32>
    %228 = arith.addf %226, %227 : vector<8x32xf32>
    %c1_94 = arith.constant 1 : index
    %c0_95 = arith.constant 0 : index
    %c0_96 = arith.constant 0 : index
    %229 = vector.load %arg9[%c1_94, %c0_95, %c0_96] : memref<2x32x96xf32, #tpu.memory_space<vmem>>, vector<1x32x96xf32>
    %230 = vector.shape_cast %229 : vector<1x32x96xf32> to vector<32x96xf32>
    %cst_97 = arith.constant dense<0.000000e+00> : vector<8x96xf32>
    %231 = tpu.matmul %228, %230, %cst_97 {dimension_numbers = #tpu.dot_dimension_numbers<[1], [0], [0], [1], [0, 0, 1, 1], [], []>} : vector<8x32xf32>, vector<32x96xf32>, vector<8x96xf32> -> vector<8x96xf32>
    %c1_98 = arith.constant 1 : index
    %c0_99 = arith.constant 0 : index
    %c0_100 = arith.constant 0 : index
    %232 = vector.load %arg10[%c1_98, %c0_99, %c0_100] : memref<2x1x96xf32, #tpu.memory_space<vmem>>, vector<1x1x96xf32>
    %233 = vector.shape_cast %232 : vector<1x1x96xf32> to vector<1x96xf32>
    %234 = vector.broadcast %233 : vector<1x96xf32> to vector<8x96xf32>
    %235 = arith.addf %231, %234 : vector<8x96xf32>
    %236 = vector.extract_strided_slice %235 {offsets = [0, 0], sizes = [8, 32], strides = [1, 1]} : vector<8x96xf32> to vector<8x32xf32>
    %237 = vector.shape_cast %236 : vector<8x32xf32> to vector<1x8x4x8xf32>
    %238 = tpu.transpose %237, [0, 2, 1, 3] : vector<1x8x4x8xf32> -> vector<1x4x8x8xf32>
    %239 = vector.shape_cast %238 : vector<1x4x8x8xf32> to vector<4x8x8xf32>
    %240 = vector.extract_strided_slice %235 {offsets = [0, 32], sizes = [8, 32], strides = [1, 1]} : vector<8x96xf32> to vector<8x32xf32>
    %241 = vector.shape_cast %240 : vector<8x32xf32> to vector<1x8x4x8xf32>
    %242 = tpu.transpose %241, [0, 2, 1, 3] : vector<1x8x4x8xf32> -> vector<1x4x8x8xf32>
    %243 = vector.shape_cast %242 : vector<1x4x8x8xf32> to vector<4x8x8xf32>
    %244 = vector.extract_strided_slice %235 {offsets = [0, 64], sizes = [8, 32], strides = [1, 1]} : vector<8x96xf32> to vector<8x32xf32>
    %245 = vector.shape_cast %244 : vector<8x32xf32> to vector<1x8x4x8xf32>
    %246 = tpu.transpose %245, [0, 2, 1, 3] : vector<1x8x4x8xf32> -> vector<1x4x8x8xf32>
    %247 = vector.shape_cast %246 : vector<1x4x8x8xf32> to vector<4x8x8xf32>
    "tpu.trace_start"() <{level = 10 : i32, message = "bqd,bkd->bqk"}> : () -> ()
    %cst_101 = arith.constant dense<0.000000e+00> : vector<4x8x8xf32>
    %248 = tpu.matmul %239, %243, %cst_101 {dimension_numbers = #tpu.dot_dimension_numbers<[2], [2], [1], [1], [0, 0, 0, 1, 1, 1], [0], [0]>} : vector<4x8x8xf32>, vector<4x8x8xf32>, vector<4x8x8xf32> -> vector<4x8x8xf32>
    "tpu.trace_stop"() : () -> ()
    %cst_102 = arith.constant 0.353553385 : f32
    %249 = vector.broadcast %cst_102 : f32 to vector<4x8x8xf32>
    %250 = arith.mulf %248, %249 : vector<4x8x8xf32>
    %cst_103 = arith.constant dense<0xFF800000> : vector<4x8xf32>
    %251 = vector.multi_reduction <maximumf>, %250, %cst_103 [2] : vector<4x8x8xf32> to vector<4x8xf32>
    %252 = vector.shape_cast %251 : vector<4x8xf32> to vector<4x8x1xf32>
    %253 = vector.broadcast %252 : vector<4x8x1xf32> to vector<4x8x8xf32>
    %254 = arith.subf %250, %253 : vector<4x8x8xf32>
    %255 = math.exp %254 : vector<4x8x8xf32>
    %cst_104 = arith.constant dense<0.000000e+00> : vector<4x8xf32>
    %256 = vector.multi_reduction <add>, %255, %cst_104 [2] : vector<4x8x8xf32> to vector<4x8xf32>
    %257 = vector.shape_cast %256 : vector<4x8xf32> to vector<4x8x1xf32>
    %258 = tpu.reciprocal %257 {approx = true} : vector<4x8x1xf32> -> vector<4x8x1xf32>
    %259 = vector.broadcast %258 : vector<4x8x1xf32> to vector<4x8x8xf32>
    %260 = arith.mulf %255, %259 : vector<4x8x8xf32>
    "tpu.trace_start"() <{level = 10 : i32, message = "bqk,bkd->bqd"}> : () -> ()
    %cst_105 = arith.constant dense<0.000000e+00> : vector<4x8x8xf32>
    %261 = tpu.matmul %260, %247, %cst_105 {dimension_numbers = #tpu.dot_dimension_numbers<[2], [1], [1], [2], [0, 0, 0, 1, 1, 2], [0], [0]>} : vector<4x8x8xf32>, vector<4x8x8xf32>, vector<4x8x8xf32> -> vector<4x8x8xf32>
    "tpu.trace_stop"() : () -> ()
    %262 = vector.shape_cast %261 : vector<4x8x8xf32> to vector<1x4x8x8xf32>
    %263 = tpu.transpose %262, [0, 2, 1, 3] : vector<1x4x8x8xf32> -> vector<1x8x4x8xf32>
    %264 = vector.shape_cast %263 : vector<1x8x4x8xf32> to vector<8x32xf32>
    %c1_106 = arith.constant 1 : index
    %c0_107 = arith.constant 0 : index
    %c0_108 = arith.constant 0 : index
    %265 = vector.load %arg11[%c1_106, %c0_107, %c0_108] : memref<2x32x32xf32, #tpu.memory_space<vmem>>, vector<1x32x32xf32>
    %266 = vector.shape_cast %265 : vector<1x32x32xf32> to vector<32x32xf32>
    %cst_109 = arith.constant dense<0.000000e+00> : vector<8x32xf32>
    %267 = tpu.matmul %264, %266, %cst_109 {dimension_numbers = #tpu.dot_dimension_numbers<[1], [0], [0], [1], [0, 0, 1, 1], [], []>} : vector<8x32xf32>, vector<32x32xf32>, vector<8x32xf32> -> vector<8x32xf32>
    %268 = vector.broadcast %207 : vector<1x32xf32> to vector<8x32xf32>
    %269 = arith.addf %267, %268 : vector<8x32xf32>
    %270 = arith.addf %200, %269 : vector<8x32xf32>
    %cst_110 = arith.constant dense<0.000000e+00> : vector<8xf32>
    %271 = vector.multi_reduction <add>, %270, %cst_110 [1] : vector<8x32xf32> to vector<8xf32>
    %272 = vector.shape_cast %271 : vector<8xf32> to vector<8x1xf32>
    %cst_111 = arith.constant 3.200000e+01 : f32
    %273 = vector.broadcast %cst_111 : f32 to vector<8x1xf32>
    %274 = arith.divf %272, %273 : vector<8x1xf32>
    %275 = vector.broadcast %274 : vector<8x1xf32> to vector<8x32xf32>
    %276 = arith.subf %270, %275 : vector<8x32xf32>
    %277 = arith.mulf %276, %276 : vector<8x32xf32>
    %cst_112 = arith.constant dense<0.000000e+00> : vector<8xf32>
    %278 = vector.multi_reduction <add>, %277, %cst_112 [1] : vector<8x32xf32> to vector<8xf32>
    %279 = vector.shape_cast %278 : vector<8xf32> to vector<8x1xf32>
    %cst_113 = arith.constant 3.200000e+01 : f32
    %280 = vector.broadcast %cst_113 : f32 to vector<8x1xf32>
    %281 = arith.divf %279, %280 : vector<8x1xf32>
    %cst_114 = arith.constant 9.99999996E-13 : f32
    %282 = vector.broadcast %cst_114 : f32 to vector<8x1xf32>
    %283 = arith.addf %281, %282 : vector<8x1xf32>
    %284 = math.rsqrt %283 : vector<8x1xf32>
    %285 = vector.broadcast %284 : vector<8x1xf32> to vector<8x32xf32>
    %286 = arith.mulf %276, %285 : vector<8x32xf32>
    %287 = vector.broadcast %205 : vector<1x32xf32> to vector<8x32xf32>
    %288 = arith.mulf %287, %286 : vector<8x32xf32>
    %289 = vector.broadcast %206 : vector<1x32xf32> to vector<8x32xf32>
    %290 = arith.addf %288, %289 : vector<8x32xf32>
    %c1_115 = arith.constant 1 : index
    %c0_116 = arith.constant 0 : index
    %c0_117 = arith.constant 0 : index
    %291 = vector.load %arg12[%c1_115, %c0_116, %c0_117] : memref<2x32x64xf32, #tpu.memory_space<vmem>>, vector<1x32x64xf32>
    %292 = vector.shape_cast %291 : vector<1x32x64xf32> to vector<32x64xf32>
    %cst_118 = arith.constant dense<0.000000e+00> : vector<8x64xf32>
    %293 = tpu.matmul %290, %292, %cst_118 {dimension_numbers = #tpu.dot_dimension_numbers<[1], [0], [0], [1], [0, 0, 1, 1], [], []>} : vector<8x32xf32>, vector<32x64xf32>, vector<8x64xf32> -> vector<8x64xf32>
    %c1_119 = arith.constant 1 : index
    %c0_120 = arith.constant 0 : index
    %c0_121 = arith.constant 0 : index
    %294 = vector.load %arg13[%c1_119, %c0_120, %c0_121] : memref<2x1x64xf32, #tpu.memory_space<vmem>>, vector<1x1x64xf32>
    %295 = vector.shape_cast %294 : vector<1x1x64xf32> to vector<1x64xf32>
    %296 = vector.broadcast %295 : vector<1x64xf32> to vector<8x64xf32>
    %297 = arith.addf %293, %296 : vector<8x64xf32>
    %cst_122 = arith.constant 5.000000e-01 : f32
    %298 = vector.broadcast %cst_122 : f32 to vector<8x64xf32>
    %299 = arith.mulf %297, %298 : vector<8x64xf32>
    %cst_123 = arith.constant 1.41421354 : f32
    %300 = vector.broadcast %cst_123 : f32 to vector<8x64xf32>
    %301 = arith.divf %297, %300 : vector<8x64xf32>
    %302 = math.erf %301 : vector<8x64xf32>
    %cst_124 = arith.constant 1.000000e+00 : f32
    %303 = vector.broadcast %cst_124 : f32 to vector<8x64xf32>
    %304 = arith.addf %303, %302 : vector<8x64xf32>
    %305 = arith.mulf %299, %304 : vector<8x64xf32>
    %c1_125 = arith.constant 1 : index
    %c0_126 = arith.constant 0 : index
    %c0_127 = arith.constant 0 : index
    %306 = vector.load %arg14[%c1_125, %c0_126, %c0_127] : memref<2x64x32xf32, #tpu.memory_space<vmem>>, vector<1x64x32xf32>
    %307 = vector.shape_cast %306 : vector<1x64x32xf32> to vector<64x32xf32>
    %cst_128 = arith.constant dense<0.000000e+00> : vector<8x32xf32>
    %308 = tpu.matmul %305, %307, %cst_128 {dimension_numbers = #tpu.dot_dimension_numbers<[1], [0], [0], [1], [0, 0, 1, 1], [], []>} : vector<8x64xf32>, vector<64x32xf32>, vector<8x32xf32> -> vector<8x32xf32>
    %309 = vector.broadcast %208 : vector<1x32xf32> to vector<8x32xf32>
    %310 = arith.addf %308, %309 : vector<8x32xf32>
    %311 = arith.addf %270, %310 : vector<8x32xf32>
    %c0_129 = arith.constant 0 : index
    %c0_130 = arith.constant 0 : index
    %312 = vector.load %arg16[%c0_129, %c0_130] : memref<2x32xf32, #tpu.memory_space<vmem>>, vector<1x32xf32>
    %c1_131 = arith.constant 1 : index
    %c0_132 = arith.constant 0 : index
    %313 = vector.load %arg16[%c1_131, %c0_132] : memref<2x32xf32, #tpu.memory_space<vmem>>, vector<1x32xf32>
    %cst_133 = arith.constant dense<0.000000e+00> : vector<8xf32>
    %314 = vector.multi_reduction <add>, %311, %cst_133 [1] : vector<8x32xf32> to vector<8xf32>
    %315 = vector.shape_cast %314 : vector<8xf32> to vector<8x1xf32>
    %cst_134 = arith.constant 3.200000e+01 : f32
    %316 = vector.broadcast %cst_134 : f32 to vector<8x1xf32>
    %317 = arith.divf %315, %316 : vector<8x1xf32>
    %318 = vector.broadcast %317 : vector<8x1xf32> to vector<8x32xf32>
    %319 = arith.subf %311, %318 : vector<8x32xf32>
    %320 = arith.mulf %319, %319 : vector<8x32xf32>
    %cst_135 = arith.constant dense<0.000000e+00> : vector<8xf32>
    %321 = vector.multi_reduction <add>, %320, %cst_135 [1] : vector<8x32xf32> to vector<8xf32>
    %322 = vector.shape_cast %321 : vector<8xf32> to vector<8x1xf32>
    %cst_136 = arith.constant 3.200000e+01 : f32
    %323 = vector.broadcast %cst_136 : f32 to vector<8x1xf32>
    %324 = arith.divf %322, %323 : vector<8x1xf32>
    %cst_137 = arith.constant 9.99999996E-13 : f32
    %325 = vector.broadcast %cst_137 : f32 to vector<8x1xf32>
    %326 = arith.addf %324, %325 : vector<8x1xf32>
    %327 = math.rsqrt %326 : vector<8x1xf32>
    %328 = vector.broadcast %327 : vector<8x1xf32> to vector<8x32xf32>
    %329 = arith.mulf %319, %328 : vector<8x32xf32>
    %330 = vector.broadcast %312 : vector<1x32xf32> to vector<8x32xf32>
    %331 = arith.mulf %330, %329 : vector<8x32xf32>
    %332 = vector.broadcast %313 : vector<1x32xf32> to vector<8x32xf32>
    %333 = arith.addf %331, %332 : vector<8x32xf32>
    %334 = vector.shape_cast %333 : vector<8x32xf32> to vector<1x8x32xf32>
    %335 = vector.extract_strided_slice %334 {offsets = [0, 0, 0], sizes = [1, 1, 32], strides = [1, 1, 1]} : vector<1x8x32xf32> to vector<1x1x32xf32>
    %336 = vector.shape_cast %335 : vector<1x1x32xf32> to vector<1x32xf32>
    %cst_138 = arith.constant dense<0xFF800000> : vector<1x32xf32>
    %337 = vector.multi_reduction <maximumf>, %334, %cst_138 [1] : vector<1x8x32xf32> to vector<1x32xf32>
    %cst_139 = arith.constant dense<0.000000e+00> : vector<1x32xf32>
    %338 = vector.multi_reduction <add>, %334, %cst_139 [1] : vector<1x8x32xf32> to vector<1x32xf32>
    %cst_140 = arith.constant 8.000000e+00 : f32
    %339 = vector.broadcast %cst_140 : f32 to vector<1x32xf32>
    %340 = arith.divf %338, %339 : vector<1x32xf32>
    %341 = tpu.concatenate %336, %337, %340 in 1 : vector<1x32xf32>, vector<1x32xf32>, vector<1x32xf32> -> vector<1x96xf32>
    %c0_141 = arith.constant 0 : index
    %c0_142 = arith.constant 0 : index
    %342 = vector.load %arg17[%c0_141, %c0_142] : memref<96x96xf32, #tpu.memory_space<vmem>>, vector<96x96xf32>
    %cst_143 = arith.constant dense<0.000000e+00> : vector<1x96xf32>
    %343 = tpu.matmul %341, %342, %cst_143 {dimension_numbers = #tpu.dot_dimension_numbers<[1], [0], [0], [1], [0, 0, 1, 1], [], []>} : vector<1x96xf32>, vector<96x96xf32>, vector<1x96xf32> -> vector<1x96xf32>
    %c0_144 = arith.constant 0 : index
    %c0_145 = arith.constant 0 : index
    %344 = vector.load %arg18[%c0_144, %c0_145] : memref<1x96xf32, #tpu.memory_space<vmem>>, vector<1x96xf32>
    %345 = arith.addf %343, %344 : vector<1x96xf32>
    %346 = math.tanh %345 : vector<1x96xf32>
    %c0_146 = arith.constant 0 : index
    %c0_147 = arith.constant 0 : index
    %347 = vector.load %arg19[%c0_146, %c0_147] : memref<96x128xf32, #tpu.memory_space<vmem>>, vector<96x128xf32>
    %cst_148 = arith.constant dense<0.000000e+00> : vector<1x128xf32>
    %348 = tpu.matmul %346, %347, %cst_148 {dimension_numbers = #tpu.dot_dimension_numbers<[1], [0], [0], [1], [0, 0, 1, 1], [], []>} : vector<1x96xf32>, vector<96x128xf32>, vector<1x128xf32> -> vector<1x128xf32>
    %c0_149 = arith.constant 0 : index
    %c0_150 = arith.constant 0 : index
    %349 = vector.load %arg20[%c0_149, %c0_150] : memref<1x128xf32, #tpu.memory_space<vmem>>, vector<1x128xf32>
    %350 = arith.addf %348, %349 : vector<1x128xf32>
    %351 = vector.shape_cast %350 : vector<1x128xf32> to vector<1x1x128xf32>
    %c0_151 = arith.constant 0 : index
    %c0_152 = arith.constant 0 : index
    %c0_153 = arith.constant 0 : index
    %352 = vector.load %arg21[%c0_151, %c0_152, %c0_153] : memref<1x1x128xf32, #tpu.memory_space<vmem>>, vector<1x1x128xf32>
    tpu.vector_store %arg21[%c0_151, %c0_152, %c0_153], %351 {strides = array<i32>} : memref<1x1x128xf32, #tpu.memory_space<vmem>>, vector<1x1x128xf32>,
    return
  }
  func.func @transform_0(%arg0: i32) -> (i32, i32, i32) {
    %c0_i32 = arith.constant 0 : i32
    %c0_i32_0 = arith.constant 0 : i32
    %c0_i32_1 = arith.constant 0 : i32
    return %arg0, %c0_i32, %c0_i32_0 : i32, i32, i32
  }
  func.func @transform_1(%arg0: i32) -> (i32, i32) {
    %c0_i32 = arith.constant 0 : i32
    %c0_i32_0 = arith.constant 0 : i32
    %c0_i32_1 = arith.constant 0 : i32
    return %c0_i32, %c0_i32_0 : i32, i32
  }
  func.func @transform_2(%arg0: i32) -> (i32, i32, i32) {
    %c0_i32 = arith.constant 0 : i32
    %c0_i32_0 = arith.constant 0 : i32
    %c0_i32_1 = arith.constant 0 : i32
    return %arg0, %c0_i32, %c0_i32_0 : i32, i32, i32
  }
  func.func @transform_3(%arg0: i32) -> (i32, i32, i32) {
    %c0_i32 = arith.constant 0 : i32
    %c0_i32_0 = arith.constant 0 : i32
    %c0_i32_1 = arith.constant 0 : i32
    %c0_i32_2 = arith.constant 0 : i32
    return %c0_i32, %c0_i32_0, %c0_i32_1 : i32, i32, i32
  }
  func.func @transform_4(%arg0: i32) -> (i32, i32, i32) {
    %c0_i32 = arith.constant 0 : i32
    %c0_i32_0 = arith.constant 0 : i32
    %c0_i32_1 = arith.constant 0 : i32
    %c0_i32_2 = arith.constant 0 : i32
    return %c0_i32, %c0_i32_0, %c0_i32_1 : i32, i32, i32
  }
  func.func @transform_5(%arg0: i32) -> (i32, i32) {
    %c0_i32 = arith.constant 0 : i32
    %c0_i32_0 = arith.constant 0 : i32
    %c0_i32_1 = arith.constant 0 : i32
    return %c0_i32, %c0_i32_0 : i32, i32
  }
  func.func @transform_6(%arg0: i32) -> (i32, i32) {
    %c0_i32 = arith.constant 0 : i32
    %c0_i32_0 = arith.constant 0 : i32
    %c0_i32_1 = arith.constant 0 : i32
    return %c0_i32, %c0_i32_0 : i32, i32
  }
  func.func @transform_7(%arg0: i32) -> (i32, i32) {
    %c0_i32 = arith.constant 0 : i32
    %c0_i32_0 = arith.constant 0 : i32
    %c0_i32_1 = arith.constant 0 : i32
    return %c0_i32, %c0_i32_0 : i32, i32
  }
  func.func @transform_8(%arg0: i32) -> (i32, i32, i32) {
    %c0_i32 = arith.constant 0 : i32
    %c0_i32_0 = arith.constant 0 : i32
    %c0_i32_1 = arith.constant 0 : i32
    %c0_i32_2 = arith.constant 0 : i32
    return %c0_i32, %c0_i32_0, %c0_i32_1 : i32, i32, i32
  }
  func.func @transform_9(%arg0: i32) -> (i32, i32, i32) {
    %c0_i32 = arith.constant 0 : i32
    %c0_i32_0 = arith.constant 0 : i32
    %c0_i32_1 = arith.constant 0 : i32
    %c0_i32_2 = arith.constant 0 : i32
    return %c0_i32, %c0_i32_0, %c0_i32_1 : i32, i32, i32
  }
  func.func @transform_10(%arg0: i32) -> (i32, i32, i32) {
    %c0_i32 = arith.constant 0 : i32
    %c0_i32_0 = arith.constant 0 : i32
    %c0_i32_1 = arith.constant 0 : i32
    %c0_i32_2 = arith.constant 0 : i32
    return %c0_i32, %c0_i32_0, %c0_i32_1 : i32, i32, i32
  }
  func.func @transform_11(%arg0: i32) -> (i32, i32, i32) {
    %c0_i32 = arith.constant 0 : i32
    %c0_i32_0 = arith.constant 0 : i32
    %c0_i32_1 = arith.constant 0 : i32
    %c0_i32_2 = arith.constant 0 : i32
    return %c0_i32, %c0_i32_0, %c0_i32_1 : i32, i32, i32
  }
  func.func @transform_12(%arg0: i32) -> (i32, i32, i32) {
    %c0_i32 = arith.constant 0 : i32
    %c0_i32_0 = arith.constant 0 : i32
    %c0_i32_1 = arith.constant 0 : i32
    %c0_i32_2 = arith.constant 0 : i32
    return %c0_i32, %c0_i32_0, %c0_i32_1 : i32, i32, i32
  }
  func.func @transform_13(%arg0: i32) -> (i32, i32, i32) {
    %c0_i32 = arith.constant 0 : i32
    %c0_i32_0 = arith.constant 0 : i32
    %c0_i32_1 = arith.constant 0 : i32
    %c0_i32_2 = arith.constant 0 : i32
    return %c0_i32, %c0_i32_0, %c0_i32_1 : i32, i32, i32
  }
  func.func @transform_14(%arg0: i32) -> (i32, i32, i32) {
    %c0_i32 = arith.constant 0 : i32
    %c0_i32_0 = arith.constant 0 : i32
    %c0_i32_1 = arith.constant 0 : i32
    %c0_i32_2 = arith.constant 0 : i32
    return %c0_i32, %c0_i32_0, %c0_i32_1 : i32, i32, i32
  }
  func.func @transform_15(%arg0: i32) -> (i32, i32) {
    %c0_i32 = arith.constant 0 : i32
    %c0_i32_0 = arith.constant 0 : i32
    %c0_i32_1 = arith.constant 0 : i32
    return %c0_i32, %c0_i32_0 : i32, i32
  }
  func.func @transform_16(%arg0: i32) -> (i32, i32) {
    %c0_i32 = arith.constant 0 : i32
    %c0_i32_0 = arith.constant 0 : i32
    %c0_i32_1 = arith.constant 0 : i32
    return %c0_i32, %c0_i32_0 : i32, i32
  }
  func.func @transform_17(%arg0: i32) -> (i32, i32) {
    %c0_i32 = arith.constant 0 : i32
    %c0_i32_0 = arith.constant 0 : i32
    %c0_i32_1 = arith.constant 0 : i32
    return %c0_i32, %c0_i32_0 : i32, i32
  }
  func.func @transform_18(%arg0: i32) -> (i32, i32) {
    %c0_i32 = arith.constant 0 : i32
    %c0_i32_0 = arith.constant 0 : i32
    %c0_i32_1 = arith.constant 0 : i32
    return %c0_i32, %c0_i32_0 : i32, i32
  }
  func.func @transform_19(%arg0: i32) -> (i32, i32) {
    %c0_i32 = arith.constant 0 : i32
    %c0_i32_0 = arith.constant 0 : i32
    %c0_i32_1 = arith.constant 0 : i32
    return %c0_i32, %c0_i32_0 : i32, i32
  }
  func.func @transform_20(%arg0: i32) -> (i32, i32, i32) {
    %c0_i32 = arith.constant 0 : i32
    %c0_i32_0 = arith.constant 0 : i32
    %c0_i32_1 = arith.constant 0 : i32
    return %arg0, %c0_i32, %c0_i32_0 : i32, i32, i32
  }
}

</mosaic_0001>

<llo_original>
// kernel: tpu_custom_call.1
$region0: #{tpu_custom_call.1}
  #allocation0 [shape = 'u32[]', space=smem, size = 0x4, offset = 0x4, fixed_abs, tag = 'smem constant byte address 0x4 - core index']
  #allocation1 [shape = 'u32[144,128]{1,0:T(1,128)}', space=vmem, size = 0x12000, scoped, tag = 'internal scratch']
  %s0 = inlined_call_operand.hbm [shape: f32[2,8,32], index: 0, kind: input, shape index: {}]
  %s1 = inlined_call_operand.hbm [shape: f32[8,32], index: 1, kind: input, shape index: {}]
  %s2 = inlined_call_operand.hbm [shape: f32[2,8,32], index: 2, kind: input, shape index: {}]
  %s3 = inlined_call_operand.hbm [shape: f32[2,32,64], index: 3, kind: input, shape index: {}]
  %s4 = inlined_call_operand.vmem [shape: f32[2,1,64], index: 4, kind: input, shape index: {}]
  %s5 = inlined_call_operand.hbm [shape: f32[32,32], index: 5, kind: input, shape index: {}]
  %s6 = inlined_call_operand.vmem [shape: f32[1,32], index: 6, kind: input, shape index: {}]
  %s7 = inlined_call_operand.vmem [shape: f32[2,32], index: 7, kind: input, shape index: {}]
  %s8 = inlined_call_operand.hbm [shape: f32[2,32,96], index: 8, kind: input, shape index: {}]
  %s9 = inlined_call_operand.hbm [shape: f32[2,1,96], index: 9, kind: input, shape index: {}]
  %s10 = inlined_call_operand.hbm [shape: f32[2,32,32], index: 10, kind: input, shape index: {}]
  %s11 = inlined_call_operand.hbm [shape: f32[2,32,64], index: 11, kind: input, shape index: {}]
  %s12 = inlined_call_operand.hbm [shape: f32[2,1,64], index: 12, kind: input, shape index: {}]
  %s13 = inlined_call_operand.vmem [shape: f32[2,64,32], index: 13, kind: input, shape index: {}]
  %s14 = inlined_call_operand.vmem [shape: f32[2,6,32], index: 14, kind: input, shape index: {}]
  %s15 = inlined_call_operand.vmem [shape: f32[2,32], index: 15, kind: input, shape index: {}]
  %s16 = inlined_call_operand.vmem [shape: f32[96,96], index: 16, kind: input, shape index: {}]
  %s17 = inlined_call_operand.vmem [shape: f32[1,96], index: 17, kind: input, shape index: {}]
  %s18 = inlined_call_operand.vmem [shape: f32[96,128], index: 18, kind: input, shape index: {}]
  %s19 = inlined_call_operand.vmem [shape: f32[1,128], index: 19, kind: input, shape index: {}]
  %s20 = inlined_call_operand.hbm [shape: f32[2,1,128], index: 20, kind: output, shape index: {}]
  %s21 = sld [smem:[#allocation0]]
  $region153: #{tpu_custom_call.1} parent=0
    _
  %s23 = ssub.s32 1, %s21
  %s24 = scalar_select 0, %s23, %s21
  $region1: #{tpu_custom_call.1} parent=0
    #allocation2 [shape = 'u8[8192]{0}', space=vmem, size = 0x2000, scoped, tag = 'input window, operand 0']
    #allocation3 [shape = 's32[2]{0}', space=sflag, size = 0x8, scoped, tag = 'scoped memory for tpu_custom_call.1']
    #allocation4 [shape = 's32[2]{0}', space=sflag, size = 0x8, scoped, tag = 'scoped memory for tpu_custom_call.1']
    #allocation5 [shape = 'u8[4096]{0}', space=vmem, size = 0x1000, scoped, tag = 'input window, operand 1, single buffered']
    #allocation6 [shape = 's32[1]{0}', space=sflag, size = 0x4, scoped, tag = 'scoped memory for tpu_custom_call.1']
    #allocation7 [shape = 'u8[8192]{0}', space=vmem, size = 0x2000, scoped, tag = 'input window, operand 2']
    #allocation8 [shape = 'u8[32768]{0}', space=vmem, size = 0x8000, scoped, tag = 'input window, operand 3, single buffered']
    #allocation9 [shape = 'u8[16384]{0}', space=vmem, size = 0x4000, scoped, tag = 'input window, operand 5, single buffered']
    #allocation10 [shape = 's32[1]{0}', space=sflag, size = 0x4, scoped, tag = 'scoped memory for tpu_custom_call.1']
    #allocation11 [shape = 'u8[32768]{0}', space=vmem, size = 0x8000, scoped, tag = 'input window, operand 8, single buffered']
    #allocation12 [shape = 'u8[1024]{0}', space=vmem, size = 0x400, scoped, tag = 'input window, operand 9, single buffered']
    #allocation13 [shape = 's32[1]{0}', space=sflag, size = 0x4, scoped, tag = 'scoped memory for tpu_custom_call.1']
    #allocation14 [shape = 'u8[32768]{0}', space=vmem, size = 0x8000, scoped, tag = 'input window, operand 10, single buffered']
    #allocation15 [shape = 'u8[32768]{0}', space=vmem, size = 0x8000, scoped, tag = 'input window, operand 11, single buffered']
    #allocation16 [shape = 's32[1]{0}', space=sflag, size = 0x4, scoped, tag = 'scoped memory for tpu_custom_call.1']
    #allocation17 [shape = 'u8[1024]{0}', space=vmem, size = 0x400, scoped, tag = 'input window, operand 12, single buffered']
    #allocation18 [shape = 'u8[1024]{0}', space=vmem, size = 0x400, scoped, tag = 'output window, operand 0']
    %25 = vsyncpa [#allocation3], 0
    %s26 = scalar_lea.sflag [#allocation3], 1
    %27 = vsyncpa %s26, 0
    %28 = vsyncpa [#allocation6], 0
    %29 = vsyncpa [#allocation10], 0
    %30 = vsyncpa [#allocation13], 0
    %31 = vsyncpa [#allocation16], 0
    %32 = vsyncpa [#allocation4], 0
    %s33 = scalar_lea.sflag [#allocation4], 1
    %34 = vsyncpa %s33, 0
    loop: start=0, step=1, limit=4
    $region2: #{tpu_custom_call.1} parent=1 // loop_pre_header
      _
    $region3: #{tpu_custom_call.1} parent=1 // loop_header
      %s36 = sphi 0, %s40
      %p37 = scmp.ge.s32.totalorder %s36, 4
      %s46 = sphi 0, %s48
      %s49 = sphi 0, %s46
      %s50 = sphi 0, %s49
      %s66 = sphi 0, %s50
      %s70 = sphi 0, %s70
      %s72 = sphi 0, %s70
      %s73 = sphi 0, %s72
      %s87 = sphi 0, %s73
      %s93 = sphi 0, %s95
      %s96 = sphi 0, %s93
      %s97 = sphi 0, %s96
      %s113 = sphi 0, %s97
      %s117 = sphi 0, %s117
      %s119 = sphi 0, %s117
      %s120 = sphi 0, %s119
      %s134 = sphi 0, %s120
      %s138 = sphi 0, %s138
      %s140 = sphi 0, %s138
      %s141 = sphi 0, %s140
      %s155 = sphi 0, %s141
      %s159 = sphi 0, %s159
      %s161 = sphi 0, %s159
      %s162 = sphi 0, %s161
      %s176 = sphi 0, %s162
      %s180 = sphi 0, %s180
      %s182 = sphi 0, %s180
      %s183 = sphi 0, %s182
      %s197 = sphi 0, %s183
      %s201 = sphi 0, %s201
      %s203 = sphi 0, %s201
      %s204 = sphi 0, %s203
      %s218 = sphi 0, %s204
      %s222 = sphi 0, %s222
      %s224 = sphi 0, %s222
      %s225 = sphi 0, %s224
      %s239 = sphi 0, %s225
      %s243 = sphi 0, %s243
      %s245 = sphi 0, %s243
      %s246 = sphi 0, %s245
      %s260 = sphi 0, %s246
      %s264 = sphi 0, %s264
      %s266 = sphi 0, %s264
      %s267 = sphi 0, %s266
      %s281 = sphi 0, %s267
      %s285 = sphi 0, %s285
      %s287 = sphi 0, %s285
      %s288 = sphi 0, %s287
      %s302 = sphi 0, %s288
      %s306 = sphi 0, %s306
      %s308 = sphi 0, %s306
      %s309 = sphi 0, %s308
      %s323 = sphi 0, %s309
      %s327 = sphi 0, %s327
      %s329 = sphi 0, %s327
      %s330 = sphi 0, %s329
      %s344 = sphi 0, %s330
      %s348 = sphi 0, %s348
      %s350 = sphi 0, %s348
      %s351 = sphi 0, %s350
      %s365 = sphi 0, %s351
      %s369 = sphi 0, %s369
      %s371 = sphi 0, %s369
      %s372 = sphi 0, %s371
      %s386 = sphi 0, %s372
      %s390 = sphi 0, %s390
      %s392 = sphi 0, %s390
      %s393 = sphi 0, %s392
      %s407 = sphi 0, %s393
      %s411 = sphi 0, %s411
      %s413 = sphi 0, %s411
      %s414 = sphi 0, %s413
      %s428 = sphi 0, %s414
      %s432 = sphi 0, %s432
      %s434 = sphi 0, %s432
      %s435 = sphi 0, %s434
      %s449 = sphi 0, %s435
      %s453 = sphi 0, %s453
      %s455 = sphi 0, %s453
      %s456 = sphi 0, %s455
      %s470 = sphi 0, %s456
      %s476 = sphi 0, %s478
      %s479 = sphi 0, %s476
      %s480 = sphi 0, %s479
      %s496 = sphi 0, %s480
    $region4: #{tpu_custom_call.1} parent=1 // loop_header_branch
      %39 = sbr.rel (%p37) target = $region8
    $region5: #{tpu_custom_call.1} parent=1 // loop_body
      %s41 = ssub.s32 %s36, 1
      %s42 = ssub.s32 %s36, 2
      %s43 = sadd.s32 %s36, 1
      %s44 = ssub.s32 %s36, %s43
      %p45 = scmp.eq.s32.totalorder %s44, 0
      %s47 = sadd.s32 %s46, 1
      %s48 = scalar_select %p45, %s46, %s47
      %p51 = pneg %p45
      %p52 = scmp.eq.s32.totalorder %s36, 1
      %p53 = por %p51, %p52
      %p54 = scmp.ne.s32.totalorder %s46, %s49
      %p55 = scmp.eq.s32.totalorder %s36, 0
      %p56 = por %p54, %p55
      %p57 = scmp.ne.s32.totalorder %s46, %s49
      %p58 = scmp.eq.s32.totalorder %s41, 1
      %p59 = por %p57, %p58
      %p60 = scmp.ne.s32.totalorder %s49, %s50
      %p61 = scmp.eq.s32.totalorder %s41, 0
      %p62 = por %p60, %p61
      %p63 = scmp.ne.s32.totalorder %s49, %s50
      %p64 = scmp.eq.s32.totalorder %s42, 1
      %p65 = por %p63, %p64
      %p67 = scmp.ne.s32.totalorder %s50, %s66
      %p68 = scmp.eq.s32.totalorder %s42, 0
      %p69 = por %p67, %p68
      %s71 = sadd.s32 %s70, 1
      %p74 = scmp.eq.s32.totalorder %s36, 1
      %p75 = scmp.ne.s32.totalorder %s70, %s72
      %p76 = scmp.eq.s32.totalorder %s36, 0
      %p77 = por %p75, %p76
      %p78 = scmp.ne.s32.totalorder %s70, %s72
      %p79 = scmp.eq.s32.totalorder %s41, 1
      %p80 = por %p78, %p79
      %p81 = scmp.ne.s32.totalorder %s72, %s73
      %p82 = scmp.eq.s32.totalorder %s41, 0
      %p83 = por %p81, %p82
      %p84 = scmp.ne.s32.totalorder %s72, %s73
      %p85 = scmp.eq.s32.totalorder %s42, 1
      %p86 = por %p84, %p85
      %p88 = scmp.ne.s32.totalorder %s73, %s87
      %p89 = scmp.eq.s32.totalorder %s42, 0
      %p90 = por %p88, %p89
      %s91 = ssub.s32 %s36, %s43
      %p92 = scmp.eq.s32.totalorder %s91, 0
      %s94 = sadd.s32 %s93, 1
      %s95 = scalar_select %p92, %s93, %s94
      %p98 = pneg %p92
      %p99 = scmp.eq.s32.totalorder %s36, 1
      %p100 = por %p98, %p99
      %p101 = scmp.ne.s32.totalorder %s93, %s96
      %p102 = scmp.eq.s32.totalorder %s36, 0
      %p103 = por %p101, %p102
      %p104 = scmp.ne.s32.totalorder %s93, %s96
      %p105 = scmp.eq.s32.totalorder %s41, 1
      %p106 = por %p104, %p105
      %p107 = scmp.ne.s32.totalorder %s96, %s97
      %p108 = scmp.eq.s32.totalorder %s41, 0
      %p109 = por %p107, %p108
      %p110 = scmp.ne.s32.totalorder %s96, %s97
      %p111 = scmp.eq.s32.totalorder %s42, 1
      %p112 = por %p110, %p111
      %p114 = scmp.ne.s32.totalorder %s97, %s113
      %p115 = scmp.eq.s32.totalorder %s42, 0
      %p116 = por %p114, %p115
      %s118 = sadd.s32 %s117, 1
      %p121 = scmp.eq.s32.totalorder %s36, 1
      %p122 = scmp.ne.s32.totalorder %s117, %s119
      %p123 = scmp.eq.s32.totalorder %s36, 0
      %p124 = por %p122, %p123
      %p125 = scmp.ne.s32.totalorder %s117, %s119
      %p126 = scmp.eq.s32.totalorder %s41, 1
      %p127 = por %p125, %p126
      %p128 = scmp.ne.s32.totalorder %s119, %s120
      %p129 = scmp.eq.s32.totalorder %s41, 0
      %p130 = por %p128, %p129
      %p131 = scmp.ne.s32.totalorder %s119, %s120
      %p132 = scmp.eq.s32.totalorder %s42, 1
      %p133 = por %p131, %p132
      %p135 = scmp.ne.s32.totalorder %s120, %s134
      %p136 = scmp.eq.s32.totalorder %s42, 0
      %p137 = por %p135, %p136
      %s139 = sadd.s32 %s138, 1
      %p142 = scmp.eq.s32.totalorder %s36, 1
      %p143 = scmp.ne.s32.totalorder %s138, %s140
      %p144 = scmp.eq.s32.totalorder %s36, 0
      %p145 = por %p143, %p144
      %p146 = scmp.ne.s32.totalorder %s138, %s140
      %p147 = scmp.eq.s32.totalorder %s41, 1
      %p148 = por %p146, %p147
      %p149 = scmp.ne.s32.totalorder %s140, %s141
      %p150 = scmp.eq.s32.totalorder %s41, 0
      %p151 = por %p149, %p150
      %p152 = scmp.ne.s32.totalorder %s140, %s141
      %p153 = scmp.eq.s32.totalorder %s42, 1
      %p154 = por %p152, %p153
      %p156 = scmp.ne.s32.totalorder %s141, %s155
      %p157 = scmp.eq.s32.totalorder %s42, 0
      %p158 = por %p156, %p157
      %s160 = sadd.s32 %s159, 1
      %p163 = scmp.eq.s32.totalorder %s36, 1
      %p164 = scmp.ne.s32.totalorder %s159, %s161
      %p165 = scmp.eq.s32.totalorder %s36, 0
      %p166 = por %p164, %p165
      %p167 = scmp.ne.s32.totalorder %s159, %s161
      %p168 = scmp.eq.s32.totalorder %s41, 1
      %p169 = por %p167, %p168
      %p170 = scmp.ne.s32.totalorder %s161, %s162
      %p171 = scmp.eq.s32.totalorder %s41, 0
      %p172 = por %p170, %p171
      %p173 = scmp.ne.s32.totalorder %s161, %s162
      %p174 = scmp.eq.s32.totalorder %s42, 1
      %p175 = por %p173, %p174
      %p177 = scmp.ne.s32.totalorder %s162, %s176
      %p178 = scmp.eq.s32.totalorder %s42, 0
      %p179 = por %p177, %p178
      %s181 = sadd.s32 %s180, 1
      %p184 = scmp.eq.s32.totalorder %s36, 1
      %p185 = scmp.ne.s32.totalorder %s180, %s182
      %p186 = scmp.eq.s32.totalorder %s36, 0
      %p187 = por %p185, %p186
      %p188 = scmp.ne.s32.totalorder %s180, %s182
      %p189 = scmp.eq.s32.totalorder %s41, 1
      %p190 = por %p188, %p189
      %p191 = scmp.ne.s32.totalorder %s182, %s183
      %p192 = scmp.eq.s32.totalorder %s41, 0
      %p193 = por %p191, %p192
      %p194 = scmp.ne.s32.totalorder %s182, %s183
      %p195 = scmp.eq.s32.totalorder %s42, 1
      %p196 = por %p194, %p195
      %p198 = scmp.ne.s32.totalorder %s183, %s197
      %p199 = scmp.eq.s32.totalorder %s42, 0
      %p200 = por %p198, %p199
      %s202 = sadd.s32 %s201, 1
      %p205 = scmp.eq.s32.totalorder %s36, 1
      %p206 = scmp.ne.s32.totalorder %s201, %s203
      %p207 = scmp.eq.s32.totalorder %s36, 0
      %p208 = por %p206, %p207
      %p209 = scmp.ne.s32.totalorder %s201, %s203
      %p210 = scmp.eq.s32.totalorder %s41, 1
      %p211 = por %p209, %p210
      %p212 = scmp.ne.s32.totalorder %s203, %s204
      %p213 = scmp.eq.s32.totalorder %s41, 0
      %p214 = por %p212, %p213
      %p215 = scmp.ne.s32.totalorder %s203, %s204
      %p216 = scmp.eq.s32.totalorder %s42, 1
      %p217 = por %p215, %p216
      %p219 = scmp.ne.s32.totalorder %s204, %s218
      %p220 = scmp.eq.s32.totalorder %s42, 0
      %p221 = por %p219, %p220
      %s223 = sadd.s32 %s222, 1
      %p226 = scmp.eq.s32.totalorder %s36, 1
      %p227 = scmp.ne.s32.totalorder %s222, %s224
      %p228 = scmp.eq.s32.totalorder %s36, 0
      %p229 = por %p227, %p228
      %p230 = scmp.ne.s32.totalorder %s222, %s224
      %p231 = scmp.eq.s32.totalorder %s41, 1
      %p232 = por %p230, %p231
      %p233 = scmp.ne.s32.totalorder %s224, %s225
      %p234 = scmp.eq.s32.totalorder %s41, 0
      %p235 = por %p233, %p234
      %p236 = scmp.ne.s32.totalorder %s224, %s225
      %p237 = scmp.eq.s32.totalorder %s42, 1
      %p238 = por %p236, %p237
      %p240 = scmp.ne.s32.totalorder %s225, %s239
      %p241 = scmp.eq.s32.totalorder %s42, 0
      %p242 = por %p240, %p241
      %s244 = sadd.s32 %s243, 1
      %p247 = scmp.eq.s32.totalorder %s36, 1
      %p248 = scmp.ne.s32.totalorder %s243, %s245
      %p249 = scmp.eq.s32.totalorder %s36, 0
      %p250 = por %p248, %p249
      %p251 = scmp.ne.s32.totalorder %s243, %s245
      %p252 = scmp.eq.s32.totalorder %s41, 1
      %p253 = por %p251, %p252
      %p254 = scmp.ne.s32.totalorder %s245, %s246
      %p255 = scmp.eq.s32.totalorder %s41, 0
      %p256 = por %p254, %p255
      %p257 = scmp.ne.s32.totalorder %s245, %s246
      %p258 = scmp.eq.s32.totalorder %s42, 1
      %p259 = por %p257, %p258
      %p261 = scmp.ne.s32.totalorder %s246, %s260
      %p262 = scmp.eq.s32.totalorder %s42, 0
      %p263 = por %p261, %p262
      %s265 = sadd.s32 %s264, 1
      %p268 = scmp.eq.s32.totalorder %s36, 1
      %p269 = scmp.ne.s32.totalorder %s264, %s266
      %p270 = scmp.eq.s32.totalorder %s36, 0
      %p271 = por %p269, %p270
      %p272 = scmp.ne.s32.totalorder %s264, %s266
      %p273 = scmp.eq.s32.totalorder %s41, 1
      %p274 = por %p272, %p273
      %p275 = scmp.ne.s32.totalorder %s266, %s267
      %p276 = scmp.eq.s32.totalorder %s41, 0
      %p277 = por %p275, %p276
      %p278 = scmp.ne.s32.totalorder %s266, %s267
      %p279 = scmp.eq.s32.totalorder %s42, 1
      %p280 = por %p278, %p279
      %p282 = scmp.ne.s32.totalorder %s267, %s281
      %p283 = scmp.eq.s32.totalorder %s42, 0
      %p284 = por %p282, %p283
      %s286 = sadd.s32 %s285, 1
      %p289 = scmp.eq.s32.totalorder %s36, 1
      %p290 = scmp.ne.s32.totalorder %s285, %s287
      %p291 = scmp.eq.s32.totalorder %s36, 0
      %p292 = por %p290, %p291
      %p293 = scmp.ne.s32.totalorder %s285, %s287
      %p294 = scmp.eq.s32.totalorder %s41, 1
      %p295 = por %p293, %p294
      %p296 = scmp.ne.s32.totalorder %s287, %s288
      %p297 = scmp.eq.s32.totalorder %s41, 0
      %p298 = por %p296, %p297
      %p299 = scmp.ne.s32.totalorder %s287, %s288
      %p300 = scmp.eq.s32.totalorder %s42, 1
      %p301 = por %p299, %p300
      %p303 = scmp.ne.s32.totalorder %s288, %s302
      %p304 = scmp.eq.s32.totalorder %s42, 0
      %p305 = por %p303, %p304
      %s307 = sadd.s32 %s306, 1
      %p310 = scmp.eq.s32.totalorder %s36, 1
      %p311 = scmp.ne.s32.totalorder %s306, %s308
      %p312 = scmp.eq.s32.totalorder %s36, 0
      %p313 = por %p311, %p312
      %p314 = scmp.ne.s32.totalorder %s306, %s308
      %p315 = scmp.eq.s32.totalorder %s41, 1
      %p316 = por %p314, %p315
      %p317 = scmp.ne.s32.totalorder %s308, %s309
      %p318 = scmp.eq.s32.totalorder %s41, 0
      %p319 = por %p317, %p318
      %p320 = scmp.ne.s32.totalorder %s308, %s309
      %p321 = scmp.eq.s32.totalorder %s42, 1
      %p322 = por %p320, %p321
      %p324 = scmp.ne.s32.totalorder %s309, %s323
      %p325 = scmp.eq.s32.totalorder %s42, 0
      %p326 = por %p324, %p325
      %s328 = sadd.s32 %s327, 1
      %p331 = scmp.eq.s32.totalorder %s36, 1
      %p332 = scmp.ne.s32.totalorder %s327, %s329
      %p333 = scmp.eq.s32.totalorder %s36, 0
      %p334 = por %p332, %p333
      %p335 = scmp.ne.s32.totalorder %s327, %s329
      %p336 = scmp.eq.s32.totalorder %s41, 1
      %p337 = por %p335, %p336
      %p338 = scmp.ne.s32.totalorder %s329, %s330
      %p339 = scmp.eq.s32.totalorder %s41, 0
      %p340 = por %p338, %p339
      %p341 = scmp.ne.s32.totalorder %s329, %s330
      %p342 = scmp.eq.s32.totalorder %s42, 1
      %p343 = por %p341, %p342
      %p345 = scmp.ne.s32.totalorder %s330, %s344
      %p346 = scmp.eq.s32.totalorder %s42, 0
      %p347 = por %p345, %p346
      %s349 = sadd.s32 %s348, 1
      %p352 = scmp.eq.s32.totalorder %s36, 1
      %p353 = scmp.ne.s32.totalorder %s348, %s350
      %p354 = scmp.eq.s32.totalorder %s36, 0
      %p355 = por %p353, %p354
      %p356 = scmp.ne.s32.totalorder %s348, %s350
      %p357 = scmp.eq.s32.totalorder %s41, 1
      %p358 = por %p356, %p357
      %p359 = scmp.ne.s32.totalorder %s350, %s351
      %p360 = scmp.eq.s32.totalorder %s41, 0
      %p361 = por %p359, %p360
      %p362 = scmp.ne.s32.totalorder %s350, %s351
      %p363 = scmp.eq.s32.totalorder %s42, 1
      %p364 = por %p362, %p363
      %p366 = scmp.ne.s32.totalorder %s351, %s365
      %p367 = scmp.eq.s32.totalorder %s42, 0
      %p368 = por %p366, %p367
      %s370 = sadd.s32 %s369, 1
      %p373 = scmp.eq.s32.totalorder %s36, 1
      %p374 = scmp.ne.s32.totalorder %s369, %s371
      %p375 = scmp.eq.s32.totalorder %s36, 0
      %p376 = por %p374, %p375
      %p377 = scmp.ne.s32.totalorder %s369, %s371
      %p378 = scmp.eq.s32.totalorder %s41, 1
      %p379 = por %p377, %p378
      %p380 = scmp.ne.s32.totalorder %s371, %s372
      %p381 = scmp.eq.s32.totalorder %s41, 0
      %p382 = por %p380, %p381
      %p383 = scmp.ne.s32.totalorder %s371, %s372
      %p384 = scmp.eq.s32.totalorder %s42, 1
      %p385 = por %p383, %p384
      %p387 = scmp.ne.s32.totalorder %s372, %s386
      %p388 = scmp.eq.s32.totalorder %s42, 0
      %p389 = por %p387, %p388
      %s391 = sadd.s32 %s390, 1
      %p394 = scmp.eq.s32.totalorder %s36, 1
      %p395 = scmp.ne.s32.totalorder %s390, %s392
      %p396 = scmp.eq.s32.totalorder %s36, 0
      %p397 = por %p395, %p396
      %p398 = scmp.ne.s32.totalorder %s390, %s392
      %p399 = scmp.eq.s32.totalorder %s41, 1
      %p400 = por %p398, %p399
      %p401 = scmp.ne.s32.totalorder %s392, %s393
      %p402 = scmp.eq.s32.totalorder %s41, 0
      %p403 = por %p401, %p402
      %p404 = scmp.ne.s32.totalorder %s392, %s393
      %p405 = scmp.eq.s32.totalorder %s42, 1
      %p406 = por %p404, %p405
      %p408 = scmp.ne.s32.totalorder %s393, %s407
      %p409 = scmp.eq.s32.totalorder %s42, 0
      %p410 = por %p408, %p409
      %s412 = sadd.s32 %s411, 1
      %p415 = scmp.eq.s32.totalorder %s36, 1
      %p416 = scmp.ne.s32.totalorder %s411, %s413
      %p417 = scmp.eq.s32.totalorder %s36, 0
      %p418 = por %p416, %p417
      %p419 = scmp.ne.s32.totalorder %s411, %s413
      %p420 = scmp.eq.s32.totalorder %s41, 1
      %p421 = por %p419, %p420
      %p422 = scmp.ne.s32.totalorder %s413, %s414
      %p423 = scmp.eq.s32.totalorder %s41, 0
      %p424 = por %p422, %p423
      %p425 = scmp.ne.s32.totalorder %s413, %s414
      %p426 = scmp.eq.s32.totalorder %s42, 1
      %p427 = por %p425, %p426
      %p429 = scmp.ne.s32.totalorder %s414, %s428
      %p430 = scmp.eq.s32.totalorder %s42, 0
      %p431 = por %p429, %p430
      %s433 = sadd.s32 %s432, 1
      %p436 = scmp.eq.s32.totalorder %s36, 1
      %p437 = scmp.ne.s32.totalorder %s432, %s434
      %p438 = scmp.eq.s32.totalorder %s36, 0
      %p439 = por %p437, %p438
      %p440 = scmp.ne.s32.totalorder %s432, %s434
      %p441 = scmp.eq.s32.totalorder %s41, 1
      %p442 = por %p440, %p441
      %p443 = scmp.ne.s32.totalorder %s434, %s435
      %p444 = scmp.eq.s32.totalorder %s41, 0
      %p445 = por %p443, %p444
      %p446 = scmp.ne.s32.totalorder %s434, %s435
      %p447 = scmp.eq.s32.totalorder %s42, 1
      %p448 = por %p446, %p447
      %p450 = scmp.ne.s32.totalorder %s435, %s449
      %p451 = scmp.eq.s32.totalorder %s42, 0
      %p452 = por %p450, %p451
      %s454 = sadd.s32 %s453, 1
      %p457 = scmp.eq.s32.totalorder %s36, 1
      %p458 = scmp.ne.s32.totalorder %s453, %s455
      %p459 = scmp.eq.s32.totalorder %s36, 0
      %p460 = por %p458, %p459
      %p461 = scmp.ne.s32.totalorder %s453, %s455
      %p462 = scmp.eq.s32.totalorder %s41, 1
      %p463 = por %p461, %p462
      %p464 = scmp.ne.s32.totalorder %s455, %s456
      %p465 = scmp.eq.s32.totalorder %s41, 0
      %p466 = por %p464, %p465
      %p467 = scmp.ne.s32.totalorder %s455, %s456
      %p468 = scmp.eq.s32.totalorder %s42, 1
      %p469 = por %p467, %p468
      %p471 = scmp.ne.s32.totalorder %s456, %s470
      %p472 = scmp.eq.s32.totalorder %s42, 0
      %p473 = por %p471, %p472
      %s474 = ssub.s32 %s36, %s43
      %p475 = scmp.eq.s32.totalorder %s474, 0
      %s477 = sadd.s32 %s476, 1
      %s478 = scalar_select %p475, %s476, %s477
      %p481 = pneg %p475
      %p482 = scmp.eq.s32.totalorder %s36, 1
      %p483 = por %p481, %p482
      %p484 = scmp.ne.s32.totalorder %s476, %s479
      %p485 = scmp.eq.s32.totalorder %s36, 0
      %p486 = por %p484, %p485
      %p487 = scmp.ne.s32.totalorder %s476, %s479
      %p488 = scmp.eq.s32.totalorder %s41, 1
      %p489 = por %p487, %p488
      %p490 = scmp.ne.s32.totalorder %s479, %s480
      %p491 = scmp.eq.s32.totalorder %s41, 0
      %p492 = por %p490, %p491
      %p493 = scmp.ne.s32.totalorder %s479, %s480
      %p494 = scmp.eq.s32.totalorder %s42, 1
      %p495 = por %p493, %p494
      %p497 = scmp.ne.s32.totalorder %s480, %s496
      %p498 = scmp.eq.s32.totalorder %s42, 0
      %p499 = por %p497, %p498
      %p500 = scmp.le.s32.totalorder 1, %s36
      %p501 = scmp.lt.s32.totalorder %s36, 3
      %p502 = pnand %p500, %p501
      %p503 = pneg %p502
      // Predicated region
      $region9: #{tpu_custom_call.1} parent=5 // pred_check
        _
      $region10: #{tpu_custom_call.1} parent=5 // pred_check_branch
        %505 = sbr.rel (%p502) target = $region12
      $region11: #{tpu_custom_call.1} parent=5 // pred_region
        %s506 = ssub.s32 %s36, 1
        // Predicated region
        $region13: #{tpu_custom_call.1} parent=11 // pred_check
          %p507 = pneg %p83
        $region14: #{tpu_custom_call.1} parent=11 // pred_check_branch
          %509 = sbr.rel (%p507) target = $region16
        $region15: #{tpu_custom_call.1} parent=11 // pred_region
          %s511 = ssub.s32 128, 128
          %512 = vsyncadd [#allocation6], %s511
          %s514 = sshll.u32 [#allocation5], 4
          %s515 = int_to_ptr.vmem [resolvable:$true] %s514
          %517 = dma.hbm_to_vmem [thread:$0]  %s1, 128, %s515, [#allocation6]
        $region16: #{tpu_custom_call.1} parent=11 // pred_fallthru
          _
        // Predicated region
        $region17: #{tpu_custom_call.1} parent=11 // pred_check
          %p518 = pneg %p130
        $region18: #{tpu_custom_call.1} parent=11 // pred_check_branch
          %520 = sbr.rel (%p518) target = $region20
        $region19: #{tpu_custom_call.1} parent=11 // pred_region
          %s522 = ssub.s32 1024, 1024
          %523 = vsyncadd [#allocation6], %s522
          %s524 = sshll.u32 [#allocation8], 4
          %s525 = int_to_ptr.vmem [resolvable:$true] %s524
          %530 = dma.hbm_to_vmem [thread:$0]  %s3, 1024, %s525, [#allocation6], 128, 128, 8
        $region20: #{tpu_custom_call.1} parent=11 // pred_fallthru
          _
        // Predicated region
        $region21: #{tpu_custom_call.1} parent=11 // pred_check
          %p531 = pneg %p151
        $region22: #{tpu_custom_call.1} parent=11 // pred_check_branch
          %533 = sbr.rel (%p531) target = $region24
        $region23: #{tpu_custom_call.1} parent=11 // pred_region
          _
        $region24: #{tpu_custom_call.1} parent=11 // pred_fallthru
          _
        // Predicated region
        $region25: #{tpu_custom_call.1} parent=11 // pred_check
          %p534 = pneg %p172
        $region26: #{tpu_custom_call.1} parent=11 // pred_check_branch
          %536 = sbr.rel (%p534) target = $region28
        $region27: #{tpu_custom_call.1} parent=11 // pred_region
          %s538 = ssub.s32 512, 512
          %539 = vsyncadd [#allocation10], %s538
          %s540 = sshll.u32 [#allocation9], 4
          %s541 = int_to_ptr.vmem [resolvable:$true] %s540
          %546 = dma.hbm_to_vmem [thread:$0]  %s5, 512, %s541, [#allocation10], 128, 128, 8
        $region28: #{tpu_custom_call.1} parent=11 // pred_fallthru
          _
        // Predicated region
        $region29: #{tpu_custom_call.1} parent=11 // pred_check
          %p547 = pneg %p193
        $region30: #{tpu_custom_call.1} parent=11 // pred_check_branch
          %549 = sbr.rel (%p547) target = $region32
        $region31: #{tpu_custom_call.1} parent=11 // pred_region
          _
        $region32: #{tpu_custom_call.1} parent=11 // pred_fallthru
          _
        // Predicated region
        $region33: #{tpu_custom_call.1} parent=11 // pred_check
          %p550 = pneg %p214
        $region34: #{tpu_custom_call.1} parent=11 // pred_check_branch
          %552 = sbr.rel (%p550) target = $region36
        $region35: #{tpu_custom_call.1} parent=11 // pred_region
          _
        $region36: #{tpu_custom_call.1} parent=11 // pred_fallthru
          _
        // Predicated region
        $region37: #{tpu_custom_call.1} parent=11 // pred_check
          %p553 = pneg %p235
        $region38: #{tpu_custom_call.1} parent=11 // pred_check_branch
          %555 = sbr.rel (%p553) target = $region40
        $region39: #{tpu_custom_call.1} parent=11 // pred_region
          %s557 = ssub.s32 1024, 1024
          %558 = vsyncadd [#allocation10], %s557
          %s559 = sshll.u32 [#allocation11], 4
          %s560 = int_to_ptr.vmem [resolvable:$true] %s559
          %565 = dma.hbm_to_vmem [thread:$0]  %s8, 1024, %s560, [#allocation10], 128, 128, 8
        $region40: #{tpu_custom_call.1} parent=11 // pred_fallthru
          _
        // Predicated region
        $region41: #{tpu_custom_call.1} parent=11 // pred_check
          %p566 = pneg %p256
        $region42: #{tpu_custom_call.1} parent=11 // pred_check_branch
          %568 = sbr.rel (%p566) target = $region44
        $region43: #{tpu_custom_call.1} parent=11 // pred_region
          %s570 = ssub.s32 32, 32
          %571 = vsyncadd [#allocation13], %s570
          %s572 = sshll.u32 [#allocation12], 4
          %s573 = int_to_ptr.vmem [resolvable:$true] %s572
          %578 = dma.hbm_to_vmem [thread:$0]  %s9, 32, %s573, [#allocation13], 16, 16, 1
        $region44: #{tpu_custom_call.1} parent=11 // pred_fallthru
          _
        // Predicated region
        $region45: #{tpu_custom_call.1} parent=11 // pred_check
          %p579 = pneg %p277
        $region46: #{tpu_custom_call.1} parent=11 // pred_check_branch
          %581 = sbr.rel (%p579) target = $region48
        $region47: #{tpu_custom_call.1} parent=11 // pred_region
          %s583 = ssub.s32 1024, 1024
          %584 = vsyncadd [#allocation13], %s583
          %s585 = sshll.u32 [#allocation14], 4
          %s586 = int_to_ptr.vmem [resolvable:$true] %s585
          %591 = dma.hbm_to_vmem [thread:$0]  %s10, 1024, %s586, [#allocation13], 128, 128, 8
        $region48: #{tpu_custom_call.1} parent=11 // pred_fallthru
          _
        // Predicated region
        $region49: #{tpu_custom_call.1} parent=11 // pred_check
          %p592 = pneg %p298
        $region50: #{tpu_custom_call.1} parent=11 // pred_check_branch
          %594 = sbr.rel (%p592) target = $region52
        $region51: #{tpu_custom_call.1} parent=11 // pred_region
          %s596 = ssub.s32 1024, 1024
          %597 = vsyncadd [#allocation16], %s596
          %s598 = sshll.u32 [#allocation15], 4
          %s599 = int_to_ptr.vmem [resolvable:$true] %s598
          %604 = dma.hbm_to_vmem [thread:$0]  %s11, 1024, %s599, [#allocation16], 128, 128, 8
        $region52: #{tpu_custom_call.1} parent=11 // pred_fallthru
          _
        // Predicated region
        $region53: #{tpu_custom_call.1} parent=11 // pred_check
          %p605 = pneg %p319
        $region54: #{tpu_custom_call.1} parent=11 // pred_check_branch
          %607 = sbr.rel (%p605) target = $region56
        $region55: #{tpu_custom_call.1} parent=11 // pred_region
          %s609 = ssub.s32 32, 32
          %610 = vsyncadd [#allocation16], %s609
          %s611 = sshll.u32 [#allocation17], 4
          %s612 = int_to_ptr.vmem [resolvable:$true] %s611
          %617 = dma.hbm_to_vmem [thread:$0]  %s12, 32, %s612, [#allocation16], 16, 16, 1
        $region56: #{tpu_custom_call.1} parent=11 // pred_fallthru
          _
        // Predicated region
        $region57: #{tpu_custom_call.1} parent=11 // pred_check
          %p618 = pneg %p340
        $region58: #{tpu_custom_call.1} parent=11 // pred_check_branch
          %620 = sbr.rel (%p618) target = $region60
        $region59: #{tpu_custom_call.1} parent=11 // pred_region
          _
        $region60: #{tpu_custom_call.1} parent=11 // pred_fallthru
          _
        // Predicated region
        $region61: #{tpu_custom_call.1} parent=11 // pred_check
          %p621 = pneg %p361
        $region62: #{tpu_custom_call.1} parent=11 // pred_check_branch
          %623 = sbr.rel (%p621) target = $region64
        $region63: #{tpu_custom_call.1} parent=11 // pred_region
          _
        $region64: #{tpu_custom_call.1} parent=11 // pred_fallthru
          _
        // Predicated region
        $region65: #{tpu_custom_call.1} parent=11 // pred_check
          %p624 = pneg %p382
        $region66: #{tpu_custom_call.1} parent=11 // pred_check_branch
          %626 = sbr.rel (%p624) target = $region68
        $region67: #{tpu_custom_call.1} parent=11 // pred_region
          _
        $region68: #{tpu_custom_call.1} parent=11 // pred_fallthru
          _
        // Predicated region
        $region69: #{tpu_custom_call.1} parent=11 // pred_check
          %p627 = pneg %p403
        $region70: #{tpu_custom_call.1} parent=11 // pred_check_branch
          %629 = sbr.rel (%p627) target = $region72
        $region71: #{tpu_custom_call.1} parent=11 // pred_region
          _
        $region72: #{tpu_custom_call.1} parent=11 // pred_fallthru
          _
        // Predicated region
        $region73: #{tpu_custom_call.1} parent=11 // pred_check
          %p630 = pneg %p424
        $region74: #{tpu_custom_call.1} parent=11 // pred_check_branch
          %632 = sbr.rel (%p630) target = $region76
        $region75: #{tpu_custom_call.1} parent=11 // pred_region
          _
        $region76: #{tpu_custom_call.1} parent=11 // pred_fallthru
          _
        // Predicated region
        $region77: #{tpu_custom_call.1} parent=11 // pred_check
          %p633 = pneg %p445
        $region78: #{tpu_custom_call.1} parent=11 // pred_check_branch
          %635 = sbr.rel (%p633) target = $region80
        $region79: #{tpu_custom_call.1} parent=11 // pred_region
          _
        $region80: #{tpu_custom_call.1} parent=11 // pred_fallthru
          _
        // Predicated region
        $region81: #{tpu_custom_call.1} parent=11 // pred_check
          %p636 = pneg %p466
        $region82: #{tpu_custom_call.1} parent=11 // pred_check_branch
          %638 = sbr.rel (%p636) target = $region84
        $region83: #{tpu_custom_call.1} parent=11 // pred_region
          _
        $region84: #{tpu_custom_call.1} parent=11 // pred_fallthru
          _
      $region12: #{tpu_custom_call.1} parent=5 // pred_fallthru
        _
      %p639 = scmp.lt.s32.totalorder %s36, 2
      // Predicated region
      $region85: #{tpu_custom_call.1} parent=5 // pred_check
        %p640 = pneg %p639
      $region86: #{tpu_custom_call.1} parent=5 // pred_check_branch
        %642 = sbr.rel (%p640) target = $region88
      $region87: #{tpu_custom_call.1} parent=5 // pred_region
        // Predicated region
        $region89: #{tpu_custom_call.1} parent=87 // pred_check
          %p643 = pneg %p56
        $region90: #{tpu_custom_call.1} parent=87 // pred_check_branch
          %645 = sbr.rel (%p643) target = $region92
        $region91: #{tpu_custom_call.1} parent=87 // pred_region
          %s646 = sand.u32 %s36, 1
          %s647 = scalar_lea.sflag [#allocation3], %s646
          %s648 = sand.u32 %s46, 1
          %s649 = smul.addr %s648, 8
          %s650 = scalar_lea.vmem [#allocation2], %s649
          %s652 = ssub.s32 128, 128
          %653 = vsyncadd %s647, %s652
          %s654 = smul.addr %s36, 128
          %s655 = scalar_lea.hbm %s0, %s654
          %s657 = sshll.u32 %s650, 4
          %s658 = int_to_ptr.vmem [resolvable:$true] %s657
          %660 = dma.hbm_to_vmem [thread:$0]  %s655, 128, %s658, %s647
        $region92: #{tpu_custom_call.1} parent=87 // pred_fallthru
          _
        // Predicated region
        $region93: #{tpu_custom_call.1} parent=87 // pred_check
          %p661 = pneg %p103
        $region94: #{tpu_custom_call.1} parent=87 // pred_check_branch
          %663 = sbr.rel (%p661) target = $region96
        $region95: #{tpu_custom_call.1} parent=87 // pred_region
          %s664 = sand.u32 %s36, 1
          %s665 = scalar_lea.sflag [#allocation3], %s664
          %s666 = sand.u32 %s93, 1
          %s667 = smul.addr %s666, 8
          %s668 = scalar_lea.vmem [#allocation7], %s667
          %s670 = ssub.s32 128, 128
          %671 = vsyncadd %s665, %s670
          %s672 = smul.addr %s36, 128
          %s673 = scalar_lea.hbm %s2, %s672
          %s675 = sshll.u32 %s668, 4
          %s676 = int_to_ptr.vmem [resolvable:$true] %s675
          %678 = dma.hbm_to_vmem [thread:$0]  %s673, 128, %s676, %s665
        $region96: #{tpu_custom_call.1} parent=87 // pred_fallthru
          _
      $region88: #{tpu_custom_call.1} parent=5 // pred_fallthru
        _
      %p679 = scmp.le.s32.totalorder 1, %s36
      %p680 = scmp.lt.s32.totalorder %s36, 3
      %p681 = pnand %p679, %p680
      %p682 = pneg %p681
      // Predicated region
      $region97: #{tpu_custom_call.1} parent=5 // pred_check
        _
      $region98: #{tpu_custom_call.1} parent=5 // pred_check_branch
        %684 = sbr.rel (%p681) target = $region100
      $region99: #{tpu_custom_call.1} parent=5 // pred_region
        %s685 = ssub.s32 %s36, 1
        %s686 = sand.u32 %s41, 1
        %s687 = scalar_lea.sflag [#allocation3], %s686
        %s688 = sand.u32 %s49, 1
        %s689 = smul.addr %s688, 8
        %s690 = scalar_lea.vmem [#allocation2], %s689
        // Predicated region
        $region101: #{tpu_custom_call.1} parent=99 // pred_check
          %p691 = pneg %p62
        $region102: #{tpu_custom_call.1} parent=99 // pred_check_branch
          %693 = sbr.rel (%p691) target = $region104
        $region103: #{tpu_custom_call.1} parent=99 // pred_region
          %694 = dma.done %s687, 128
        $region104: #{tpu_custom_call.1} parent=99 // pred_fallthru
          _
        // Predicated region
        $region105: #{tpu_custom_call.1} parent=99 // pred_check
          %p695 = pneg %p83
        $region106: #{tpu_custom_call.1} parent=99 // pred_check_branch
          %697 = sbr.rel (%p695) target = $region108
        $region107: #{tpu_custom_call.1} parent=99 // pred_region
          %698 = dma.done [#allocation6], 128
        $region108: #{tpu_custom_call.1} parent=99 // pred_fallthru
          _
        %s699 = sand.u32 %s41, 1
        %s700 = scalar_lea.sflag [#allocation3], %s699
        %s701 = sand.u32 %s96, 1
        %s702 = smul.addr %s701, 8
        %s703 = scalar_lea.vmem [#allocation7], %s702
        // Predicated region
        $region109: #{tpu_custom_call.1} parent=99 // pred_check
          %p704 = pneg %p109
        $region110: #{tpu_custom_call.1} parent=99 // pred_check_branch
          %706 = sbr.rel (%p704) target = $region112
        $region111: #{tpu_custom_call.1} parent=99 // pred_region
          %707 = dma.done %s700, 128
        $region112: #{tpu_custom_call.1} parent=99 // pred_fallthru
          _
        // Predicated region
        $region113: #{tpu_custom_call.1} parent=99 // pred_check
          %p708 = pneg %p130
        $region114: #{tpu_custom_call.1} parent=99 // pred_check_branch
          %710 = sbr.rel (%p708) target = $region116
        $region115: #{tpu_custom_call.1} parent=99 // pred_region
          %711 = dma.done [#allocation6], 1024
        $region116: #{tpu_custom_call.1} parent=99 // pred_fallthru
          _
        // Predicated region
        $region117: #{tpu_custom_call.1} parent=99 // pred_check
          %p712 = pneg %p172
        $region118: #{tpu_custom_call.1} parent=99 // pred_check_branch
          %714 = sbr.rel (%p712) target = $region120
        $region119: #{tpu_custom_call.1} parent=99 // pred_region
          %715 = dma.done [#allocation10], 512
        $region120: #{tpu_custom_call.1} parent=99 // pred_fallthru
          _
        // Predicated region
        $region121: #{tpu_custom_call.1} parent=99 // pred_check
          %p716 = pneg %p235
        $region122: #{tpu_custom_call.1} parent=99 // pred_check_branch
          %718 = sbr.rel (%p716) target = $region124
        $region123: #{tpu_custom_call.1} parent=99 // pred_region
          %719 = dma.done [#allocation10], 1024
        $region124: #{tpu_custom_call.1} parent=99 // pred_fallthru
          _
        // Predicated region
        $region125: #{tpu_custom_call.1} parent=99 // pred_check
          %p720 = pneg %p256
        $region126: #{tpu_custom_call.1} parent=99 // pred_check_branch
          %722 = sbr.rel (%p720) target = $region128
        $region127: #{tpu_custom_call.1} parent=99 // pred_region
          %723 = dma.done [#allocation13], 32
        $region128: #{tpu_custom_call.1} parent=99 // pred_fallthru
          _
        // Predicated region
        $region129: #{tpu_custom_call.1} parent=99 // pred_check
          %p724 = pneg %p277
        $region130: #{tpu_custom_call.1} parent=99 // pred_check_branch
          %726 = sbr.rel (%p724) target = $region132
        $region131: #{tpu_custom_call.1} parent=99 // pred_region
          %727 = dma.done [#allocation13], 1024
        $region132: #{tpu_custom_call.1} parent=99 // pred_fallthru
          _
        // Predicated region
        $region133: #{tpu_custom_call.1} parent=99 // pred_check
          %p728 = pneg %p298
        $region134: #{tpu_custom_call.1} parent=99 // pred_check_branch
          %730 = sbr.rel (%p728) target = $region136
        $region135: #{tpu_custom_call.1} parent=99 // pred_region
          %731 = dma.done [#allocation16], 1024
        $region136: #{tpu_custom_call.1} parent=99 // pred_fallthru
          _
        // Predicated region
        $region137: #{tpu_custom_call.1} parent=99 // pred_check
          %p732 = pneg %p319
        $region138: #{tpu_custom_call.1} parent=99 // pred_check_branch
          %734 = sbr.rel (%p732) target = $region140
        $region139: #{tpu_custom_call.1} parent=99 // pred_region
          %735 = dma.done [#allocation16], 32
        $region140: #{tpu_custom_call.1} parent=99 // pred_fallthru
          _
        %s736 = sand.u32 %s41, 1
        %s737 = scalar_lea.sflag [#allocation3], %s736
        %s738 = sand.u32 %s49, 1
        %s739 = smul.addr %s738, 8
        %s740 = scalar_lea.vmem [#allocation2], %s739
        %p741 = pneg %p62
        %p742 = pneg %p59
        %p743 = pneg %p83
        %p744 = pneg %p80
        %s745 = sand.u32 %s41, 1
        %s746 = scalar_lea.sflag [#allocation3], %s745
        %s747 = sand.u32 %s96, 1
        %s748 = smul.addr %s747, 8
        %s749 = scalar_lea.vmem [#allocation7], %s748
        %p750 = pneg %p109
        %p751 = pneg %p106
        %p752 = pneg %p130
        %p753 = pneg %p127
        %p754 = pneg %p151
        %p755 = pneg %p148
        %p756 = pneg %p172
        %p757 = pneg %p169
        %p758 = pneg %p193
        %p759 = pneg %p190
        %p760 = pneg %p214
        %p761 = pneg %p211
        %p762 = pneg %p235
        %p763 = pneg %p232
        %p764 = pneg %p256
        %p765 = pneg %p253
        %p766 = pneg %p277
        %p767 = pneg %p274
        %p768 = pneg %p298
        %p769 = pneg %p295
        %p770 = pneg %p319
        %p771 = pneg %p316
        %p772 = pneg %p340
        %p773 = pneg %p337
        %p774 = pneg %p361
        %p775 = pneg %p358
        %p776 = pneg %p382
        %p777 = pneg %p379
        %p778 = pneg %p403
        %p779 = pneg %p400
        %p780 = pneg %p424
        %p781 = pneg %p421
        %p782 = pneg %p445
        %p783 = pneg %p442
        %p784 = pneg %p466
        %p785 = pneg %p463
        %p786 = pneg %p492
        %p787 = pneg %p489
        %s788 = sand.u32 %s479, 1
        %s789 = scalar_lea.sflag [#allocation4], %s788
        %s790 = sand.u32 %s479, 1
        %s791 = scalar_lea.vmem [#allocation18], %s790
        %v792 = vld [vmem:[%s690] sm:$0xff]
        %v793 = vld [vmem:[#allocation8] sm:$0xff]
        %v794 = vld [vmem:[#allocation8 + $0x8] sm:$0xff]
        %v795 = vld [vmem:[#allocation8 + $0x10] sm:$0xff]
        %v796 = vld [vmem:[#allocation8 + $0x18] sm:$0xff]
        %v797 = vld [vmem:[%s4] sm:$0x1]
        %v799 = vlaneseq
        %v800 = vshrl.u32 %v799, 7
        %v801 = vsub.s32 0, %v800
        %v802 = vrot.slane %v797, %v801
        %vm804 = vcmask 261120
        %v806 = vsel %vm804, %v792, 0
        %808 = vmatprep.subr.mxu0 0.0
        %809 = vmatpush1.msra.mxu0 %v793
        %810 = vmatprep.subr.mxu0 0.0
        %811 = vmatpush1.msra.mxu0 %v794
        %812 = vmatprep.subr.mxu0 0.0
        %813 = vmatpush1.msra.mxu0 %v795
        %814 = vmatprep.subr.mxu0 0.0
        %815 = vmatpush1.msra.mxu0 %v796
        %816 = vmatprep.subr.mxu0 0.0
        %817 = vmatpush1.msra.mxu0 0.0
        %818 = vmatprep.subr.mxu0 0.0
        %819 = vmatpush1.msra.mxu0 0.0
        %820 = vmatprep.subr.mxu0 0.0
        %821 = vmatpush1.msra.mxu0 0.0
        %822 = vmatprep.subr.mxu0 0.0
        %823 = vmatpush1.msra.mxu0 0.0
        %824 = vmatprep.subr.mxu0 0.0
        %825 = vmatpush1.msra.mxu0 0.0
        %826 = vmatprep.subr.mxu0 0.0
        %827 = vmatpush1.msra.mxu0 0.0
        %828 = vmatprep.subr.mxu0 0.0
        %829 = vmatpush1.msra.mxu0 0.0
        %830 = vmatprep.subr.mxu0 0.0
        %831 = vmatpush1.msra.mxu0 0.0
        %832 = vmatprep.subr.mxu0 0.0
        %833 = vmatpush1.msra.mxu0 0.0
        %834 = vmatprep.subr.mxu0 0.0
        %835 = vmatpush1.msra.mxu0 0.0
        %836 = vmatprep.subr.mxu0 0.0
        %837 = vmatpush1.msra.mxu0 0.0
        %838 = vmatprep.subr.mxu0 0.0
        %839 = vmatpush1.msra.mxu0 0.0
        %840 = vmatprep.subr.mxu0 0.0
        %841 = vmatpush1.msra.mxu0 0.0
        %842 = vmatprep.subr.mxu0 0.0
        %843 = vmatpush1.msra.mxu0 0.0
        %844 = vmatprep.subr.mxu0 0.0
        %845 = vmatpush1.msra.mxu0 0.0
        %846 = vmatprep.subr.mxu0 0.0
        %847 = vmatpush1.msra.mxu0 0.0
        %848 = vmatprep.subr.mxu0 0.0
        %849 = vmatpush1.msra.mxu0 0.0
        %850 = vmatprep.subr.mxu0 0.0
        %851 = vmatpush1.msra.mxu0 0.0
        %852 = vmatprep.subr.mxu0 0.0
        %853 = vmatpush1.msra.mxu0 0.0
        %854 = vmatprep.subr.mxu0 0.0
        %855 = vmatpush1.msra.mxu0 0.0
        %856 = vmatprep.subr.mxu0 0.0
        %857 = vmatpush1.msra.mxu0 0.0
        %858 = vmatprep.subr.mxu0 0.0
        %859 = vmatpush1.msra.mxu0 0.0
        %860 = vmatprep.subr.mxu0 0.0
        %861 = vmatpush1.msra.mxu0 0.0
        %862 = vmatprep.subr.mxu0 0.0
        %863 = vmatpush1.msra.mxu0 0.0
        %864 = vmatprep.subr.mxu0 0.0
        %865 = vmatpush1.msra.mxu0 0.0
        %866 = vmatprep.subr.mxu0 0.0
        %867 = vmatpush1.msra.mxu0 0.0
        %868 = vmatprep.subr.mxu0 0.0
        %869 = vmatpush1.msra.mxu0 0.0
        %870 = vmatprep.subr.mxu0 0.0
        %871 = vmatpush1.msra.mxu0 0.0
        %872 = vmatprep.mubr.f32.mxu0 0.0
        %873 = vmatmul.mubr.f32.gmra.mrb[0].mxu0 %v806
        %v874 = vpop.f32.mrb[0].mxu0
        %v875 = vadd.f32 %v802, %v874
        %v876 = vpop.f32.mrb[0].mxu0
        %877 = vdwg.mxu0
        %v878 = vmul.f32 %v875, 0.5
        %v879 = vrcp.pop 1.4142135
        %v880 = vmul.f32 %v875, %v879
        %v881 = verf.f32.pop %v880
        %v882 = vadd.f32 %v881, 1.0
        %v883 = vmul.f32 %v878, %v882
        %v884 = vxor.u32 %v875, 2147483648
        %v885 = vmul.f32 %v884, 1.442695
        %v886 = vpow.pop %v885
        %v887 = vadd.f32 %v886, 1.0
        %v888 = vrcp.pop %v887
        %v889 = vmul.f32 1.0, %v888
        %891 = vrot.lane.b32.xlu0 %v883, 32
        %v892 = vpop.permute.xlu0 %891
        %v894 = vmul.f32 %v889, %v892
        %v895 = vsub.f32 1.0, %v889
        %896 = vrot.lane.b32.xlu0 %v792, 32
        %v897 = vpop.permute.xlu0 %896
        %v899 = vmul.f32 %v895, %v897
        %v900 = vadd.f32 %v894, %v899
        %s901 = scalar_lea.vmem [#allocation8], 32
        %v902 = vld [vmem:[%s901] sm:$0xff]
        %v903 = vld [vmem:[%s901 + $0x8] sm:$0xff]
        %v904 = vld [vmem:[%s901 + $0x10] sm:$0xff]
        %v905 = vld [vmem:[%s901 + $0x18] sm:$0xff]
        %s906 = scalar_lea.vmem %s4, 1
        %v907 = vld [vmem:[%s906] sm:$0x1]
        %v909 = vlaneseq
        %v910 = vshrl.u32 %v909, 7
        %v911 = vsub.s32 0, %v910
        %v912 = vrot.slane %v907, %v911
        %915 = vrot.lane.b32.xlu0 %v900, 96
        %v916 = vpop.permute.xlu0 %915
        %v917 = vsel %vm804, %v916, 0
        %919 = vmatprep.subr.mxu0 0.0
        %920 = vmatpush1.msra.mxu0 %v902
        %921 = vmatprep.subr.mxu0 0.0
        %922 = vmatpush1.msra.mxu0 %v903
        %923 = vmatprep.subr.mxu0 0.0
        %924 = vmatpush1.msra.mxu0 %v904
        %925 = vmatprep.subr.mxu0 0.0
        %926 = vmatpush1.msra.mxu0 %v905
        %927 = vmatprep.subr.mxu0 0.0
        %928 = vmatpush1.msra.mxu0 0.0
        %929 = vmatprep.subr.mxu0 0.0
        %930 = vmatpush1.msra.mxu0 0.0
        %931 = vmatprep.subr.mxu0 0.0
        %932 = vmatpush1.msra.mxu0 0.0
        %933 = vmatprep.subr.mxu0 0.0
        %934 = vmatpush1.msra.mxu0 0.0
        %935 = vmatprep.subr.mxu0 0.0
        %936 = vmatpush1.msra.mxu0 0.0
        %937 = vmatprep.subr.mxu0 0.0
        %938 = vmatpush1.msra.mxu0 0.0
        %939 = vmatprep.subr.mxu0 0.0
        %940 = vmatpush1.msra.mxu0 0.0
        %941 = vmatprep.subr.mxu0 0.0
        %942 = vmatpush1.msra.mxu0 0.0
        %943 = vmatprep.subr.mxu0 0.0
        %944 = vmatpush1.msra.mxu0 0.0
        %945 = vmatprep.subr.mxu0 0.0
        %946 = vmatpush1.msra.mxu0 0.0
        %947 = vmatprep.subr.mxu0 0.0
        %948 = vmatpush1.msra.mxu0 0.0
        %949 = vmatprep.subr.mxu0 0.0
        %950 = vmatpush1.msra.mxu0 0.0
        %951 = vmatprep.subr.mxu0 0.0
        %952 = vmatpush1.msra.mxu0 0.0
        %953 = vmatprep.subr.mxu0 0.0
        %954 = vmatpush1.msra.mxu0 0.0
        %955 = vmatprep.subr.mxu0 0.0
        %956 = vmatpush1.msra.mxu0 0.0
        %957 = vmatprep.subr.mxu0 0.0
        %958 = vmatpush1.msra.mxu0 0.0
        %959 = vmatprep.subr.mxu0 0.0
        %960 = vmatpush1.msra.mxu0 0.0
        %961 = vmatprep.subr.mxu0 0.0
        %962 = vmatpush1.msra.mxu0 0.0
        %963 = vmatprep.subr.mxu0 0.0
        %964 = vmatpush1.msra.mxu0 0.0
        %965 = vmatprep.subr.mxu0 0.0
        %966 = vmatpush1.msra.mxu0 0.0
        %967 = vmatprep.subr.mxu0 0.0
        %968 = vmatpush1.msra.mxu0 0.0
        %969 = vmatprep.subr.mxu0 0.0
        %970 = vmatpush1.msra.mxu0 0.0
        %971 = vmatprep.subr.mxu0 0.0
        %972 = vmatpush1.msra.mxu0 0.0
        %973 = vmatprep.subr.mxu0 0.0
        %974 = vmatpush1.msra.mxu0 0.0
        %975 = vmatprep.subr.mxu0 0.0
        %976 = vmatpush1.msra.mxu0 0.0
        %977 = vmatprep.subr.mxu0 0.0
        %978 = vmatpush1.msra.mxu0 0.0
        %979 = vmatprep.subr.mxu0 0.0
        %980 = vmatpush1.msra.mxu0 0.0
        %981 = vmatprep.subr.mxu0 0.0
        %982 = vmatpush1.msra.mxu0 0.0
        %983 = vmatprep.mubr.f32.mxu0 0.0
        %984 = vmatmul.mubr.f32.gmra.mrb[0].mxu0 %v917
        %v985 = vpop.f32.mrb[0].mxu0
        %v986 = vadd.f32 %v912, %v985
        %v987 = vpop.f32.mrb[0].mxu0
        %988 = vdwg.mxu0
        %v989 = vmul.f32 %v986, 0.5
        %v990 = vmul.f32 %v986, %v879
        %v991 = verf.f32.pop %v990
        %v992 = vadd.f32 %v991, 1.0
        %v993 = vmul.f32 %v989, %v992
        %v994 = vxor.u32 %v986, 2147483648
        %v995 = vmul.f32 %v994, 1.442695
        %v996 = vpow.pop %v995
        %v997 = vadd.f32 %v996, 1.0
        %v998 = vrcp.pop %v997
        %v999 = vmul.f32 1.0, %v998
        %1001 = vrot.lane.b32.xlu0 %v993, 32
        %v1002 = vpop.permute.xlu0 %1001
        %v1004 = vmul.f32 %v999, %v1002
        %v1005 = vsub.f32 1.0, %v999
        %v1006 = vmul.f32 %v1005, %v900
        %v1007 = vadd.f32 %v1004, %v1006
        %v1008 = vld [vmem:[#allocation9] sm:$0xff]
        %v1009 = vld [vmem:[#allocation9 + $0x8] sm:$0xff]
        %v1010 = vld [vmem:[#allocation9 + $0x10] sm:$0xff]
        %v1011 = vld [vmem:[#allocation9 + $0x18] sm:$0xff]
        %v1012 = vld [vmem:[%s6] sm:$0x1]
        %v1014 = vlaneseq
        %v1015 = vshrl.u32 %v1014, 7
        %v1016 = vsub.s32 0, %v1015
        %v1017 = vrot.slane %v1012, %v1016
        %1020 = vrot.lane.b32.xlu0 %v1007, 96
        %v1021 = vpop.permute.xlu0 %1020
        %v1022 = vsel %vm804, %v1021, 0
        %1024 = vmatprep.subr.mxu0 0.0
        %1025 = vmatpush1.msra.mxu0 %v1008
        %1026 = vmatprep.subr.mxu0 0.0
        %1027 = vmatpush1.msra.mxu0 %v1009
        %1028 = vmatprep.subr.mxu0 0.0
        %1029 = vmatpush1.msra.mxu0 %v1010
        %1030 = vmatprep.subr.mxu0 0.0
        %1031 = vmatpush1.msra.mxu0 %v1011
        %1032 = vmatprep.subr.mxu0 0.0
        %1033 = vmatpush1.msra.mxu0 0.0
        %1034 = vmatprep.subr.mxu0 0.0
        %1035 = vmatpush1.msra.mxu0 0.0
        %1036 = vmatprep.subr.mxu0 0.0
        %1037 = vmatpush1.msra.mxu0 0.0
        %1038 = vmatprep.subr.mxu0 0.0
        %1039 = vmatpush1.msra.mxu0 0.0
        %1040 = vmatprep.subr.mxu0 0.0
        %1041 = vmatpush1.msra.mxu0 0.0
        %1042 = vmatprep.subr.mxu0 0.0
        %1043 = vmatpush1.msra.mxu0 0.0
        %1044 = vmatprep.subr.mxu0 0.0
        %1045 = vmatpush1.msra.mxu0 0.0
        %1046 = vmatprep.subr.mxu0 0.0
        %1047 = vmatpush1.msra.mxu0 0.0
        %1048 = vmatprep.subr.mxu0 0.0
        %1049 = vmatpush1.msra.mxu0 0.0
        %1050 = vmatprep.subr.mxu0 0.0
        %1051 = vmatpush1.msra.mxu0 0.0
        %1052 = vmatprep.subr.mxu0 0.0
        %1053 = vmatpush1.msra.mxu0 0.0
        %1054 = vmatprep.subr.mxu0 0.0
        %1055 = vmatpush1.msra.mxu0 0.0
        %1056 = vmatprep.subr.mxu0 0.0
        %1057 = vmatpush1.msra.mxu0 0.0
        %1058 = vmatprep.subr.mxu0 0.0
        %1059 = vmatpush1.msra.mxu0 0.0
        %1060 = vmatprep.subr.mxu0 0.0
        %1061 = vmatpush1.msra.mxu0 0.0
        %1062 = vmatprep.subr.mxu0 0.0
        %1063 = vmatpush1.msra.mxu0 0.0
        %1064 = vmatprep.subr.mxu0 0.0
        %1065 = vmatpush1.msra.mxu0 0.0
        %1066 = vmatprep.subr.mxu0 0.0
        %1067 = vmatpush1.msra.mxu0 0.0
        %1068 = vmatprep.subr.mxu0 0.0
        %1069 = vmatpush1.msra.mxu0 0.0
        %1070 = vmatprep.subr.mxu0 0.0
        %1071 = vmatpush1.msra.mxu0 0.0
        %1072 = vmatprep.subr.mxu0 0.0
        %1073 = vmatpush1.msra.mxu0 0.0
        %1074 = vmatprep.subr.mxu0 0.0
        %1075 = vmatpush1.msra.mxu0 0.0
        %1076 = vmatprep.subr.mxu0 0.0
        %1077 = vmatpush1.msra.mxu0 0.0
        %1078 = vmatprep.subr.mxu0 0.0
        %1079 = vmatpush1.msra.mxu0 0.0
        %1080 = vmatprep.subr.mxu0 0.0
        %1081 = vmatpush1.msra.mxu0 0.0
        %1082 = vmatprep.subr.mxu0 0.0
        %1083 = vmatpush1.msra.mxu0 0.0
        %1084 = vmatprep.subr.mxu0 0.0
        %1085 = vmatpush1.msra.mxu0 0.0
        %1086 = vmatprep.subr.mxu0 0.0
        %1087 = vmatpush1.msra.mxu0 0.0
        %1088 = vmatprep.mubr.f32.mxu0 0.0
        %1089 = vmatmul.mubr.f32.gmra.mrb[0].mxu0 %v1022
        %v1090 = vpop.f32.mrb[0].mxu0
        %v1091 = vadd.f32 %v1017, %v1090
        %v1092 = vpop.f32.mrb[0].mxu0
        %1093 = vdwg.mxu0
        %v1094 = vld [vmem:[#allocation5] sm:$0xff]
        %v1095 = vadd.f32 %v1091, %v1094
        %v1096 = vld [vmem:[%s703] sm:$0xff]
        %v1097 = vadd.f32 %v1095, %v1096
        %v1098 = vld [vmem:[%s7] sm:$0x1]
        %v1099 = vld [vmem:[%s7 + $0x1] sm:$0x1]
        %v1100 = vsel %vm804, %v1097, 0.0
        %1101 = vadd.xlane.f32.xlu0 %v1100
        %v1102 = vpop.xlane.xlu0 %1101
        %v1103 = vrcp.pop 32.0
        %v1104 = vmul.f32 %v1102, %v1103
        %v1105 = vsub.f32 %v1097, %v1104
        %v1106 = vmul.f32 %v1105, %v1105
        %v1107 = vsel %vm804, %v1106, 0.0
        %1108 = vadd.xlane.f32.xlu0 %v1107
        %v1109 = vpop.xlane.xlu0 %1108
        %v1110 = vmul.f32 %v1109, %v1103
        %v1111 = vadd.f32 %v1110, 1e-12
        %v1112 = vrsqrt.pop %v1111
        %v1113 = vmul.f32 %v1105, %v1112
        %v1114 = vlaneseq
        %v1115 = vshrl.u32 %v1114, 7
        %v1116 = vsub.s32 0, %v1115
        %v1117 = vrot.slane %v1098, %v1116
        %v1118 = vmul.f32 %v1117, %v1113
        %v1119 = vlaneseq
        %v1120 = vshrl.u32 %v1119, 7
        %v1121 = vsub.s32 0, %v1120
        %v1122 = vrot.slane %v1099, %v1121
        %v1123 = vadd.f32 %v1118, %v1122
        %v1124 = vld [vmem:[%s14] sm:$0x3f]
        %v1125 = vsel %vm804, %v1123, 0.0
        %1126 = vadd.xlane.f32.xlu0 %v1125
        %v1127 = vpop.xlane.xlu0 %1126
        %v1128 = vmul.f32 %v1127, %v1103
        %v1129 = vsub.f32 %v1123, %v1128
        %v1130 = vmul.f32 %v1129, %v1129
        %v1131 = vsel %vm804, %v1130, 0.0
        %1132 = vadd.xlane.f32.xlu0 %v1131
        %v1133 = vpop.xlane.xlu0 %1132
        %v1134 = vmul.f32 %v1133, %v1103
        %v1135 = vadd.f32 %v1134, 1e-12
        %v1136 = vrsqrt.pop %v1135
        %v1137 = vmul.f32 %v1129, %v1136
        %v1138 = vlaneseq
        %v1139 = vshrl.u32 %v1138, 7
        %v1140 = vsub.s32 0, %v1139
        %v1141 = vrot.slane %v1124, %v1140
        %v1142 = vmul.f32 %v1141, %v1137
        %v1143 = vlaneseq
        %v1144 = vshrl.u32 %v1143, 7
        %v1145 = vsub.s32 1, %v1144
        %v1146 = vrot.slane %v1124, %v1145
        %v1147 = vadd.f32 %v1142, %v1146
        %v1148 = vld [vmem:[#allocation11] sm:$0xff]
        %v1149 = vld [vmem:[#allocation11 + $0x8] sm:$0xff]
        %v1150 = vld [vmem:[#allocation11 + $0x10] sm:$0xff]
        %v1151 = vld [vmem:[#allocation11 + $0x18] sm:$0xff]
        %v1152 = vld [vmem:[#allocation12] sm:$0x1]
        %v1154 = vlaneseq
        %v1155 = vshrl.u32 %v1154, 7
        %v1156 = vsub.s32 0, %v1155
        %v1157 = vrot.slane %v1152, %v1156
        %v1160 = vsel %vm804, %v1147, 0
        %1162 = vmatprep.subr.mxu0 0.0
        %1163 = vmatpush1.msra.mxu0 %v1148
        %1164 = vmatprep.subr.mxu0 0.0
        %1165 = vmatpush1.msra.mxu0 %v1149
        %1166 = vmatprep.subr.mxu0 0.0
        %1167 = vmatpush1.msra.mxu0 %v1150
        %1168 = vmatprep.subr.mxu0 0.0
        %1169 = vmatpush1.msra.mxu0 %v1151
        %1170 = vmatprep.subr.mxu0 0.0
        %1171 = vmatpush1.msra.mxu0 0.0
        %1172 = vmatprep.subr.mxu0 0.0
        %1173 = vmatpush1.msra.mxu0 0.0
        %1174 = vmatprep.subr.mxu0 0.0
        %1175 = vmatpush1.msra.mxu0 0.0
        %1176 = vmatprep.subr.mxu0 0.0
        %1177 = vmatpush1.msra.mxu0 0.0
        %1178 = vmatprep.subr.mxu0 0.0
        %1179 = vmatpush1.msra.mxu0 0.0
        %1180 = vmatprep.subr.mxu0 0.0
        %1181 = vmatpush1.msra.mxu0 0.0
        %1182 = vmatprep.subr.mxu0 0.0
        %1183 = vmatpush1.msra.mxu0 0.0
        %1184 = vmatprep.subr.mxu0 0.0
        %1185 = vmatpush1.msra.mxu0 0.0
        %1186 = vmatprep.subr.mxu0 0.0
        %1187 = vmatpush1.msra.mxu0 0.0
        %1188 = vmatprep.subr.mxu0 0.0
        %1189 = vmatpush1.msra.mxu0 0.0
        %1190 = vmatprep.subr.mxu0 0.0
        %1191 = vmatpush1.msra.mxu0 0.0
        %1192 = vmatprep.subr.mxu0 0.0
        %1193 = vmatpush1.msra.mxu0 0.0
        %1194 = vmatprep.subr.mxu0 0.0
        %1195 = vmatpush1.msra.mxu0 0.0
        %1196 = vmatprep.subr.mxu0 0.0
        %1197 = vmatpush1.msra.mxu0 0.0
        %1198 = vmatprep.subr.mxu0 0.0
        %1199 = vmatpush1.msra.mxu0 0.0
        %1200 = vmatprep.subr.mxu0 0.0
        %1201 = vmatpush1.msra.mxu0 0.0
        %1202 = vmatprep.subr.mxu0 0.0
        %1203 = vmatpush1.msra.mxu0 0.0
        %1204 = vmatprep.subr.mxu0 0.0
        %1205 = vmatpush1.msra.mxu0 0.0
        %1206 = vmatprep.subr.mxu0 0.0
        %1207 = vmatpush1.msra.mxu0 0.0
        %1208 = vmatprep.subr.mxu0 0.0
        %1209 = vmatpush1.msra.mxu0 0.0
        %1210 = vmatprep.subr.mxu0 0.0
        %1211 = vmatpush1.msra.mxu0 0.0
        %1212 = vmatprep.subr.mxu0 0.0
        %1213 = vmatpush1.msra.mxu0 0.0
        %1214 = vmatprep.subr.mxu0 0.0
        %1215 = vmatpush1.msra.mxu0 0.0
        %1216 = vmatprep.subr.mxu0 0.0
        %1217 = vmatpush1.msra.mxu0 0.0
        %1218 = vmatprep.subr.mxu0 0.0
        %1219 = vmatpush1.msra.mxu0 0.0
        %1220 = vmatprep.subr.mxu0 0.0
        %1221 = vmatpush1.msra.mxu0 0.0
        %1222 = vmatprep.subr.mxu0 0.0
        %1223 = vmatpush1.msra.mxu0 0.0
        %1224 = vmatprep.subr.mxu0 0.0
        %1225 = vmatpush1.msra.mxu0 0.0
        %1226 = vmatprep.mubr.f32.mxu0 0.0
        %1227 = vmatmul.mubr.f32.gmra.mrb[0].mxu0 %v1160
        %v1228 = vpop.f32.mrb[0].mxu0
        %v1229 = vadd.f32 %v1157, %v1228
        %v1230 = vpop.f32.mrb[0].mxu0
        %1231 = vdwg.mxu0
        %1233 = vrot.lane.b32.xlu0 %v1229, 120
        %v1234 = vpop.permute.xlu0 %1233
        %1236 = vrot.lane.b32.xlu0 %v1229, 112
        %v1237 = vpop.permute.xlu0 %1236
        %1239 = vrot.lane.b32.xlu0 %v1229, 104
        %v1240 = vpop.permute.xlu0 %1239
        %v1242 = vcombine.low %v1229, %v1237
        %v1243 = vcombine.high %v1229, %v1237
        %v1245 = vunpack.c.l.s4 1983009808
        %v1246 = vunpack.c.0.s8 %v1245
        %v1247 = vlaneseq
        %v1248 = vshrl.u32 %v1247, 7
        %v1249 = vsub.s32 %v1246, %v1248
        %v1250 = vrot.slane %v1242, %v1249
        %v1252 = vunpack.c.l.s4 1983009808
        %v1253 = vunpack.c.0.s8 %v1252
        %v1254 = vlaneseq
        %v1255 = vshrl.u32 %v1254, 7
        %v1256 = vsub.s32 %v1253, %v1255
        %v1257 = vrot.slane %v1243, %v1256
        %v1258 = vcombine.low %v1234, %v1240
        %v1259 = vcombine.high %v1234, %v1240
        %v1261 = vunpack.c.l.s4 1983009808
        %v1262 = vunpack.c.0.s8 %v1261
        %v1263 = vlaneseq
        %v1264 = vshrl.u32 %v1263, 7
        %v1265 = vsub.s32 %v1262, %v1264
        %v1266 = vrot.slane %v1258, %v1265
        %v1268 = vunpack.c.l.s4 1983009808
        %v1269 = vunpack.c.0.s8 %v1268
        %v1270 = vlaneseq
        %v1271 = vshrl.u32 %v1270, 7
        %v1272 = vsub.s32 %v1269, %v1271
        %v1273 = vrot.slane %v1259, %v1272
        %v1274 = vcombine.low %v1250, %v1266
        %v1275 = vcombine.high %v1250, %v1266
        %v1277 = vunpack.c.l.s4 1934713408
        %v1278 = vunpack.c.0.s8 %v1277
        %v1279 = vlaneseq
        %v1280 = vshrl.u32 %v1279, 7
        %v1281 = vsub.s32 %v1278, %v1280
        %v1282 = vrot.slane %v1274, %v1281
        %v1284 = vunpack.c.l.s4 1934713408
        %v1285 = vunpack.c.0.s8 %v1284
        %v1286 = vlaneseq
        %v1287 = vshrl.u32 %v1286, 7
        %v1288 = vsub.s32 %v1285, %v1287
        %v1289 = vrot.slane %v1275, %v1288
        %v1290 = vcombine.low %v1257, %v1273
        %v1291 = vcombine.high %v1257, %v1273
        %v1293 = vunpack.c.l.s4 1934713408
        %v1294 = vunpack.c.0.s8 %v1293
        %v1295 = vlaneseq
        %v1296 = vshrl.u32 %v1295, 7
        %v1297 = vsub.s32 %v1294, %v1296
        %v1298 = vrot.slane %v1290, %v1297
        %v1300 = vunpack.c.l.s4 1934713408
        %v1301 = vunpack.c.0.s8 %v1300
        %v1302 = vlaneseq
        %v1303 = vshrl.u32 %v1302, 7
        %v1304 = vsub.s32 %v1301, %v1303
        %v1305 = vrot.slane %v1291, %v1304
        %v1306 = vcombine.high %v1282, 0.0
        %v1307 = vcombine.high %v1289, 0.0
        %v1308 = vcombine.high %v1298, 0.0
        %v1309 = vcombine.high %v1305, 0.0
        %v1310 = vcombine.low %v1282, %v1289
        %v1312 = vunpack.c.l.s4 1983009808
        %v1313 = vunpack.c.0.s8 %v1312
        %v1314 = vlaneseq
        %v1315 = vshrl.u32 %v1314, 7
        %v1316 = vsub.s32 %v1313, %v1315
        %v1317 = vrot.slane %v1310, %v1316
        %v1318 = vcombine.low %v1306, %v1307
        %v1320 = vunpack.c.l.s4 1983009808
        %v1321 = vunpack.c.0.s8 %v1320
        %v1322 = vlaneseq
        %v1323 = vshrl.u32 %v1322, 7
        %v1324 = vsub.s32 %v1321, %v1323
        %v1325 = vrot.slane %v1318, %v1324
        %v1326 = vcombine.low %v1298, %v1305
        %v1328 = vunpack.c.l.s4 1983009808
        %v1329 = vunpack.c.0.s8 %v1328
        %v1330 = vlaneseq
        %v1331 = vshrl.u32 %v1330, 7
        %v1332 = vsub.s32 %v1329, %v1331
        %v1333 = vrot.slane %v1326, %v1332
        %v1334 = vcombine.low %v1308, %v1309
        %v1336 = vunpack.c.l.s4 1983009808
        %v1337 = vunpack.c.0.s8 %v1336
        %v1338 = vlaneseq
        %v1339 = vshrl.u32 %v1338, 7
        %v1340 = vsub.s32 %v1337, %v1339
        %v1341 = vrot.slane %v1334, %v1340
        %v1342 = vcombine.low %v1317, %v1325
        %v1343 = vcombine.high %v1317, %v1325
        %v1345 = vunpack.c.l.s4 1934713408
        %v1346 = vunpack.c.0.s8 %v1345
        %v1347 = vlaneseq
        %v1348 = vshrl.u32 %v1347, 7
        %v1349 = vsub.s32 %v1346, %v1348
        %v1350 = vrot.slane %v1342, %v1349
        %v1352 = vunpack.c.l.s4 1934713408
        %v1353 = vunpack.c.0.s8 %v1352
        %v1354 = vlaneseq
        %v1355 = vshrl.u32 %v1354, 7
        %v1356 = vsub.s32 %v1353, %v1355
        %v1357 = vrot.slane %v1343, %v1356
        %v1358 = vcombine.low %v1333, %v1341
        %v1359 = vcombine.high %v1333, %v1341
        %v1361 = vunpack.c.l.s4 1934713408
        %v1362 = vunpack.c.0.s8 %v1361
        %v1363 = vlaneseq
        %v1364 = vshrl.u32 %v1363, 7
        %v1365 = vsub.s32 %v1362, %v1364
        %v1366 = vrot.slane %v1358, %v1365
        %v1368 = vunpack.c.l.s4 1934713408
        %v1369 = vunpack.c.0.s8 %v1368
        %v1370 = vlaneseq
        %v1371 = vshrl.u32 %v1370, 7
        %v1372 = vsub.s32 %v1369, %v1371
        %v1373 = vrot.slane %v1359, %v1372
        %v1374 = vcombine.low %v1350, %v1366
        %v1375 = vcombine.high %v1350, %v1366
        %v1376 = vcombine.low %v1357, %v1373
        %v1377 = vcombine.high %v1357, %v1373
        %1378 = vrot.lane.b32.xlu0 %v1229, 96
        %v1379 = vpop.permute.xlu0 %1378
        %1380 = vrot.lane.b32.xlu0 %v1234, 96
        %v1381 = vpop.permute.xlu0 %1380
        %1382 = vrot.lane.b32.xlu0 %v1237, 96
        %v1383 = vpop.permute.xlu0 %1382
        %1384 = vrot.lane.b32.xlu0 %v1240, 96
        %v1385 = vpop.permute.xlu0 %1384
        %v1390 = vcombine.low %v1379, %v1383
        %v1391 = vcombine.high %v1379, %v1383
        %v1393 = vunpack.c.l.s4 1983009808
        %v1394 = vunpack.c.0.s8 %v1393
        %v1395 = vlaneseq
        %v1396 = vshrl.u32 %v1395, 7
        %v1397 = vsub.s32 %v1394, %v1396
        %v1398 = vrot.slane %v1390, %v1397
        %v1400 = vunpack.c.l.s4 1983009808
        %v1401 = vunpack.c.0.s8 %v1400
        %v1402 = vlaneseq
        %v1403 = vshrl.u32 %v1402, 7
        %v1404 = vsub.s32 %v1401, %v1403
        %v1405 = vrot.slane %v1391, %v1404
        %v1406 = vcombine.low %v1381, %v1385
        %v1407 = vcombine.high %v1381, %v1385
        %v1409 = vunpack.c.l.s4 1983009808
        %v1410 = vunpack.c.0.s8 %v1409
        %v1411 = vlaneseq
        %v1412 = vshrl.u32 %v1411, 7
        %v1413 = vsub.s32 %v1410, %v1412
        %v1414 = vrot.slane %v1406, %v1413
        %v1416 = vunpack.c.l.s4 1983009808
        %v1417 = vunpack.c.0.s8 %v1416
        %v1418 = vlaneseq
        %v1419 = vshrl.u32 %v1418, 7
        %v1420 = vsub.s32 %v1417, %v1419
        %v1421 = vrot.slane %v1407, %v1420
        %v1422 = vcombine.low %v1398, %v1414
        %v1423 = vcombine.high %v1398, %v1414
        %v1425 = vunpack.c.l.s4 1934713408
        %v1426 = vunpack.c.0.s8 %v1425
        %v1427 = vlaneseq
        %v1428 = vshrl.u32 %v1427, 7
        %v1429 = vsub.s32 %v1426, %v1428
        %v1430 = vrot.slane %v1422, %v1429
        %v1432 = vunpack.c.l.s4 1934713408
        %v1433 = vunpack.c.0.s8 %v1432
        %v1434 = vlaneseq
        %v1435 = vshrl.u32 %v1434, 7
        %v1436 = vsub.s32 %v1433, %v1435
        %v1437 = vrot.slane %v1423, %v1436
        %v1438 = vcombine.low %v1405, %v1421
        %v1439 = vcombine.high %v1405, %v1421
        %v1441 = vunpack.c.l.s4 1934713408
        %v1442 = vunpack.c.0.s8 %v1441
        %v1443 = vlaneseq
        %v1444 = vshrl.u32 %v1443, 7
        %v1445 = vsub.s32 %v1442, %v1444
        %v1446 = vrot.slane %v1438, %v1445
        %v1448 = vunpack.c.l.s4 1934713408
        %v1449 = vunpack.c.0.s8 %v1448
        %v1450 = vlaneseq
        %v1451 = vshrl.u32 %v1450, 7
        %v1452 = vsub.s32 %v1449, %v1451
        %v1453 = vrot.slane %v1439, %v1452
        %v1454 = vcombine.high %v1430, 0.0
        %v1455 = vcombine.high %v1437, 0.0
        %v1456 = vcombine.high %v1446, 0.0
        %v1457 = vcombine.high %v1453, 0.0
        %v1458 = vcombine.low %v1430, %v1437
        %v1460 = vunpack.c.l.s4 1983009808
        %v1461 = vunpack.c.0.s8 %v1460
        %v1462 = vlaneseq
        %v1463 = vshrl.u32 %v1462, 7
        %v1464 = vsub.s32 %v1461, %v1463
        %v1465 = vrot.slane %v1458, %v1464
        %v1466 = vcombine.low %v1454, %v1455
        %v1468 = vunpack.c.l.s4 1983009808
        %v1469 = vunpack.c.0.s8 %v1468
        %v1470 = vlaneseq
        %v1471 = vshrl.u32 %v1470, 7
        %v1472 = vsub.s32 %v1469, %v1471
        %v1473 = vrot.slane %v1466, %v1472
        %v1474 = vcombine.low %v1446, %v1453
        %v1476 = vunpack.c.l.s4 1983009808
        %v1477 = vunpack.c.0.s8 %v1476
        %v1478 = vlaneseq
        %v1479 = vshrl.u32 %v1478, 7
        %v1480 = vsub.s32 %v1477, %v1479
        %v1481 = vrot.slane %v1474, %v1480
        %v1482 = vcombine.low %v1456, %v1457
        %v1484 = vunpack.c.l.s4 1983009808
        %v1485 = vunpack.c.0.s8 %v1484
        %v1486 = vlaneseq
        %v1487 = vshrl.u32 %v1486, 7
        %v1488 = vsub.s32 %v1485, %v1487
        %v1489 = vrot.slane %v1482, %v1488
        %v1490 = vcombine.low %v1465, %v1473
        %v1491 = vcombine.high %v1465, %v1473
        %v1493 = vunpack.c.l.s4 1934713408
        %v1494 = vunpack.c.0.s8 %v1493
        %v1495 = vlaneseq
        %v1496 = vshrl.u32 %v1495, 7
        %v1497 = vsub.s32 %v1494, %v1496
        %v1498 = vrot.slane %v1490, %v1497
        %v1500 = vunpack.c.l.s4 1934713408
        %v1501 = vunpack.c.0.s8 %v1500
        %v1502 = vlaneseq
        %v1503 = vshrl.u32 %v1502, 7
        %v1504 = vsub.s32 %v1501, %v1503
        %v1505 = vrot.slane %v1491, %v1504
        %v1506 = vcombine.low %v1481, %v1489
        %v1507 = vcombine.high %v1481, %v1489
        %v1509 = vunpack.c.l.s4 1934713408
        %v1510 = vunpack.c.0.s8 %v1509
        %v1511 = vlaneseq
        %v1512 = vshrl.u32 %v1511, 7
        %v1513 = vsub.s32 %v1510, %v1512
        %v1514 = vrot.slane %v1506, %v1513
        %v1516 = vunpack.c.l.s4 1934713408
        %v1517 = vunpack.c.0.s8 %v1516
        %v1518 = vlaneseq
        %v1519 = vshrl.u32 %v1518, 7
        %v1520 = vsub.s32 %v1517, %v1519
        %v1521 = vrot.slane %v1507, %v1520
        %v1522 = vcombine.low %v1498, %v1514
        %v1523 = vcombine.high %v1498, %v1514
        %v1524 = vcombine.low %v1505, %v1521
        %v1525 = vcombine.high %v1505, %v1521
        %1526 = vrot.lane.b32.xlu0 %v1229, 64
        %v1527 = vpop.permute.xlu0 %1526
        %1528 = vrot.lane.b32.xlu0 %v1234, 64
        %v1529 = vpop.permute.xlu0 %1528
        %1530 = vrot.lane.b32.xlu0 %v1237, 64
        %v1531 = vpop.permute.xlu0 %1530
        %1532 = vrot.lane.b32.xlu0 %v1240, 64
        %v1533 = vpop.permute.xlu0 %1532
        %v1538 = vcombine.low %v1527, %v1531
        %v1539 = vcombine.high %v1527, %v1531
        %v1541 = vunpack.c.l.s4 1983009808
        %v1542 = vunpack.c.0.s8 %v1541
        %v1543 = vlaneseq
        %v1544 = vshrl.u32 %v1543, 7
        %v1545 = vsub.s32 %v1542, %v1544
        %v1546 = vrot.slane %v1538, %v1545
        %v1548 = vunpack.c.l.s4 1983009808
        %v1549 = vunpack.c.0.s8 %v1548
        %v1550 = vlaneseq
        %v1551 = vshrl.u32 %v1550, 7
        %v1552 = vsub.s32 %v1549, %v1551
        %v1553 = vrot.slane %v1539, %v1552
        %v1554 = vcombine.low %v1529, %v1533
        %v1555 = vcombine.high %v1529, %v1533
        %v1557 = vunpack.c.l.s4 1983009808
        %v1558 = vunpack.c.0.s8 %v1557
        %v1559 = vlaneseq
        %v1560 = vshrl.u32 %v1559, 7
        %v1561 = vsub.s32 %v1558, %v1560
        %v1562 = vrot.slane %v1554, %v1561
        %v1564 = vunpack.c.l.s4 1983009808
        %v1565 = vunpack.c.0.s8 %v1564
        %v1566 = vlaneseq
        %v1567 = vshrl.u32 %v1566, 7
        %v1568 = vsub.s32 %v1565, %v1567
        %v1569 = vrot.slane %v1555, %v1568
        %v1570 = vcombine.low %v1546, %v1562
        %v1571 = vcombine.high %v1546, %v1562
        %v1573 = vunpack.c.l.s4 1934713408
        %v1574 = vunpack.c.0.s8 %v1573
        %v1575 = vlaneseq
        %v1576 = vshrl.u32 %v1575, 7
        %v1577 = vsub.s32 %v1574, %v1576
        %v1578 = vrot.slane %v1570, %v1577
        %v1580 = vunpack.c.l.s4 1934713408
        %v1581 = vunpack.c.0.s8 %v1580
        %v1582 = vlaneseq
        %v1583 = vshrl.u32 %v1582, 7
        %v1584 = vsub.s32 %v1581, %v1583
        %v1585 = vrot.slane %v1571, %v1584
        %v1586 = vcombine.low %v1553, %v1569
        %v1587 = vcombine.high %v1553, %v1569
        %v1589 = vunpack.c.l.s4 1934713408
        %v1590 = vunpack.c.0.s8 %v1589
        %v1591 = vlaneseq
        %v1592 = vshrl.u32 %v1591, 7
        %v1593 = vsub.s32 %v1590, %v1592
        %v1594 = vrot.slane %v1586, %v1593
        %v1596 = vunpack.c.l.s4 1934713408
        %v1597 = vunpack.c.0.s8 %v1596
        %v1598 = vlaneseq
        %v1599 = vshrl.u32 %v1598, 7
        %v1600 = vsub.s32 %v1597, %v1599
        %v1601 = vrot.slane %v1587, %v1600
        %v1602 = vcombine.high %v1578, 0.0
        %v1603 = vcombine.high %v1585, 0.0
        %v1604 = vcombine.high %v1594, 0.0
        %v1605 = vcombine.high %v1601, 0.0
        %v1606 = vcombine.low %v1578, %v1585
        %v1608 = vunpack.c.l.s4 1983009808
        %v1609 = vunpack.c.0.s8 %v1608
        %v1610 = vlaneseq
        %v1611 = vshrl.u32 %v1610, 7
        %v1612 = vsub.s32 %v1609, %v1611
        %v1613 = vrot.slane %v1606, %v1612
        %v1614 = vcombine.low %v1602, %v1603
        %v1616 = vunpack.c.l.s4 1983009808
        %v1617 = vunpack.c.0.s8 %v1616
        %v1618 = vlaneseq
        %v1619 = vshrl.u32 %v1618, 7
        %v1620 = vsub.s32 %v1617, %v1619
        %v1621 = vrot.slane %v1614, %v1620
        %v1622 = vcombine.low %v1594, %v1601
        %v1624 = vunpack.c.l.s4 1983009808
        %v1625 = vunpack.c.0.s8 %v1624
        %v1626 = vlaneseq
        %v1627 = vshrl.u32 %v1626, 7
        %v1628 = vsub.s32 %v1625, %v1627
        %v1629 = vrot.slane %v1622, %v1628
        %v1630 = vcombine.low %v1604, %v1605
        %v1632 = vunpack.c.l.s4 1983009808
        %v1633 = vunpack.c.0.s8 %v1632
        %v1634 = vlaneseq
        %v1635 = vshrl.u32 %v1634, 7
        %v1636 = vsub.s32 %v1633, %v1635
        %v1637 = vrot.slane %v1630, %v1636
        %v1638 = vcombine.low %v1613, %v1621
        %v1639 = vcombine.high %v1613, %v1621
        %v1641 = vunpack.c.l.s4 1934713408
        %v1642 = vunpack.c.0.s8 %v1641
        %v1643 = vlaneseq
        %v1644 = vshrl.u32 %v1643, 7
        %v1645 = vsub.s32 %v1642, %v1644
        %v1646 = vrot.slane %v1638, %v1645
        %v1648 = vunpack.c.l.s4 1934713408
        %v1649 = vunpack.c.0.s8 %v1648
        %v1650 = vlaneseq
        %v1651 = vshrl.u32 %v1650, 7
        %v1652 = vsub.s32 %v1649, %v1651
        %v1653 = vrot.slane %v1639, %v1652
        %v1654 = vcombine.low %v1629, %v1637
        %v1655 = vcombine.high %v1629, %v1637
        %v1657 = vunpack.c.l.s4 1934713408
        %v1658 = vunpack.c.0.s8 %v1657
        %v1659 = vlaneseq
        %v1660 = vshrl.u32 %v1659, 7
        %v1661 = vsub.s32 %v1658, %v1660
        %v1662 = vrot.slane %v1654, %v1661
        %v1664 = vunpack.c.l.s4 1934713408
        %v1665 = vunpack.c.0.s8 %v1664
        %v1666 = vlaneseq
        %v1667 = vshrl.u32 %v1666, 7
        %v1668 = vsub.s32 %v1665, %v1667
        %v1669 = vrot.slane %v1655, %v1668
        %v1670 = vcombine.low %v1646, %v1662
        %v1671 = vcombine.high %v1646, %v1662
        %v1672 = vcombine.low %v1653, %v1669
        %v1673 = vcombine.high %v1653, %v1669
        %vm1674 = vcmask 64512
        %v1676 = vsel %vm1674, %v1374, 0
        %v1679 = vsel %vm1674, %v1522, 0
        %1681 = vmatprep.subr.mxu0 0.0
        %1682 = vmatpush1.xpose.msra.mxu0 %v1679
        %1683 = vmatprep.subr.mxu0 0.0
        %1684 = vmatpush1.xpose.msra.mxu0 0.0
        %1685 = vmatprep.subr.mxu0 0.0
        %1686 = vmatpush1.xpose.msra.mxu0 0.0
        %1687 = vmatprep.subr.mxu0 0.0
        %1688 = vmatpush1.xpose.msra.mxu0 0.0
        %1689 = vmatprep.subr.mxu0 0.0
        %1690 = vmatpush1.xpose.msra.mxu0 0.0
        %1691 = vmatprep.subr.mxu0 0.0
        %1692 = vmatpush1.xpose.msra.mxu0 0.0
        %1693 = vmatprep.subr.mxu0 0.0
        %1694 = vmatpush1.xpose.msra.mxu0 0.0
        %1695 = vmatprep.subr.mxu0 0.0
        %1696 = vmatpush1.xpose.msra.mxu0 0.0
        %1697 = vmatprep.subr.mxu0 0.0
        %1698 = vmatpush1.xpose.msra.mxu0 0.0
        %1699 = vmatprep.subr.mxu0 0.0
        %1700 = vmatpush1.xpose.msra.mxu0 0.0
        %1701 = vmatprep.subr.mxu0 0.0
        %1702 = vmatpush1.xpose.msra.mxu0 0.0
        %1703 = vmatprep.subr.mxu0 0.0
        %1704 = vmatpush1.xpose.msra.mxu0 0.0
        %1705 = vmatprep.subr.mxu0 0.0
        %1706 = vmatpush1.xpose.msra.mxu0 0.0
        %1707 = vmatprep.subr.mxu0 0.0
        %1708 = vmatpush1.xpose.msra.mxu0 0.0
        %1709 = vmatprep.subr.mxu0 0.0
        %1710 = vmatpush1.xpose.msra.mxu0 0.0
        %1711 = vmatprep.subr.mxu0 0.0
        %1712 = vmatpush1.xpose.msra.mxu0 0.0
        %1713 = vmatprep.subr.mxu0 0.0
        %1714 = vmatpush1.xpose.msra.mxu0 0.0
        %1715 = vmatprep.subr.mxu0 0.0
        %1716 = vmatpush1.xpose.msra.mxu0 0.0
        %1717 = vmatprep.subr.mxu0 0.0
        %1718 = vmatpush1.xpose.msra.mxu0 0.0
        %1719 = vmatprep.subr.mxu0 0.0
        %1720 = vmatpush1.xpose.msra.mxu0 0.0
        %1721 = vmatprep.subr.mxu0 0.0
        %1722 = vmatpush1.xpose.msra.mxu0 0.0
        %1723 = vmatprep.subr.mxu0 0.0
        %1724 = vmatpush1.xpose.msra.mxu0 0.0
        %1725 = vmatprep.subr.mxu0 0.0
        %1726 = vmatpush1.xpose.msra.mxu0 0.0
        %1727 = vmatprep.subr.mxu0 0.0
        %1728 = vmatpush1.xpose.msra.mxu0 0.0
        %1729 = vmatprep.subr.mxu0 0.0
        %1730 = vmatpush1.xpose.msra.mxu0 0.0
        %1731 = vmatprep.subr.mxu0 0.0
        %1732 = vmatpush1.xpose.msra.mxu0 0.0
        %1733 = vmatprep.subr.mxu0 0.0
        %1734 = vmatpush1.xpose.msra.mxu0 0.0
        %1735 = vmatprep.subr.mxu0 0.0
        %1736 = vmatpush1.xpose.msra.mxu0 0.0
        %1737 = vmatprep.subr.mxu0 0.0
        %1738 = vmatpush1.xpose.msra.mxu0 0.0
        %1739 = vmatprep.subr.mxu0 0.0
        %1740 = vmatpush1.xpose.msra.mxu0 0.0
        %1741 = vmatprep.subr.mxu0 0.0
        %1742 = vmatpush1.xpose.msra.mxu0 0.0
        %1743 = vmatprep.subr.mxu0 0.0
        %1744 = vmatpush1.xpose.msra.mxu0 0.0
        %1745 = vmatprep.mubr.f32.mxu0 0.0
        %1746 = vmatmul.mubr.f32.gmra.mrb[0].mxu0 %v1676
        %v1747 = vpop.f32.mrb[0].mxu0
        %v1748 = vadd.f32 0.0, %v1747
        %v1749 = vpop.f32.mrb[0].mxu0
        %1750 = vdwg.mxu0
        %v1752 = vsel %vm1674, %v1375, 0
        %v1755 = vsel %vm1674, %v1523, 0
        %1757 = vmatprep.subr.mxu0 0.0
        %1758 = vmatpush1.xpose.msra.mxu0 %v1755
        %1759 = vmatprep.subr.mxu0 0.0
        %1760 = vmatpush1.xpose.msra.mxu0 0.0
        %1761 = vmatprep.subr.mxu0 0.0
        %1762 = vmatpush1.xpose.msra.mxu0 0.0
        %1763 = vmatprep.subr.mxu0 0.0
        %1764 = vmatpush1.xpose.msra.mxu0 0.0
        %1765 = vmatprep.subr.mxu0 0.0
        %1766 = vmatpush1.xpose.msra.mxu0 0.0
        %1767 = vmatprep.subr.mxu0 0.0
        %1768 = vmatpush1.xpose.msra.mxu0 0.0
        %1769 = vmatprep.subr.mxu0 0.0
        %1770 = vmatpush1.xpose.msra.mxu0 0.0
        %1771 = vmatprep.subr.mxu0 0.0
        %1772 = vmatpush1.xpose.msra.mxu0 0.0
        %1773 = vmatprep.subr.mxu0 0.0
        %1774 = vmatpush1.xpose.msra.mxu0 0.0
        %1775 = vmatprep.subr.mxu0 0.0
        %1776 = vmatpush1.xpose.msra.mxu0 0.0
        %1777 = vmatprep.subr.mxu0 0.0
        %1778 = vmatpush1.xpose.msra.mxu0 0.0
        %1779 = vmatprep.subr.mxu0 0.0
        %1780 = vmatpush1.xpose.msra.mxu0 0.0
        %1781 = vmatprep.subr.mxu0 0.0
        %1782 = vmatpush1.xpose.msra.mxu0 0.0
        %1783 = vmatprep.subr.mxu0 0.0
        %1784 = vmatpush1.xpose.msra.mxu0 0.0
        %1785 = vmatprep.subr.mxu0 0.0
        %1786 = vmatpush1.xpose.msra.mxu0 0.0
        %1787 = vmatprep.subr.mxu0 0.0
        %1788 = vmatpush1.xpose.msra.mxu0 0.0
        %1789 = vmatprep.subr.mxu0 0.0
        %1790 = vmatpush1.xpose.msra.mxu0 0.0
        %1791 = vmatprep.subr.mxu0 0.0
        %1792 = vmatpush1.xpose.msra.mxu0 0.0
        %1793 = vmatprep.subr.mxu0 0.0
        %1794 = vmatpush1.xpose.msra.mxu0 0.0
        %1795 = vmatprep.subr.mxu0 0.0
        %1796 = vmatpush1.xpose.msra.mxu0 0.0
        %1797 = vmatprep.subr.mxu0 0.0
        %1798 = vmatpush1.xpose.msra.mxu0 0.0
        %1799 = vmatprep.subr.mxu0 0.0
        %1800 = vmatpush1.xpose.msra.mxu0 0.0
        %1801 = vmatprep.subr.mxu0 0.0
        %1802 = vmatpush1.xpose.msra.mxu0 0.0
        %1803 = vmatprep.subr.mxu0 0.0
        %1804 = vmatpush1.xpose.msra.mxu0 0.0
        %1805 = vmatprep.subr.mxu0 0.0
        %1806 = vmatpush1.xpose.msra.mxu0 0.0
        %1807 = vmatprep.subr.mxu0 0.0
        %1808 = vmatpush1.xpose.msra.mxu0 0.0
        %1809 = vmatprep.subr.mxu0 0.0
        %1810 = vmatpush1.xpose.msra.mxu0 0.0
        %1811 = vmatprep.subr.mxu0 0.0
        %1812 = vmatpush1.xpose.msra.mxu0 0.0
        %1813 = vmatprep.subr.mxu0 0.0
        %1814 = vmatpush1.xpose.msra.mxu0 0.0
        %1815 = vmatprep.subr.mxu0 0.0
        %1816 = vmatpush1.xpose.msra.mxu0 0.0
        %1817 = vmatprep.subr.mxu0 0.0
        %1818 = vmatpush1.xpose.msra.mxu0 0.0
        %1819 = vmatprep.subr.mxu0 0.0
        %1820 = vmatpush1.xpose.msra.mxu0 0.0
        %1821 = vmatprep.mubr.f32.mxu0 0.0
        %1822 = vmatmul.mubr.f32.gmra.mrb[0].mxu0 %v1752
        %v1823 = vpop.f32.mrb[0].mxu0
        %v1824 = vadd.f32 0.0, %v1823
        %v1825 = vpop.f32.mrb[0].mxu0
        %1826 = vdwg.mxu0
        %v1828 = vsel %vm1674, %v1376, 0
        %v1831 = vsel %vm1674, %v1524, 0
        %1833 = vmatprep.subr.mxu0 0.0
        %1834 = vmatpush1.xpose.msra.mxu0 %v1831
        %1835 = vmatprep.subr.mxu0 0.0
        %1836 = vmatpush1.xpose.msra.mxu0 0.0
        %1837 = vmatprep.subr.mxu0 0.0
        %1838 = vmatpush1.xpose.msra.mxu0 0.0
        %1839 = vmatprep.subr.mxu0 0.0
        %1840 = vmatpush1.xpose.msra.mxu0 0.0
        %1841 = vmatprep.subr.mxu0 0.0
        %1842 = vmatpush1.xpose.msra.mxu0 0.0
        %1843 = vmatprep.subr.mxu0 0.0
        %1844 = vmatpush1.xpose.msra.mxu0 0.0
        %1845 = vmatprep.subr.mxu0 0.0
        %1846 = vmatpush1.xpose.msra.mxu0 0.0
        %1847 = vmatprep.subr.mxu0 0.0
        %1848 = vmatpush1.xpose.msra.mxu0 0.0
        %1849 = vmatprep.subr.mxu0 0.0
        %1850 = vmatpush1.xpose.msra.mxu0 0.0
        %1851 = vmatprep.subr.mxu0 0.0
        %1852 = vmatpush1.xpose.msra.mxu0 0.0
        %1853 = vmatprep.subr.mxu0 0.0
        %1854 = vmatpush1.xpose.msra.mxu0 0.0
        %1855 = vmatprep.subr.mxu0 0.0
        %1856 = vmatpush1.xpose.msra.mxu0 0.0
        %1857 = vmatprep.subr.mxu0 0.0
        %1858 = vmatpush1.xpose.msra.mxu0 0.0
        %1859 = vmatprep.subr.mxu0 0.0
        %1860 = vmatpush1.xpose.msra.mxu0 0.0
        %1861 = vmatprep.subr.mxu0 0.0
        %1862 = vmatpush1.xpose.msra.mxu0 0.0
        %1863 = vmatprep.subr.mxu0 0.0
        %1864 = vmatpush1.xpose.msra.mxu0 0.0
        %1865 = vmatprep.subr.mxu0 0.0
        %1866 = vmatpush1.xpose.msra.mxu0 0.0
        %1867 = vmatprep.subr.mxu0 0.0
        %1868 = vmatpush1.xpose.msra.mxu0 0.0
        %1869 = vmatprep.subr.mxu0 0.0
        %1870 = vmatpush1.xpose.msra.mxu0 0.0
        %1871 = vmatprep.subr.mxu0 0.0
        %1872 = vmatpush1.xpose.msra.mxu0 0.0
        %1873 = vmatprep.subr.mxu0 0.0
        %1874 = vmatpush1.xpose.msra.mxu0 0.0
        %1875 = vmatprep.subr.mxu0 0.0
        %1876 = vmatpush1.xpose.msra.mxu0 0.0
        %1877 = vmatprep.subr.mxu0 0.0
        %1878 = vmatpush1.xpose.msra.mxu0 0.0
        %1879 = vmatprep.subr.mxu0 0.0
        %1880 = vmatpush1.xpose.msra.mxu0 0.0
        %1881 = vmatprep.subr.mxu0 0.0
        %1882 = vmatpush1.xpose.msra.mxu0 0.0
        %1883 = vmatprep.subr.mxu0 0.0
        %1884 = vmatpush1.xpose.msra.mxu0 0.0
        %1885 = vmatprep.subr.mxu0 0.0
        %1886 = vmatpush1.xpose.msra.mxu0 0.0
        %1887 = vmatprep.subr.mxu0 0.0
        %1888 = vmatpush1.xpose.msra.mxu0 0.0
        %1889 = vmatprep.subr.mxu0 0.0
        %1890 = vmatpush1.xpose.msra.mxu0 0.0
        %1891 = vmatprep.subr.mxu0 0.0
        %1892 = vmatpush1.xpose.msra.mxu0 0.0
        %1893 = vmatprep.subr.mxu0 0.0
        %1894 = vmatpush1.xpose.msra.mxu0 0.0
        %1895 = vmatprep.subr.mxu0 0.0
        %1896 = vmatpush1.xpose.msra.mxu0 0.0
        %1897 = vmatprep.mubr.f32.mxu0 0.0
        %1898 = vmatmul.mubr.f32.gmra.mrb[0].mxu0 %v1828
        %v1899 = vpop.f32.mrb[0].mxu0
        %v1900 = vadd.f32 0.0, %v1899
        %v1901 = vpop.f32.mrb[0].mxu0
        %1902 = vdwg.mxu0
        %v1904 = vsel %vm1674, %v1377, 0
        %v1907 = vsel %vm1674, %v1525, 0
        %1909 = vmatprep.subr.mxu0 0.0
        %1910 = vmatpush1.xpose.msra.mxu0 %v1907
        %1911 = vmatprep.subr.mxu0 0.0
        %1912 = vmatpush1.xpose.msra.mxu0 0.0
        %1913 = vmatprep.subr.mxu0 0.0
        %1914 = vmatpush1.xpose.msra.mxu0 0.0
        %1915 = vmatprep.subr.mxu0 0.0
        %1916 = vmatpush1.xpose.msra.mxu0 0.0
        %1917 = vmatprep.subr.mxu0 0.0
        %1918 = vmatpush1.xpose.msra.mxu0 0.0
        %1919 = vmatprep.subr.mxu0 0.0
        %1920 = vmatpush1.xpose.msra.mxu0 0.0
        %1921 = vmatprep.subr.mxu0 0.0
        %1922 = vmatpush1.xpose.msra.mxu0 0.0
        %1923 = vmatprep.subr.mxu0 0.0
        %1924 = vmatpush1.xpose.msra.mxu0 0.0
        %1925 = vmatprep.subr.mxu0 0.0
        %1926 = vmatpush1.xpose.msra.mxu0 0.0
        %1927 = vmatprep.subr.mxu0 0.0
        %1928 = vmatpush1.xpose.msra.mxu0 0.0
        %1929 = vmatprep.subr.mxu0 0.0
        %1930 = vmatpush1.xpose.msra.mxu0 0.0
        %1931 = vmatprep.subr.mxu0 0.0
        %1932 = vmatpush1.xpose.msra.mxu0 0.0
        %1933 = vmatprep.subr.mxu0 0.0
        %1934 = vmatpush1.xpose.msra.mxu0 0.0
        %1935 = vmatprep.subr.mxu0 0.0
        %1936 = vmatpush1.xpose.msra.mxu0 0.0
        %1937 = vmatprep.subr.mxu0 0.0
        %1938 = vmatpush1.xpose.msra.mxu0 0.0
        %1939 = vmatprep.subr.mxu0 0.0
        %1940 = vmatpush1.xpose.msra.mxu0 0.0
        %1941 = vmatprep.subr.mxu0 0.0
        %1942 = vmatpush1.xpose.msra.mxu0 0.0
        %1943 = vmatprep.subr.mxu0 0.0
        %1944 = vmatpush1.xpose.msra.mxu0 0.0
        %1945 = vmatprep.subr.mxu0 0.0
        %1946 = vmatpush1.xpose.msra.mxu0 0.0
        %1947 = vmatprep.subr.mxu0 0.0
        %1948 = vmatpush1.xpose.msra.mxu0 0.0
        %1949 = vmatprep.subr.mxu0 0.0
        %1950 = vmatpush1.xpose.msra.mxu0 0.0
        %1951 = vmatprep.subr.mxu0 0.0
        %1952 = vmatpush1.xpose.msra.mxu0 0.0
        %1953 = vmatprep.subr.mxu0 0.0
        %1954 = vmatpush1.xpose.msra.mxu0 0.0
        %1955 = vmatprep.subr.mxu0 0.0
        %1956 = vmatpush1.xpose.msra.mxu0 0.0
        %1957 = vmatprep.subr.mxu0 0.0
        %1958 = vmatpush1.xpose.msra.mxu0 0.0
        %1959 = vmatprep.subr.mxu0 0.0
        %1960 = vmatpush1.xpose.msra.mxu0 0.0
        %1961 = vmatprep.subr.mxu0 0.0
        %1962 = vmatpush1.xpose.msra.mxu0 0.0
        %1963 = vmatprep.subr.mxu0 0.0
        %1964 = vmatpush1.xpose.msra.mxu0 0.0
        %1965 = vmatprep.subr.mxu0 0.0
        %1966 = vmatpush1.xpose.msra.mxu0 0.0
        %1967 = vmatprep.subr.mxu0 0.0
        %1968 = vmatpush1.xpose.msra.mxu0 0.0
        %1969 = vmatprep.subr.mxu0 0.0
        %1970 = vmatpush1.xpose.msra.mxu0 0.0
        %1971 = vmatprep.subr.mxu0 0.0
        %1972 = vmatpush1.xpose.msra.mxu0 0.0
        %1973 = vmatprep.mubr.f32.mxu0 0.0
        %1974 = vmatmul.mubr.f32.gmra.mrb[0].mxu0 %v1904
        %v1975 = vpop.f32.mrb[0].mxu0
        %v1976 = vadd.f32 0.0, %v1975
        %v1977 = vpop.f32.mrb[0].mxu0
        %1978 = vdwg.mxu0
        %v1979 = vmul.f32 %v1748, 0.35355338
        %v1980 = vmul.f32 %v1824, 0.35355338
        %v1981 = vmul.f32 %v1900, 0.35355338
        %v1982 = vmul.f32 %v1976, 0.35355338
        %v1983 = vsel %vm1674, %v1979, -inf
        %1984 = vmax.xlane.f32.xlu0 %v1983
        %v1985 = vpop.xlane.xlu0 %1984
        %v1986 = vsel %vm1674, %v1980, -inf
        %1987 = vmax.xlane.f32.xlu0 %v1986
        %v1988 = vpop.xlane.xlu0 %1987
        %v1989 = vsel %vm1674, %v1981, -inf
        %1990 = vmax.xlane.f32.xlu0 %v1989
        %v1991 = vpop.xlane.xlu0 %1990
        %v1992 = vsel %vm1674, %v1982, -inf
        %1993 = vmax.xlane.f32.xlu0 %v1992
        %v1994 = vpop.xlane.xlu0 %1993
        %v1995 = vsub.f32 %v1979, %v1985
        %v1996 = vsub.f32 %v1980, %v1988
        %v1997 = vsub.f32 %v1981, %v1991
        %v1998 = vsub.f32 %v1982, %v1994
        %v1999 = vmul.f32 %v1995, 1.442695
        %v2000 = vpow.pop %v1999
        %v2001 = vmul.f32 %v1996, 1.442695
        %v2002 = vpow.pop %v2001
        %v2003 = vmul.f32 %v1997, 1.442695
        %v2004 = vpow.pop %v2003
        %v2005 = vmul.f32 %v1998, 1.442695
        %v2006 = vpow.pop %v2005
        %v2007 = vsel %vm1674, %v2000, 0.0
        %2008 = vadd.xlane.f32.xlu0 %v2007
        %v2009 = vpop.xlane.xlu0 %2008
        %v2010 = vsel %vm1674, %v2002, 0.0
        %2011 = vadd.xlane.f32.xlu0 %v2010
        %v2012 = vpop.xlane.xlu0 %2011
        %v2013 = vsel %vm1674, %v2004, 0.0
        %2014 = vadd.xlane.f32.xlu0 %v2013
        %v2015 = vpop.xlane.xlu0 %2014
        %v2016 = vsel %vm1674, %v2006, 0.0
        %2017 = vadd.xlane.f32.xlu0 %v2016
        %v2018 = vpop.xlane.xlu0 %2017
        %v2019 = vrcp.pop %v2009
        %v2020 = vrcp.pop %v2012
        %v2021 = vrcp.pop %v2015
        %v2022 = vrcp.pop %v2018
        %v2023 = vmul.f32 %v2000, %v2019
        %v2024 = vmul.f32 %v2002, %v2020
        %v2025 = vmul.f32 %v2004, %v2021
        %v2026 = vmul.f32 %v2006, %v2022
        %v2028 = vsel %vm1674, %v2023, 0
        %2030 = vmatprep.subr.mxu0 0.0
        %2031 = vmatpush1.msra.mxu0 %v1670
        %2032 = vmatprep.subr.mxu0 0.0
        %2033 = vmatpush1.msra.mxu0 0.0
        %2034 = vmatprep.subr.mxu0 0.0
        %2035 = vmatpush1.msra.mxu0 0.0
        %2036 = vmatprep.subr.mxu0 0.0
        %2037 = vmatpush1.msra.mxu0 0.0
        %2038 = vmatprep.subr.mxu0 0.0
        %2039 = vmatpush1.msra.mxu0 0.0
        %2040 = vmatprep.subr.mxu0 0.0
        %2041 = vmatpush1.msra.mxu0 0.0
        %2042 = vmatprep.subr.mxu0 0.0
        %2043 = vmatpush1.msra.mxu0 0.0
        %2044 = vmatprep.subr.mxu0 0.0
        %2045 = vmatpush1.msra.mxu0 0.0
        %2046 = vmatprep.subr.mxu0 0.0
        %2047 = vmatpush1.msra.mxu0 0.0
        %2048 = vmatprep.subr.mxu0 0.0
        %2049 = vmatpush1.msra.mxu0 0.0
        %2050 = vmatprep.subr.mxu0 0.0
        %2051 = vmatpush1.msra.mxu0 0.0
        %2052 = vmatprep.subr.mxu0 0.0
        %2053 = vmatpush1.msra.mxu0 0.0
        %2054 = vmatprep.subr.mxu0 0.0
        %2055 = vmatpush1.msra.mxu0 0.0
        %2056 = vmatprep.subr.mxu0 0.0
        %2057 = vmatpush1.msra.mxu0 0.0
        %2058 = vmatprep.subr.mxu0 0.0
        %2059 = vmatpush1.msra.mxu0 0.0
        %2060 = vmatprep.subr.mxu0 0.0
        %2061 = vmatpush1.msra.mxu0 0.0
        %2062 = vmatprep.subr.mxu0 0.0
        %2063 = vmatpush1.msra.mxu0 0.0
        %2064 = vmatprep.subr.mxu0 0.0
        %2065 = vmatpush1.msra.mxu0 0.0
        %2066 = vmatprep.subr.mxu0 0.0
        %2067 = vmatpush1.msra.mxu0 0.0
        %2068 = vmatprep.subr.mxu0 0.0
        %2069 = vmatpush1.msra.mxu0 0.0
        %2070 = vmatprep.subr.mxu0 0.0
        %2071 = vmatpush1.msra.mxu0 0.0
        %2072 = vmatprep.subr.mxu0 0.0
        %2073 = vmatpush1.msra.mxu0 0.0
        %2074 = vmatprep.subr.mxu0 0.0
        %2075 = vmatpush1.msra.mxu0 0.0
        %2076 = vmatprep.subr.mxu0 0.0
        %2077 = vmatpush1.msra.mxu0 0.0
        %2078 = vmatprep.subr.mxu0 0.0
        %2079 = vmatpush1.msra.mxu0 0.0
        %2080 = vmatprep.subr.mxu0 0.0
        %2081 = vmatpush1.msra.mxu0 0.0
        %2082 = vmatprep.subr.mxu0 0.0
        %2083 = vmatpush1.msra.mxu0 0.0
        %2084 = vmatprep.subr.mxu0 0.0
        %2085 = vmatpush1.msra.mxu0 0.0
        %2086 = vmatprep.subr.mxu0 0.0
        %2087 = vmatpush1.msra.mxu0 0.0
        %2088 = vmatprep.subr.mxu0 0.0
        %2089 = vmatpush1.msra.mxu0 0.0
        %2090 = vmatprep.subr.mxu0 0.0
        %2091 = vmatpush1.msra.mxu0 0.0
        %2092 = vmatprep.subr.mxu0 0.0
        %2093 = vmatpush1.msra.mxu0 0.0
        %2094 = vmatprep.mubr.f32.mxu0 0.0
        %2095 = vmatmul.mubr.f32.gmra.mrb[0].mxu0 %v2028
        %v2096 = vpop.f32.mrb[0].mxu0
        %v2097 = vadd.f32 0.0, %v2096
        %v2098 = vpop.f32.mrb[0].mxu0
        %2099 = vdwg.mxu0
        %v2101 = vsel %vm1674, %v2024, 0
        %2103 = vmatprep.subr.mxu0 0.0
        %2104 = vmatpush1.msra.mxu0 %v1671
        %2105 = vmatprep.subr.mxu0 0.0
        %2106 = vmatpush1.msra.mxu0 0.0
        %2107 = vmatprep.subr.mxu0 0.0
        %2108 = vmatpush1.msra.mxu0 0.0
        %2109 = vmatprep.subr.mxu0 0.0
        %2110 = vmatpush1.msra.mxu0 0.0
        %2111 = vmatprep.subr.mxu0 0.0
        %2112 = vmatpush1.msra.mxu0 0.0
        %2113 = vmatprep.subr.mxu0 0.0
        %2114 = vmatpush1.msra.mxu0 0.0
        %2115 = vmatprep.subr.mxu0 0.0
        %2116 = vmatpush1.msra.mxu0 0.0
        %2117 = vmatprep.subr.mxu0 0.0
        %2118 = vmatpush1.msra.mxu0 0.0
        %2119 = vmatprep.subr.mxu0 0.0
        %2120 = vmatpush1.msra.mxu0 0.0
        %2121 = vmatprep.subr.mxu0 0.0
        %2122 = vmatpush1.msra.mxu0 0.0
        %2123 = vmatprep.subr.mxu0 0.0
        %2124 = vmatpush1.msra.mxu0 0.0
        %2125 = vmatprep.subr.mxu0 0.0
        %2126 = vmatpush1.msra.mxu0 0.0
        %2127 = vmatprep.subr.mxu0 0.0
        %2128 = vmatpush1.msra.mxu0 0.0
        %2129 = vmatprep.subr.mxu0 0.0
        %2130 = vmatpush1.msra.mxu0 0.0
        %2131 = vmatprep.subr.mxu0 0.0
        %2132 = vmatpush1.msra.mxu0 0.0
        %2133 = vmatprep.subr.mxu0 0.0
        %2134 = vmatpush1.msra.mxu0 0.0
        %2135 = vmatprep.subr.mxu0 0.0
        %2136 = vmatpush1.msra.mxu0 0.0
        %2137 = vmatprep.subr.mxu0 0.0
        %2138 = vmatpush1.msra.mxu0 0.0
        %2139 = vmatprep.subr.mxu0 0.0
        %2140 = vmatpush1.msra.mxu0 0.0
        %2141 = vmatprep.subr.mxu0 0.0
        %2142 = vmatpush1.msra.mxu0 0.0
        %2143 = vmatprep.subr.mxu0 0.0
        %2144 = vmatpush1.msra.mxu0 0.0
        %2145 = vmatprep.subr.mxu0 0.0
        %2146 = vmatpush1.msra.mxu0 0.0
        %2147 = vmatprep.subr.mxu0 0.0
        %2148 = vmatpush1.msra.mxu0 0.0
        %2149 = vmatprep.subr.mxu0 0.0
        %2150 = vmatpush1.msra.mxu0 0.0
        %2151 = vmatprep.subr.mxu0 0.0
        %2152 = vmatpush1.msra.mxu0 0.0
        %2153 = vmatprep.subr.mxu0 0.0
        %2154 = vmatpush1.msra.mxu0 0.0
        %2155 = vmatprep.subr.mxu0 0.0
        %2156 = vmatpush1.msra.mxu0 0.0
        %2157 = vmatprep.subr.mxu0 0.0
        %2158 = vmatpush1.msra.mxu0 0.0
        %2159 = vmatprep.subr.mxu0 0.0
        %2160 = vmatpush1.msra.mxu0 0.0
        %2161 = vmatprep.subr.mxu0 0.0
        %2162 = vmatpush1.msra.mxu0 0.0
        %2163 = vmatprep.subr.mxu0 0.0
        %2164 = vmatpush1.msra.mxu0 0.0
        %2165 = vmatprep.subr.mxu0 0.0
        %2166 = vmatpush1.msra.mxu0 0.0
        %2167 = vmatprep.mubr.f32.mxu0 0.0
        %2168 = vmatmul.mubr.f32.gmra.mrb[0].mxu0 %v2101
        %v2169 = vpop.f32.mrb[0].mxu0
        %v2170 = vadd.f32 0.0, %v2169
        %v2171 = vpop.f32.mrb[0].mxu0
        %2172 = vdwg.mxu0
        %v2174 = vsel %vm1674, %v2025, 0
        %2176 = vmatprep.subr.mxu0 0.0
        %2177 = vmatpush1.msra.mxu0 %v1672
        %2178 = vmatprep.subr.mxu0 0.0
        %2179 = vmatpush1.msra.mxu0 0.0
        %2180 = vmatprep.subr.mxu0 0.0
        %2181 = vmatpush1.msra.mxu0 0.0
        %2182 = vmatprep.subr.mxu0 0.0
        %2183 = vmatpush1.msra.mxu0 0.0
        %2184 = vmatprep.subr.mxu0 0.0
        %2185 = vmatpush1.msra.mxu0 0.0
        %2186 = vmatprep.subr.mxu0 0.0
        %2187 = vmatpush1.msra.mxu0 0.0
        %2188 = vmatprep.subr.mxu0 0.0
        %2189 = vmatpush1.msra.mxu0 0.0
        %2190 = vmatprep.subr.mxu0 0.0
        %2191 = vmatpush1.msra.mxu0 0.0
        %2192 = vmatprep.subr.mxu0 0.0
        %2193 = vmatpush1.msra.mxu0 0.0
        %2194 = vmatprep.subr.mxu0 0.0
        %2195 = vmatpush1.msra.mxu0 0.0
        %2196 = vmatprep.subr.mxu0 0.0
        %2197 = vmatpush1.msra.mxu0 0.0
        %2198 = vmatprep.subr.mxu0 0.0
        %2199 = vmatpush1.msra.mxu0 0.0
        %2200 = vmatprep.subr.mxu0 0.0
        %2201 = vmatpush1.msra.mxu0 0.0
        %2202 = vmatprep.subr.mxu0 0.0
        %2203 = vmatpush1.msra.mxu0 0.0
        %2204 = vmatprep.subr.mxu0 0.0
        %2205 = vmatpush1.msra.mxu0 0.0
        %2206 = vmatprep.subr.mxu0 0.0
        %2207 = vmatpush1.msra.mxu0 0.0
        %2208 = vmatprep.subr.mxu0 0.0
        %2209 = vmatpush1.msra.mxu0 0.0
        %2210 = vmatprep.subr.mxu0 0.0
        %2211 = vmatpush1.msra.mxu0 0.0
        %2212 = vmatprep.subr.mxu0 0.0
        %2213 = vmatpush1.msra.mxu0 0.0
        %2214 = vmatprep.subr.mxu0 0.0
        %2215 = vmatpush1.msra.mxu0 0.0
        %2216 = vmatprep.subr.mxu0 0.0
        %2217 = vmatpush1.msra.mxu0 0.0
        %2218 = vmatprep.subr.mxu0 0.0
        %2219 = vmatpush1.msra.mxu0 0.0
        %2220 = vmatprep.subr.mxu0 0.0
        %2221 = vmatpush1.msra.mxu0 0.0
        %2222 = vmatprep.subr.mxu0 0.0
        %2223 = vmatpush1.msra.mxu0 0.0
        %2224 = vmatprep.subr.mxu0 0.0
        %2225 = vmatpush1.msra.mxu0 0.0
        %2226 = vmatprep.subr.mxu0 0.0
        %2227 = vmatpush1.msra.mxu0 0.0
        %2228 = vmatprep.subr.mxu0 0.0
        %2229 = vmatpush1.msra.mxu0 0.0
        %2230 = vmatprep.subr.mxu0 0.0
        %2231 = vmatpush1.msra.mxu0 0.0
        %2232 = vmatprep.subr.mxu0 0.0
        %2233 = vmatpush1.msra.mxu0 0.0
        %2234 = vmatprep.subr.mxu0 0.0
        %2235 = vmatpush1.msra.mxu0 0.0
        %2236 = vmatprep.subr.mxu0 0.0
        %2237 = vmatpush1.msra.mxu0 0.0
        %2238 = vmatprep.subr.mxu0 0.0
        %2239 = vmatpush1.msra.mxu0 0.0
        %2240 = vmatprep.mubr.f32.mxu0 0.0
        %2241 = vmatmul.mubr.f32.gmra.mrb[0].mxu0 %v2174
        %v2242 = vpop.f32.mrb[0].mxu0
        %v2243 = vadd.f32 0.0, %v2242
        %v2244 = vpop.f32.mrb[0].mxu0
        %2245 = vdwg.mxu0
        %v2247 = vsel %vm1674, %v2026, 0
        %2249 = vmatprep.subr.mxu0 0.0
        %2250 = vmatpush1.msra.mxu0 %v1673
        %2251 = vmatprep.subr.mxu0 0.0
        %2252 = vmatpush1.msra.mxu0 0.0
        %2253 = vmatprep.subr.mxu0 0.0
        %2254 = vmatpush1.msra.mxu0 0.0
        %2255 = vmatprep.subr.mxu0 0.0
        %2256 = vmatpush1.msra.mxu0 0.0
        %2257 = vmatprep.subr.mxu0 0.0
        %2258 = vmatpush1.msra.mxu0 0.0
        %2259 = vmatprep.subr.mxu0 0.0
        %2260 = vmatpush1.msra.mxu0 0.0
        %2261 = vmatprep.subr.mxu0 0.0
        %2262 = vmatpush1.msra.mxu0 0.0
        %2263 = vmatprep.subr.mxu0 0.0
        %2264 = vmatpush1.msra.mxu0 0.0
        %2265 = vmatprep.subr.mxu0 0.0
        %2266 = vmatpush1.msra.mxu0 0.0
        %2267 = vmatprep.subr.mxu0 0.0
        %2268 = vmatpush1.msra.mxu0 0.0
        %2269 = vmatprep.subr.mxu0 0.0
        %2270 = vmatpush1.msra.mxu0 0.0
        %2271 = vmatprep.subr.mxu0 0.0
        %2272 = vmatpush1.msra.mxu0 0.0
        %2273 = vmatprep.subr.mxu0 0.0
        %2274 = vmatpush1.msra.mxu0 0.0
        %2275 = vmatprep.subr.mxu0 0.0
        %2276 = vmatpush1.msra.mxu0 0.0
        %2277 = vmatprep.subr.mxu0 0.0
        %2278 = vmatpush1.msra.mxu0 0.0
        %2279 = vmatprep.subr.mxu0 0.0
        %2280 = vmatpush1.msra.mxu0 0.0
        %2281 = vmatprep.subr.mxu0 0.0
        %2282 = vmatpush1.msra.mxu0 0.0
        %2283 = vmatprep.subr.mxu0 0.0
        %2284 = vmatpush1.msra.mxu0 0.0
        %2285 = vmatprep.subr.mxu0 0.0
        %2286 = vmatpush1.msra.mxu0 0.0
        %2287 = vmatprep.subr.mxu0 0.0
        %2288 = vmatpush1.msra.mxu0 0.0
        %2289 = vmatprep.subr.mxu0 0.0
        %2290 = vmatpush1.msra.mxu0 0.0
        %2291 = vmatprep.subr.mxu0 0.0
        %2292 = vmatpush1.msra.mxu0 0.0
        %2293 = vmatprep.subr.mxu0 0.0
        %2294 = vmatpush1.msra.mxu0 0.0
        %2295 = vmatprep.subr.mxu0 0.0
        %2296 = vmatpush1.msra.mxu0 0.0
        %2297 = vmatprep.subr.mxu0 0.0
        %2298 = vmatpush1.msra.mxu0 0.0
        %2299 = vmatprep.subr.mxu0 0.0
        %2300 = vmatpush1.msra.mxu0 0.0
        %2301 = vmatprep.subr.mxu0 0.0
        %2302 = vmatpush1.msra.mxu0 0.0
        %2303 = vmatprep.subr.mxu0 0.0
        %2304 = vmatpush1.msra.mxu0 0.0
        %2305 = vmatprep.subr.mxu0 0.0
        %2306 = vmatpush1.msra.mxu0 0.0
        %2307 = vmatprep.subr.mxu0 0.0
        %2308 = vmatpush1.msra.mxu0 0.0
        %2309 = vmatprep.subr.mxu0 0.0
        %2310 = vmatpush1.msra.mxu0 0.0
        %2311 = vmatprep.subr.mxu0 0.0
        %2312 = vmatpush1.msra.mxu0 0.0
        %2313 = vmatprep.mubr.f32.mxu0 0.0
        %2314 = vmatmul.mubr.f32.gmra.mrb[0].mxu0 %v2247
        %v2315 = vpop.f32.mrb[0].mxu0
        %v2316 = vadd.f32 0.0, %v2315
        %v2317 = vpop.f32.mrb[0].mxu0
        %2318 = vdwg.mxu0
        %v2319 = vcombine.low %v2097, %v2243
        %v2320 = vcombine.high %v2097, %v2243
        %v2322 = vunpack.c.l.s4 1983009808
        %v2323 = vunpack.c.0.s8 %v2322
        %v2324 = vlaneseq
        %v2325 = vshrl.u32 %v2324, 7
        %v2326 = vsub.s32 %v2323, %v2325
        %v2327 = vrot.slane %v2319, %v2326
        %v2329 = vunpack.c.l.s4 1983009808
        %v2330 = vunpack.c.0.s8 %v2329
        %v2331 = vlaneseq
        %v2332 = vshrl.u32 %v2331, 7
        %v2333 = vsub.s32 %v2330, %v2332
        %v2334 = vrot.slane %v2320, %v2333
        %v2335 = vcombine.low %v2170, %v2316
        %v2336 = vcombine.high %v2170, %v2316
        %v2338 = vunpack.c.l.s4 1983009808
        %v2339 = vunpack.c.0.s8 %v2338
        %v2340 = vlaneseq
        %v2341 = vshrl.u32 %v2340, 7
        %v2342 = vsub.s32 %v2339, %v2341
        %v2343 = vrot.slane %v2335, %v2342
        %v2345 = vunpack.c.l.s4 1983009808
        %v2346 = vunpack.c.0.s8 %v2345
        %v2347 = vlaneseq
        %v2348 = vshrl.u32 %v2347, 7
        %v2349 = vsub.s32 %v2346, %v2348
        %v2350 = vrot.slane %v2336, %v2349
        %v2351 = vcombine.low %v2327, %v2343
        %v2352 = vcombine.high %v2327, %v2343
        %v2354 = vunpack.c.l.s4 1934713408
        %v2355 = vunpack.c.0.s8 %v2354
        %v2356 = vlaneseq
        %v2357 = vshrl.u32 %v2356, 7
        %v2358 = vsub.s32 %v2355, %v2357
        %v2359 = vrot.slane %v2351, %v2358
        %v2361 = vunpack.c.l.s4 1934713408
        %v2362 = vunpack.c.0.s8 %v2361
        %v2363 = vlaneseq
        %v2364 = vshrl.u32 %v2363, 7
        %v2365 = vsub.s32 %v2362, %v2364
        %v2366 = vrot.slane %v2352, %v2365
        %v2367 = vcombine.low %v2334, %v2350
        %v2368 = vcombine.high %v2334, %v2350
        %v2370 = vunpack.c.l.s4 1934713408
        %v2371 = vunpack.c.0.s8 %v2370
        %v2372 = vlaneseq
        %v2373 = vshrl.u32 %v2372, 7
        %v2374 = vsub.s32 %v2371, %v2373
        %v2375 = vrot.slane %v2367, %v2374
        %v2377 = vunpack.c.l.s4 1934713408
        %v2378 = vunpack.c.0.s8 %v2377
        %v2379 = vlaneseq
        %v2380 = vshrl.u32 %v2379, 7
        %v2381 = vsub.s32 %v2378, %v2380
        %v2382 = vrot.slane %v2368, %v2381
        %v2383 = vcombine.high %v2359, 0.0
        %v2384 = vcombine.high %v2366, 0.0
        %v2385 = vcombine.high %v2375, 0.0
        %v2386 = vcombine.high %v2382, 0.0
        %v2387 = vcombine.low %v2359, %v2366
        %v2389 = vunpack.c.l.s4 1983009808
        %v2390 = vunpack.c.0.s8 %v2389
        %v2391 = vlaneseq
        %v2392 = vshrl.u32 %v2391, 7
        %v2393 = vsub.s32 %v2390, %v2392
        %v2394 = vrot.slane %v2387, %v2393
        %v2395 = vcombine.low %v2383, %v2384
        %v2397 = vunpack.c.l.s4 1983009808
        %v2398 = vunpack.c.0.s8 %v2397
        %v2399 = vlaneseq
        %v2400 = vshrl.u32 %v2399, 7
        %v2401 = vsub.s32 %v2398, %v2400
        %v2402 = vrot.slane %v2395, %v2401
        %v2403 = vcombine.low %v2375, %v2382
        %v2405 = vunpack.c.l.s4 1983009808
        %v2406 = vunpack.c.0.s8 %v2405
        %v2407 = vlaneseq
        %v2408 = vshrl.u32 %v2407, 7
        %v2409 = vsub.s32 %v2406, %v2408
        %v2410 = vrot.slane %v2403, %v2409
        %v2411 = vcombine.low %v2385, %v2386
        %v2413 = vunpack.c.l.s4 1983009808
        %v2414 = vunpack.c.0.s8 %v2413
        %v2415 = vlaneseq
        %v2416 = vshrl.u32 %v2415, 7
        %v2417 = vsub.s32 %v2414, %v2416
        %v2418 = vrot.slane %v2411, %v2417
        %v2419 = vcombine.low %v2394, %v2402
        %v2420 = vcombine.high %v2394, %v2402
        %v2422 = vunpack.c.l.s4 1934713408
        %v2423 = vunpack.c.0.s8 %v2422
        %v2424 = vlaneseq
        %v2425 = vshrl.u32 %v2424, 7
        %v2426 = vsub.s32 %v2423, %v2425
        %v2427 = vrot.slane %v2419, %v2426
        %v2429 = vunpack.c.l.s4 1934713408
        %v2430 = vunpack.c.0.s8 %v2429
        %v2431 = vlaneseq
        %v2432 = vshrl.u32 %v2431, 7
        %v2433 = vsub.s32 %v2430, %v2432
        %v2434 = vrot.slane %v2420, %v2433
        %v2435 = vcombine.low %v2410, %v2418
        %v2436 = vcombine.high %v2410, %v2418
        %v2438 = vunpack.c.l.s4 1934713408
        %v2439 = vunpack.c.0.s8 %v2438
        %v2440 = vlaneseq
        %v2441 = vshrl.u32 %v2440, 7
        %v2442 = vsub.s32 %v2439, %v2441
        %v2443 = vrot.slane %v2435, %v2442
        %v2445 = vunpack.c.l.s4 1934713408
        %v2446 = vunpack.c.0.s8 %v2445
        %v2447 = vlaneseq
        %v2448 = vshrl.u32 %v2447, 7
        %v2449 = vsub.s32 %v2446, %v2448
        %v2450 = vrot.slane %v2436, %v2449
        %v2451 = vcombine.low %v2427, %v2443
        %v2452 = vcombine.high %v2427, %v2443
        %v2453 = vcombine.low %v2434, %v2450
        %v2454 = vcombine.high %v2434, %v2450
        %2456 = vrot.lane.b32.xlu0 %v2452, 8
        %v2457 = vpop.permute.xlu0 %2456
        %2460 = vrot.lane.b32.xlu0 %v2453, 16
        %v2461 = vpop.permute.xlu0 %2460
        %2464 = vrot.lane.b32.xlu0 %v2454, 24
        %v2465 = vpop.permute.xlu0 %2464
        %v2467 = vsel %vm1674, %v2451, %v2457
        %vm2468 = vcmask 130048
        %v2469 = vsel %vm2468, %v2467, %v2461
        %vm2470 = vcmask 195584
        %v2471 = vsel %vm2470, %v2469, %v2465
        %v2472 = vld [vmem:[#allocation14] sm:$0xff]
        %v2473 = vld [vmem:[#allocation14 + $0x8] sm:$0xff]
        %v2474 = vld [vmem:[#allocation14 + $0x10] sm:$0xff]
        %v2475 = vld [vmem:[#allocation14 + $0x18] sm:$0xff]
        %v2476 = vlaneseq
        %v2477 = vshrl.u32 %v2476, 7
        %v2478 = vsub.s32 4, %v2477
        %v2479 = vrot.slane %v1124, %v2478
        %v2481 = vsel %vm804, %v2471, 0
        %2483 = vmatprep.subr.mxu0 0.0
        %2484 = vmatpush1.msra.mxu0 %v2472
        %2485 = vmatprep.subr.mxu0 0.0
        %2486 = vmatpush1.msra.mxu0 %v2473
        %2487 = vmatprep.subr.mxu0 0.0
        %2488 = vmatpush1.msra.mxu0 %v2474
        %2489 = vmatprep.subr.mxu0 0.0
        %2490 = vmatpush1.msra.mxu0 %v2475
        %2491 = vmatprep.subr.mxu0 0.0
        %2492 = vmatpush1.msra.mxu0 0.0
        %2493 = vmatprep.subr.mxu0 0.0
        %2494 = vmatpush1.msra.mxu0 0.0
        %2495 = vmatprep.subr.mxu0 0.0
        %2496 = vmatpush1.msra.mxu0 0.0
        %2497 = vmatprep.subr.mxu0 0.0
        %2498 = vmatpush1.msra.mxu0 0.0
        %2499 = vmatprep.subr.mxu0 0.0
        %2500 = vmatpush1.msra.mxu0 0.0
        %2501 = vmatprep.subr.mxu0 0.0
        %2502 = vmatpush1.msra.mxu0 0.0
        %2503 = vmatprep.subr.mxu0 0.0
        %2504 = vmatpush1.msra.mxu0 0.0
        %2505 = vmatprep.subr.mxu0 0.0
        %2506 = vmatpush1.msra.mxu0 0.0
        %2507 = vmatprep.subr.mxu0 0.0
        %2508 = vmatpush1.msra.mxu0 0.0
        %2509 = vmatprep.subr.mxu0 0.0
        %2510 = vmatpush1.msra.mxu0 0.0
        %2511 = vmatprep.subr.mxu0 0.0
        %2512 = vmatpush1.msra.mxu0 0.0
        %2513 = vmatprep.subr.mxu0 0.0
        %2514 = vmatpush1.msra.mxu0 0.0
        %2515 = vmatprep.subr.mxu0 0.0
        %2516 = vmatpush1.msra.mxu0 0.0
        %2517 = vmatprep.subr.mxu0 0.0
        %2518 = vmatpush1.msra.mxu0 0.0
        %2519 = vmatprep.subr.mxu0 0.0
        %2520 = vmatpush1.msra.mxu0 0.0
        %2521 = vmatprep.subr.mxu0 0.0
        %2522 = vmatpush1.msra.mxu0 0.0
        %2523 = vmatprep.subr.mxu0 0.0
        %2524 = vmatpush1.msra.mxu0 0.0
        %2525 = vmatprep.subr.mxu0 0.0
        %2526 = vmatpush1.msra.mxu0 0.0
        %2527 = vmatprep.subr.mxu0 0.0
        %2528 = vmatpush1.msra.mxu0 0.0
        %2529 = vmatprep.subr.mxu0 0.0
        %2530 = vmatpush1.msra.mxu0 0.0
        %2531 = vmatprep.subr.mxu0 0.0
        %2532 = vmatpush1.msra.mxu0 0.0
        %2533 = vmatprep.subr.mxu0 0.0
        %2534 = vmatpush1.msra.mxu0 0.0
        %2535 = vmatprep.subr.mxu0 0.0
        %2536 = vmatpush1.msra.mxu0 0.0
        %2537 = vmatprep.subr.mxu0 0.0
        %2538 = vmatpush1.msra.mxu0 0.0
        %2539 = vmatprep.subr.mxu0 0.0
        %2540 = vmatpush1.msra.mxu0 0.0
        %2541 = vmatprep.subr.mxu0 0.0
        %2542 = vmatpush1.msra.mxu0 0.0
        %2543 = vmatprep.subr.mxu0 0.0
        %2544 = vmatpush1.msra.mxu0 0.0
        %2545 = vmatprep.subr.mxu0 0.0
        %2546 = vmatpush1.msra.mxu0 0.0
        %2547 = vmatprep.mubr.f32.mxu0 0.0
        %2548 = vmatmul.mubr.f32.gmra.mrb[0].mxu0 %v2481
        %v2549 = vpop.f32.mrb[0].mxu0
        %v2550 = vadd.f32 %v2479, %v2549
        %v2551 = vpop.f32.mrb[0].mxu0
        %2552 = vdwg.mxu0
        %v2553 = vadd.f32 %v1123, %v2550
        %v2554 = vsel %vm804, %v2553, 0.0
        %2555 = vadd.xlane.f32.xlu0 %v2554
        %v2556 = vpop.xlane.xlu0 %2555
        %v2557 = vmul.f32 %v2556, %v1103
        %v2558 = vsub.f32 %v2553, %v2557
        %v2559 = vmul.f32 %v2558, %v2558
        %v2560 = vsel %vm804, %v2559, 0.0
        %2561 = vadd.xlane.f32.xlu0 %v2560
        %v2562 = vpop.xlane.xlu0 %2561
        %v2563 = vmul.f32 %v2562, %v1103
        %v2564 = vadd.f32 %v2563, 1e-12
        %v2565 = vrsqrt.pop %v2564
        %v2566 = vmul.f32 %v2558, %v2565
        %v2567 = vlaneseq
        %v2568 = vshrl.u32 %v2567, 7
        %v2569 = vsub.s32 2, %v2568
        %v2570 = vrot.slane %v1124, %v2569
        %v2571 = vmul.f32 %v2570, %v2566
        %v2572 = vlaneseq
        %v2573 = vshrl.u32 %v2572, 7
        %v2574 = vsub.s32 3, %v2573
        %v2575 = vrot.slane %v1124, %v2574
        %v2576 = vadd.f32 %v2571, %v2575
        %v2577 = vld [vmem:[#allocation15] sm:$0xff]
        %v2578 = vld [vmem:[#allocation15 + $0x8] sm:$0xff]
        %v2579 = vld [vmem:[#allocation15 + $0x10] sm:$0xff]
        %v2580 = vld [vmem:[#allocation15 + $0x18] sm:$0xff]
        %v2581 = vld [vmem:[#allocation17] sm:$0x1]
        %v2583 = vlaneseq
        %v2584 = vshrl.u32 %v2583, 7
        %v2585 = vsub.s32 0, %v2584
        %v2586 = vrot.slane %v2581, %v2585
        %v2589 = vsel %vm804, %v2576, 0
        %2591 = vmatprep.subr.mxu0 0.0
        %2592 = vmatpush1.msra.mxu0 %v2577
        %2593 = vmatprep.subr.mxu0 0.0
        %2594 = vmatpush1.msra.mxu0 %v2578
        %2595 = vmatprep.subr.mxu0 0.0
        %2596 = vmatpush1.msra.mxu0 %v2579
        %2597 = vmatprep.subr.mxu0 0.0
        %2598 = vmatpush1.msra.mxu0 %v2580
        %2599 = vmatprep.subr.mxu0 0.0
        %2600 = vmatpush1.msra.mxu0 0.0
        %2601 = vmatprep.subr.mxu0 0.0
        %2602 = vmatpush1.msra.mxu0 0.0
        %2603 = vmatprep.subr.mxu0 0.0
        %2604 = vmatpush1.msra.mxu0 0.0
        %2605 = vmatprep.subr.mxu0 0.0
        %2606 = vmatpush1.msra.mxu0 0.0
        %2607 = vmatprep.subr.mxu0 0.0
        %2608 = vmatpush1.msra.mxu0 0.0
        %2609 = vmatprep.subr.mxu0 0.0
        %2610 = vmatpush1.msra.mxu0 0.0
        %2611 = vmatprep.subr.mxu0 0.0
        %2612 = vmatpush1.msra.mxu0 0.0
        %2613 = vmatprep.subr.mxu0 0.0
        %2614 = vmatpush1.msra.mxu0 0.0
        %2615 = vmatprep.subr.mxu0 0.0
        %2616 = vmatpush1.msra.mxu0 0.0
        %2617 = vmatprep.subr.mxu0 0.0
        %2618 = vmatpush1.msra.mxu0 0.0
        %2619 = vmatprep.subr.mxu0 0.0
        %2620 = vmatpush1.msra.mxu0 0.0
        %2621 = vmatprep.subr.mxu0 0.0
        %2622 = vmatpush1.msra.mxu0 0.0
        %2623 = vmatprep.subr.mxu0 0.0
        %2624 = vmatpush1.msra.mxu0 0.0
        %2625 = vmatprep.subr.mxu0 0.0
        %2626 = vmatpush1.msra.mxu0 0.0
        %2627 = vmatprep.subr.mxu0 0.0
        %2628 = vmatpush1.msra.mxu0 0.0
        %2629 = vmatprep.subr.mxu0 0.0
        %2630 = vmatpush1.msra.mxu0 0.0
        %2631 = vmatprep.subr.mxu0 0.0
        %2632 = vmatpush1.msra.mxu0 0.0
        %2633 = vmatprep.subr.mxu0 0.0
        %2634 = vmatpush1.msra.mxu0 0.0
        %2635 = vmatprep.subr.mxu0 0.0
        %2636 = vmatpush1.msra.mxu0 0.0
        %2637 = vmatprep.subr.mxu0 0.0
        %2638 = vmatpush1.msra.mxu0 0.0
        %2639 = vmatprep.subr.mxu0 0.0
        %2640 = vmatpush1.msra.mxu0 0.0
        %2641 = vmatprep.subr.mxu0 0.0
        %2642 = vmatpush1.msra.mxu0 0.0
        %2643 = vmatprep.subr.mxu0 0.0
        %2644 = vmatpush1.msra.mxu0 0.0
        %2645 = vmatprep.subr.mxu0 0.0
        %2646 = vmatpush1.msra.mxu0 0.0
        %2647 = vmatprep.subr.mxu0 0.0
        %2648 = vmatpush1.msra.mxu0 0.0
        %2649 = vmatprep.subr.mxu0 0.0
        %2650 = vmatpush1.msra.mxu0 0.0
        %2651 = vmatprep.subr.mxu0 0.0
        %2652 = vmatpush1.msra.mxu0 0.0
        %2653 = vmatprep.subr.mxu0 0.0
        %2654 = vmatpush1.msra.mxu0 0.0
        %2655 = vmatprep.mubr.f32.mxu0 0.0
        %2656 = vmatmul.mubr.f32.gmra.mrb[0].mxu0 %v2589
        %v2657 = vpop.f32.mrb[0].mxu0
        %v2658 = vadd.f32 %v2586, %v2657
        %v2659 = vpop.f32.mrb[0].mxu0
        %2660 = vdwg.mxu0
        %v2661 = vmul.f32 %v2658, 0.5
        %v2662 = vmul.f32 %v2658, %v879
        %v2663 = verf.f32.pop %v2662
        %v2664 = vadd.f32 %v2663, 1.0
        %v2665 = vmul.f32 %v2661, %v2664
        %v2666 = vld [vmem:[%s13] sm:$0xff]
        %v2667 = vld [vmem:[%s13 + $0x8] sm:$0xff]
        %v2668 = vld [vmem:[%s13 + $0x10] sm:$0xff]
        %v2669 = vld [vmem:[%s13 + $0x18] sm:$0xff]
        %v2670 = vld [vmem:[%s13 + $0x20] sm:$0xff]
        %v2671 = vld [vmem:[%s13 + $0x28] sm:$0xff]
        %v2672 = vld [vmem:[%s13 + $0x30] sm:$0xff]
        %v2673 = vld [vmem:[%s13 + $0x38] sm:$0xff]
        %v2674 = vlaneseq
        %v2675 = vshrl.u32 %v2674, 7
        %v2676 = vsub.s32 5, %v2675
        %v2677 = vrot.slane %v1124, %v2676
        %vm2678 = vcmask 523264
        %v2680 = vsel %vm2678, %v2665, 0
        %2682 = vmatprep.subr.mxu0 0.0
        %2683 = vmatpush1.msra.mxu0 %v2666
        %2684 = vmatprep.subr.mxu0 0.0
        %2685 = vmatpush1.msra.mxu0 %v2667
        %2686 = vmatprep.subr.mxu0 0.0
        %2687 = vmatpush1.msra.mxu0 %v2668
        %2688 = vmatprep.subr.mxu0 0.0
        %2689 = vmatpush1.msra.mxu0 %v2669
        %2690 = vmatprep.subr.mxu0 0.0
        %2691 = vmatpush1.msra.mxu0 %v2670
        %2692 = vmatprep.subr.mxu0 0.0
        %2693 = vmatpush1.msra.mxu0 %v2671
        %2694 = vmatprep.subr.mxu0 0.0
        %2695 = vmatpush1.msra.mxu0 %v2672
        %2696 = vmatprep.subr.mxu0 0.0
        %2697 = vmatpush1.msra.mxu0 %v2673
        %2698 = vmatprep.subr.mxu0 0.0
        %2699 = vmatpush1.msra.mxu0 0.0
        %2700 = vmatprep.subr.mxu0 0.0
        %2701 = vmatpush1.msra.mxu0 0.0
        %2702 = vmatprep.subr.mxu0 0.0
        %2703 = vmatpush1.msra.mxu0 0.0
        %2704 = vmatprep.subr.mxu0 0.0
        %2705 = vmatpush1.msra.mxu0 0.0
        %2706 = vmatprep.subr.mxu0 0.0
        %2707 = vmatpush1.msra.mxu0 0.0
        %2708 = vmatprep.subr.mxu0 0.0
        %2709 = vmatpush1.msra.mxu0 0.0
        %2710 = vmatprep.subr.mxu0 0.0
        %2711 = vmatpush1.msra.mxu0 0.0
        %2712 = vmatprep.subr.mxu0 0.0
        %2713 = vmatpush1.msra.mxu0 0.0
        %2714 = vmatprep.subr.mxu0 0.0
        %2715 = vmatpush1.msra.mxu0 0.0
        %2716 = vmatprep.subr.mxu0 0.0
        %2717 = vmatpush1.msra.mxu0 0.0
        %2718 = vmatprep.subr.mxu0 0.0
        %2719 = vmatpush1.msra.mxu0 0.0
        %2720 = vmatprep.subr.mxu0 0.0
        %2721 = vmatpush1.msra.mxu0 0.0
        %2722 = vmatprep.subr.mxu0 0.0
        %2723 = vmatpush1.msra.mxu0 0.0
        %2724 = vmatprep.subr.mxu0 0.0
        %2725 = vmatpush1.msra.mxu0 0.0
        %2726 = vmatprep.subr.mxu0 0.0
        %2727 = vmatpush1.msra.mxu0 0.0
        %2728 = vmatprep.subr.mxu0 0.0
        %2729 = vmatpush1.msra.mxu0 0.0
        %2730 = vmatprep.subr.mxu0 0.0
        %2731 = vmatpush1.msra.mxu0 0.0
        %2732 = vmatprep.subr.mxu0 0.0
        %2733 = vmatpush1.msra.mxu0 0.0
        %2734 = vmatprep.subr.mxu0 0.0
        %2735 = vmatpush1.msra.mxu0 0.0
        %2736 = vmatprep.subr.mxu0 0.0
        %2737 = vmatpush1.msra.mxu0 0.0
        %2738 = vmatprep.subr.mxu0 0.0
        %2739 = vmatpush1.msra.mxu0 0.0
        %2740 = vmatprep.subr.mxu0 0.0
        %2741 = vmatpush1.msra.mxu0 0.0
        %2742 = vmatprep.subr.mxu0 0.0
        %2743 = vmatpush1.msra.mxu0 0.0
        %2744 = vmatprep.subr.mxu0 0.0
        %2745 = vmatpush1.msra.mxu0 0.0
        %2746 = vmatprep.mubr.f32.mxu0 0.0
        %2747 = vmatmul.mubr.f32.gmra.mrb[0].mxu0 %v2680
        %v2748 = vpop.f32.mrb[0].mxu0
        %v2749 = vadd.f32 %v2677, %v2748
        %v2750 = vpop.f32.mrb[0].mxu0
        %2751 = vdwg.mxu0
        %v2752 = vadd.f32 %v2553, %v2749
        %s2753 = scalar_lea.vmem %s14, 8
        %v2754 = vld [vmem:[%s2753] sm:$0x3f]
        %v2755 = vsel %vm804, %v2752, 0.0
        %2756 = vadd.xlane.f32.xlu0 %v2755
        %v2757 = vpop.xlane.xlu0 %2756
        %v2758 = vmul.f32 %v2757, %v1103
        %v2759 = vsub.f32 %v2752, %v2758
        %v2760 = vmul.f32 %v2759, %v2759
        %v2761 = vsel %vm804, %v2760, 0.0
        %2762 = vadd.xlane.f32.xlu0 %v2761
        %v2763 = vpop.xlane.xlu0 %2762
        %v2764 = vmul.f32 %v2763, %v1103
        %v2765 = vadd.f32 %v2764, 1e-12
        %v2766 = vrsqrt.pop %v2765
        %v2767 = vmul.f32 %v2759, %v2766
        %v2768 = vlaneseq
        %v2769 = vshrl.u32 %v2768, 7
        %v2770 = vsub.s32 0, %v2769
        %v2771 = vrot.slane %v2754, %v2770
        %v2772 = vmul.f32 %v2771, %v2767
        %v2773 = vlaneseq
        %v2774 = vshrl.u32 %v2773, 7
        %v2775 = vsub.s32 1, %v2774
        %v2776 = vrot.slane %v2754, %v2775
        %v2777 = vadd.f32 %v2772, %v2776
        %s2778 = scalar_lea.vmem [#allocation11], 32
        %v2779 = vld [vmem:[%s2778] sm:$0xff]
        %v2780 = vld [vmem:[%s2778 + $0x8] sm:$0xff]
        %v2781 = vld [vmem:[%s2778 + $0x10] sm:$0xff]
        %v2782 = vld [vmem:[%s2778 + $0x18] sm:$0xff]
        %s2783 = scalar_lea.vmem [#allocation12], 1
        %v2784 = vld [vmem:[%s2783] sm:$0x1]
        %v2786 = vlaneseq
        %v2787 = vshrl.u32 %v2786, 7
        %v2788 = vsub.s32 0, %v2787
        %v2789 = vrot.slane %v2784, %v2788
        %v2792 = vsel %vm804, %v2777, 0
        %2794 = vmatprep.subr.mxu0 0.0
        %2795 = vmatpush1.msra.mxu0 %v2779
        %2796 = vmatprep.subr.mxu0 0.0
        %2797 = vmatpush1.msra.mxu0 %v2780
        %2798 = vmatprep.subr.mxu0 0.0
        %2799 = vmatpush1.msra.mxu0 %v2781
        %2800 = vmatprep.subr.mxu0 0.0
        %2801 = vmatpush1.msra.mxu0 %v2782
        %2802 = vmatprep.subr.mxu0 0.0
        %2803 = vmatpush1.msra.mxu0 0.0
        %2804 = vmatprep.subr.mxu0 0.0
        %2805 = vmatpush1.msra.mxu0 0.0
        %2806 = vmatprep.subr.mxu0 0.0
        %2807 = vmatpush1.msra.mxu0 0.0
        %2808 = vmatprep.subr.mxu0 0.0
        %2809 = vmatpush1.msra.mxu0 0.0
        %2810 = vmatprep.subr.mxu0 0.0
        %2811 = vmatpush1.msra.mxu0 0.0
        %2812 = vmatprep.subr.mxu0 0.0
        %2813 = vmatpush1.msra.mxu0 0.0
        %2814 = vmatprep.subr.mxu0 0.0
        %2815 = vmatpush1.msra.mxu0 0.0
        %2816 = vmatprep.subr.mxu0 0.0
        %2817 = vmatpush1.msra.mxu0 0.0
        %2818 = vmatprep.subr.mxu0 0.0
        %2819 = vmatpush1.msra.mxu0 0.0
        %2820 = vmatprep.subr.mxu0 0.0
        %2821 = vmatpush1.msra.mxu0 0.0
        %2822 = vmatprep.subr.mxu0 0.0
        %2823 = vmatpush1.msra.mxu0 0.0
        %2824 = vmatprep.subr.mxu0 0.0
        %2825 = vmatpush1.msra.mxu0 0.0
        %2826 = vmatprep.subr.mxu0 0.0
        %2827 = vmatpush1.msra.mxu0 0.0
        %2828 = vmatprep.subr.mxu0 0.0
        %2829 = vmatpush1.msra.mxu0 0.0
        %2830 = vmatprep.subr.mxu0 0.0
        %2831 = vmatpush1.msra.mxu0 0.0
        %2832 = vmatprep.subr.mxu0 0.0
        %2833 = vmatpush1.msra.mxu0 0.0
        %2834 = vmatprep.subr.mxu0 0.0
        %2835 = vmatpush1.msra.mxu0 0.0
        %2836 = vmatprep.subr.mxu0 0.0
        %2837 = vmatpush1.msra.mxu0 0.0
        %2838 = vmatprep.subr.mxu0 0.0
        %2839 = vmatpush1.msra.mxu0 0.0
        %2840 = vmatprep.subr.mxu0 0.0
        %2841 = vmatpush1.msra.mxu0 0.0
        %2842 = vmatprep.subr.mxu0 0.0
        %2843 = vmatpush1.msra.mxu0 0.0
        %2844 = vmatprep.subr.mxu0 0.0
        %2845 = vmatpush1.msra.mxu0 0.0
        %2846 = vmatprep.subr.mxu0 0.0
        %2847 = vmatpush1.msra.mxu0 0.0
        %2848 = vmatprep.subr.mxu0 0.0
        %2849 = vmatpush1.msra.mxu0 0.0
        %2850 = vmatprep.subr.mxu0 0.0
        %2851 = vmatpush1.msra.mxu0 0.0
        %2852 = vmatprep.subr.mxu0 0.0
        %2853 = vmatpush1.msra.mxu0 0.0
        %2854 = vmatprep.subr.mxu0 0.0
        %2855 = vmatpush1.msra.mxu0 0.0
        %2856 = vmatprep.subr.mxu0 0.0
        %2857 = vmatpush1.msra.mxu0 0.0
        %2858 = vmatprep.mubr.f32.mxu0 0.0
        %2859 = vmatmul.mubr.f32.gmra.mrb[0].mxu0 %v2792
        %v2860 = vpop.f32.mrb[0].mxu0
        %v2861 = vadd.f32 %v2789, %v2860
        %v2862 = vpop.f32.mrb[0].mxu0
        %2863 = vdwg.mxu0
        %2865 = vrot.lane.b32.xlu0 %v2861, 120
        %v2866 = vpop.permute.xlu0 %2865
        %2868 = vrot.lane.b32.xlu0 %v2861, 112
        %v2869 = vpop.permute.xlu0 %2868
        %2871 = vrot.lane.b32.xlu0 %v2861, 104
        %v2872 = vpop.permute.xlu0 %2871
        %v2874 = vcombine.low %v2861, %v2869
        %v2875 = vcombine.high %v2861, %v2869
        %v2877 = vunpack.c.l.s4 1983009808
        %v2878 = vunpack.c.0.s8 %v2877
        %v2879 = vlaneseq
        %v2880 = vshrl.u32 %v2879, 7
        %v2881 = vsub.s32 %v2878, %v2880
        %v2882 = vrot.slane %v2874, %v2881
        %v2884 = vunpack.c.l.s4 1983009808
        %v2885 = vunpack.c.0.s8 %v2884
        %v2886 = vlaneseq
        %v2887 = vshrl.u32 %v2886, 7
        %v2888 = vsub.s32 %v2885, %v2887
        %v2889 = vrot.slane %v2875, %v2888
        %v2890 = vcombine.low %v2866, %v2872
        %v2891 = vcombine.high %v2866, %v2872
        %v2893 = vunpack.c.l.s4 1983009808
        %v2894 = vunpack.c.0.s8 %v2893
        %v2895 = vlaneseq
        %v2896 = vshrl.u32 %v2895, 7
        %v2897 = vsub.s32 %v2894, %v2896
        %v2898 = vrot.slane %v2890, %v2897
        %v2900 = vunpack.c.l.s4 1983009808
        %v2901 = vunpack.c.0.s8 %v2900
        %v2902 = vlaneseq
        %v2903 = vshrl.u32 %v2902, 7
        %v2904 = vsub.s32 %v2901, %v2903
        %v2905 = vrot.slane %v2891, %v2904
        %v2906 = vcombine.low %v2882, %v2898
        %v2907 = vcombine.high %v2882, %v2898
        %v2909 = vunpack.c.l.s4 1934713408
        %v2910 = vunpack.c.0.s8 %v2909
        %v2911 = vlaneseq
        %v2912 = vshrl.u32 %v2911, 7
        %v2913 = vsub.s32 %v2910, %v2912
        %v2914 = vrot.slane %v2906, %v2913
        %v2916 = vunpack.c.l.s4 1934713408
        %v2917 = vunpack.c.0.s8 %v2916
        %v2918 = vlaneseq
        %v2919 = vshrl.u32 %v2918, 7
        %v2920 = vsub.s32 %v2917, %v2919
        %v2921 = vrot.slane %v2907, %v2920
        %v2922 = vcombine.low %v2889, %v2905
        %v2923 = vcombine.high %v2889, %v2905
        %v2925 = vunpack.c.l.s4 1934713408
        %v2926 = vunpack.c.0.s8 %v2925
        %v2927 = vlaneseq
        %v2928 = vshrl.u32 %v2927, 7
        %v2929 = vsub.s32 %v2926, %v2928
        %v2930 = vrot.slane %v2922, %v2929
        %v2932 = vunpack.c.l.s4 1934713408
        %v2933 = vunpack.c.0.s8 %v2932
        %v2934 = vlaneseq
        %v2935 = vshrl.u32 %v2934, 7
        %v2936 = vsub.s32 %v2933, %v2935
        %v2937 = vrot.slane %v2923, %v2936
        %v2938 = vcombine.high %v2914, 0.0
        %v2939 = vcombine.high %v2921, 0.0
        %v2940 = vcombine.high %v2930, 0.0
        %v2941 = vcombine.high %v2937, 0.0
        %v2942 = vcombine.low %v2914, %v2921
        %v2944 = vunpack.c.l.s4 1983009808
        %v2945 = vunpack.c.0.s8 %v2944
        %v2946 = vlaneseq
        %v2947 = vshrl.u32 %v2946, 7
        %v2948 = vsub.s32 %v2945, %v2947
        %v2949 = vrot.slane %v2942, %v2948
        %v2950 = vcombine.low %v2938, %v2939
        %v2952 = vunpack.c.l.s4 1983009808
        %v2953 = vunpack.c.0.s8 %v2952
        %v2954 = vlaneseq
        %v2955 = vshrl.u32 %v2954, 7
        %v2956 = vsub.s32 %v2953, %v2955
        %v2957 = vrot.slane %v2950, %v2956
        %v2958 = vcombine.low %v2930, %v2937
        %v2960 = vunpack.c.l.s4 1983009808
        %v2961 = vunpack.c.0.s8 %v2960
        %v2962 = vlaneseq
        %v2963 = vshrl.u32 %v2962, 7
        %v2964 = vsub.s32 %v2961, %v2963
        %v2965 = vrot.slane %v2958, %v2964
        %v2966 = vcombine.low %v2940, %v2941
        %v2968 = vunpack.c.l.s4 1983009808
        %v2969 = vunpack.c.0.s8 %v2968
        %v2970 = vlaneseq
        %v2971 = vshrl.u32 %v2970, 7
        %v2972 = vsub.s32 %v2969, %v2971
        %v2973 = vrot.slane %v2966, %v2972
        %v2974 = vcombine.low %v2949, %v2957
        %v2975 = vcombine.high %v2949, %v2957
        %v2977 = vunpack.c.l.s4 1934713408
        %v2978 = vunpack.c.0.s8 %v2977
        %v2979 = vlaneseq
        %v2980 = vshrl.u32 %v2979, 7
        %v2981 = vsub.s32 %v2978, %v2980
        %v2982 = vrot.slane %v2974, %v2981
        %v2984 = vunpack.c.l.s4 1934713408
        %v2985 = vunpack.c.0.s8 %v2984
        %v2986 = vlaneseq
        %v2987 = vshrl.u32 %v2986, 7
        %v2988 = vsub.s32 %v2985, %v2987
        %v2989 = vrot.slane %v2975, %v2988
        %v2990 = vcombine.low %v2965, %v2973
        %v2991 = vcombine.high %v2965, %v2973
        %v2993 = vunpack.c.l.s4 1934713408
        %v2994 = vunpack.c.0.s8 %v2993
        %v2995 = vlaneseq
        %v2996 = vshrl.u32 %v2995, 7
        %v2997 = vsub.s32 %v2994, %v2996
        %v2998 = vrot.slane %v2990, %v2997
        %v3000 = vunpack.c.l.s4 1934713408
        %v3001 = vunpack.c.0.s8 %v3000
        %v3002 = vlaneseq
        %v3003 = vshrl.u32 %v3002, 7
        %v3004 = vsub.s32 %v3001, %v3003
        %v3005 = vrot.slane %v2991, %v3004
        %v3006 = vcombine.low %v2982, %v2998
        %v3007 = vcombine.high %v2982, %v2998
        %v3008 = vcombine.low %v2989, %v3005
        %v3009 = vcombine.high %v2989, %v3005
        %3010 = vrot.lane.b32.xlu0 %v2861, 96
        %v3011 = vpop.permute.xlu0 %3010
        %3012 = vrot.lane.b32.xlu0 %v2866, 96
        %v3013 = vpop.permute.xlu0 %3012
        %3014 = vrot.lane.b32.xlu0 %v2869, 96
        %v3015 = vpop.permute.xlu0 %3014
        %3016 = vrot.lane.b32.xlu0 %v2872, 96
        %v3017 = vpop.permute.xlu0 %3016
        %v3022 = vcombine.low %v3011, %v3015
        %v3023 = vcombine.high %v3011, %v3015
        %v3025 = vunpack.c.l.s4 1983009808
        %v3026 = vunpack.c.0.s8 %v3025
        %v3027 = vlaneseq
        %v3028 = vshrl.u32 %v3027, 7
        %v3029 = vsub.s32 %v3026, %v3028
        %v3030 = vrot.slane %v3022, %v3029
        %v3032 = vunpack.c.l.s4 1983009808
        %v3033 = vunpack.c.0.s8 %v3032
        %v3034 = vlaneseq
        %v3035 = vshrl.u32 %v3034, 7
        %v3036 = vsub.s32 %v3033, %v3035
        %v3037 = vrot.slane %v3023, %v3036
        %v3038 = vcombine.low %v3013, %v3017
        %v3039 = vcombine.high %v3013, %v3017
        %v3041 = vunpack.c.l.s4 1983009808
        %v3042 = vunpack.c.0.s8 %v3041
        %v3043 = vlaneseq
        %v3044 = vshrl.u32 %v3043, 7
        %v3045 = vsub.s32 %v3042, %v3044
        %v3046 = vrot.slane %v3038, %v3045
        %v3048 = vunpack.c.l.s4 1983009808
        %v3049 = vunpack.c.0.s8 %v3048
        %v3050 = vlaneseq
        %v3051 = vshrl.u32 %v3050, 7
        %v3052 = vsub.s32 %v3049, %v3051
        %v3053 = vrot.slane %v3039, %v3052
        %v3054 = vcombine.low %v3030, %v3046
        %v3055 = vcombine.high %v3030, %v3046
        %v3057 = vunpack.c.l.s4 1934713408
        %v3058 = vunpack.c.0.s8 %v3057
        %v3059 = vlaneseq
        %v3060 = vshrl.u32 %v3059, 7
        %v3061 = vsub.s32 %v3058, %v3060
        %v3062 = vrot.slane %v3054, %v3061
        %v3064 = vunpack.c.l.s4 1934713408
        %v3065 = vunpack.c.0.s8 %v3064
        %v3066 = vlaneseq
        %v3067 = vshrl.u32 %v3066, 7
        %v3068 = vsub.s32 %v3065, %v3067
        %v3069 = vrot.slane %v3055, %v3068
        %v3070 = vcombine.low %v3037, %v3053
        %v3071 = vcombine.high %v3037, %v3053
        %v3073 = vunpack.c.l.s4 1934713408
        %v3074 = vunpack.c.0.s8 %v3073
        %v3075 = vlaneseq
        %v3076 = vshrl.u32 %v3075, 7
        %v3077 = vsub.s32 %v3074, %v3076
        %v3078 = vrot.slane %v3070, %v3077
        %v3080 = vunpack.c.l.s4 1934713408
        %v3081 = vunpack.c.0.s8 %v3080
        %v3082 = vlaneseq
        %v3083 = vshrl.u32 %v3082, 7
        %v3084 = vsub.s32 %v3081, %v3083
        %v3085 = vrot.slane %v3071, %v3084
        %v3086 = vcombine.high %v3062, 0.0
        %v3087 = vcombine.high %v3069, 0.0
        %v3088 = vcombine.high %v3078, 0.0
        %v3089 = vcombine.high %v3085, 0.0
        %v3090 = vcombine.low %v3062, %v3069
        %v3092 = vunpack.c.l.s4 1983009808
        %v3093 = vunpack.c.0.s8 %v3092
        %v3094 = vlaneseq
        %v3095 = vshrl.u32 %v3094, 7
        %v3096 = vsub.s32 %v3093, %v3095
        %v3097 = vrot.slane %v3090, %v3096
        %v3098 = vcombine.low %v3086, %v3087
        %v3100 = vunpack.c.l.s4 1983009808
        %v3101 = vunpack.c.0.s8 %v3100
        %v3102 = vlaneseq
        %v3103 = vshrl.u32 %v3102, 7
        %v3104 = vsub.s32 %v3101, %v3103
        %v3105 = vrot.slane %v3098, %v3104
        %v3106 = vcombine.low %v3078, %v3085
        %v3108 = vunpack.c.l.s4 1983009808
        %v3109 = vunpack.c.0.s8 %v3108
        %v3110 = vlaneseq
        %v3111 = vshrl.u32 %v3110, 7
        %v3112 = vsub.s32 %v3109, %v3111
        %v3113 = vrot.slane %v3106, %v3112
        %v3114 = vcombine.low %v3088, %v3089
        %v3116 = vunpack.c.l.s4 1983009808
        %v3117 = vunpack.c.0.s8 %v3116
        %v3118 = vlaneseq
        %v3119 = vshrl.u32 %v3118, 7
        %v3120 = vsub.s32 %v3117, %v3119
        %v3121 = vrot.slane %v3114, %v3120
        %v3122 = vcombine.low %v3097, %v3105
        %v3123 = vcombine.high %v3097, %v3105
        %v3125 = vunpack.c.l.s4 1934713408
        %v3126 = vunpack.c.0.s8 %v3125
        %v3127 = vlaneseq
        %v3128 = vshrl.u32 %v3127, 7
        %v3129 = vsub.s32 %v3126, %v3128
        %v3130 = vrot.slane %v3122, %v3129
        %v3132 = vunpack.c.l.s4 1934713408
        %v3133 = vunpack.c.0.s8 %v3132
        %v3134 = vlaneseq
        %v3135 = vshrl.u32 %v3134, 7
        %v3136 = vsub.s32 %v3133, %v3135
        %v3137 = vrot.slane %v3123, %v3136
        %v3138 = vcombine.low %v3113, %v3121
        %v3139 = vcombine.high %v3113, %v3121
        %v3141 = vunpack.c.l.s4 1934713408
        %v3142 = vunpack.c.0.s8 %v3141
        %v3143 = vlaneseq
        %v3144 = vshrl.u32 %v3143, 7
        %v3145 = vsub.s32 %v3142, %v3144
        %v3146 = vrot.slane %v3138, %v3145
        %v3148 = vunpack.c.l.s4 1934713408
        %v3149 = vunpack.c.0.s8 %v3148
        %v3150 = vlaneseq
        %v3151 = vshrl.u32 %v3150, 7
        %v3152 = vsub.s32 %v3149, %v3151
        %v3153 = vrot.slane %v3139, %v3152
        %v3154 = vcombine.low %v3130, %v3146
        %v3155 = vcombine.high %v3130, %v3146
        %v3156 = vcombine.low %v3137, %v3153
        %v3157 = vcombine.high %v3137, %v3153
        %3158 = vrot.lane.b32.xlu0 %v2861, 64
        %v3159 = vpop.permute.xlu0 %3158
        %3160 = vrot.lane.b32.xlu0 %v2866, 64
        %v3161 = vpop.permute.xlu0 %3160
        %3162 = vrot.lane.b32.xlu0 %v2869, 64
        %v3163 = vpop.permute.xlu0 %3162
        %3164 = vrot.lane.b32.xlu0 %v2872, 64
        %v3165 = vpop.permute.xlu0 %3164
        %v3170 = vcombine.low %v3159, %v3163
        %v3171 = vcombine.high %v3159, %v3163
        %v3173 = vunpack.c.l.s4 1983009808
        %v3174 = vunpack.c.0.s8 %v3173
        %v3175 = vlaneseq
        %v3176 = vshrl.u32 %v3175, 7
        %v3177 = vsub.s32 %v3174, %v3176
        %v3178 = vrot.slane %v3170, %v3177
        %v3180 = vunpack.c.l.s4 1983009808
        %v3181 = vunpack.c.0.s8 %v3180
        %v3182 = vlaneseq
        %v3183 = vshrl.u32 %v3182, 7
        %v3184 = vsub.s32 %v3181, %v3183
        %v3185 = vrot.slane %v3171, %v3184
        %v3186 = vcombine.low %v3161, %v3165
        %v3187 = vcombine.high %v3161, %v3165
        %v3189 = vunpack.c.l.s4 1983009808
        %v3190 = vunpack.c.0.s8 %v3189
        %v3191 = vlaneseq
        %v3192 = vshrl.u32 %v3191, 7
        %v3193 = vsub.s32 %v3190, %v3192
        %v3194 = vrot.slane %v3186, %v3193
        %v3196 = vunpack.c.l.s4 1983009808
        %v3197 = vunpack.c.0.s8 %v3196
        %v3198 = vlaneseq
        %v3199 = vshrl.u32 %v3198, 7
        %v3200 = vsub.s32 %v3197, %v3199
        %v3201 = vrot.slane %v3187, %v3200
        %v3202 = vcombine.low %v3178, %v3194
        %v3203 = vcombine.high %v3178, %v3194
        %v3205 = vunpack.c.l.s4 1934713408
        %v3206 = vunpack.c.0.s8 %v3205
        %v3207 = vlaneseq
        %v3208 = vshrl.u32 %v3207, 7
        %v3209 = vsub.s32 %v3206, %v3208
        %v3210 = vrot.slane %v3202, %v3209
        %v3212 = vunpack.c.l.s4 1934713408
        %v3213 = vunpack.c.0.s8 %v3212
        %v3214 = vlaneseq
        %v3215 = vshrl.u32 %v3214, 7
        %v3216 = vsub.s32 %v3213, %v3215
        %v3217 = vrot.slane %v3203, %v3216
        %v3218 = vcombine.low %v3185, %v3201
        %v3219 = vcombine.high %v3185, %v3201
        %v3221 = vunpack.c.l.s4 1934713408
        %v3222 = vunpack.c.0.s8 %v3221
        %v3223 = vlaneseq
        %v3224 = vshrl.u32 %v3223, 7
        %v3225 = vsub.s32 %v3222, %v3224
        %v3226 = vrot.slane %v3218, %v3225
        %v3228 = vunpack.c.l.s4 1934713408
        %v3229 = vunpack.c.0.s8 %v3228
        %v3230 = vlaneseq
        %v3231 = vshrl.u32 %v3230, 7
        %v3232 = vsub.s32 %v3229, %v3231
        %v3233 = vrot.slane %v3219, %v3232
        %v3234 = vcombine.high %v3210, 0.0
        %v3235 = vcombine.high %v3217, 0.0
        %v3236 = vcombine.high %v3226, 0.0
        %v3237 = vcombine.high %v3233, 0.0
        %v3238 = vcombine.low %v3210, %v3217
        %v3240 = vunpack.c.l.s4 1983009808
        %v3241 = vunpack.c.0.s8 %v3240
        %v3242 = vlaneseq
        %v3243 = vshrl.u32 %v3242, 7
        %v3244 = vsub.s32 %v3241, %v3243
        %v3245 = vrot.slane %v3238, %v3244
        %v3246 = vcombine.low %v3234, %v3235
        %v3248 = vunpack.c.l.s4 1983009808
        %v3249 = vunpack.c.0.s8 %v3248
        %v3250 = vlaneseq
        %v3251 = vshrl.u32 %v3250, 7
        %v3252 = vsub.s32 %v3249, %v3251
        %v3253 = vrot.slane %v3246, %v3252
        %v3254 = vcombine.low %v3226, %v3233
        %v3256 = vunpack.c.l.s4 1983009808
        %v3257 = vunpack.c.0.s8 %v3256
        %v3258 = vlaneseq
        %v3259 = vshrl.u32 %v3258, 7
        %v3260 = vsub.s32 %v3257, %v3259
        %v3261 = vrot.slane %v3254, %v3260
        %v3262 = vcombine.low %v3236, %v3237
        %v3264 = vunpack.c.l.s4 1983009808
        %v3265 = vunpack.c.0.s8 %v3264
        %v3266 = vlaneseq
        %v3267 = vshrl.u32 %v3266, 7
        %v3268 = vsub.s32 %v3265, %v3267
        %v3269 = vrot.slane %v3262, %v3268
        %v3270 = vcombine.low %v3245, %v3253
        %v3271 = vcombine.high %v3245, %v3253
        %v3273 = vunpack.c.l.s4 1934713408
        %v3274 = vunpack.c.0.s8 %v3273
        %v3275 = vlaneseq
        %v3276 = vshrl.u32 %v3275, 7
        %v3277 = vsub.s32 %v3274, %v3276
        %v3278 = vrot.slane %v3270, %v3277
        %v3280 = vunpack.c.l.s4 1934713408
        %v3281 = vunpack.c.0.s8 %v3280
        %v3282 = vlaneseq
        %v3283 = vshrl.u32 %v3282, 7
        %v3284 = vsub.s32 %v3281, %v3283
        %v3285 = vrot.slane %v3271, %v3284
        %v3286 = vcombine.low %v3261, %v3269
        %v3287 = vcombine.high %v3261, %v3269
        %v3289 = vunpack.c.l.s4 1934713408
        %v3290 = vunpack.c.0.s8 %v3289
        %v3291 = vlaneseq
        %v3292 = vshrl.u32 %v3291, 7
        %v3293 = vsub.s32 %v3290, %v3292
        %v3294 = vrot.slane %v3286, %v3293
        %v3296 = vunpack.c.l.s4 1934713408
        %v3297 = vunpack.c.0.s8 %v3296
        %v3298 = vlaneseq
        %v3299 = vshrl.u32 %v3298, 7
        %v3300 = vsub.s32 %v3297, %v3299
        %v3301 = vrot.slane %v3287, %v3300
        %v3302 = vcombine.low %v3278, %v3294
        %v3303 = vcombine.high %v3278, %v3294
        %v3304 = vcombine.low %v3285, %v3301
        %v3305 = vcombine.high %v3285, %v3301
        %v3307 = vsel %vm1674, %v3006, 0
        %v3310 = vsel %vm1674, %v3154, 0
        %3312 = vmatprep.subr.mxu0 0.0
        %3313 = vmatpush1.xpose.msra.mxu0 %v3310
        %3314 = vmatprep.subr.mxu0 0.0
        %3315 = vmatpush1.xpose.msra.mxu0 0.0
        %3316 = vmatprep.subr.mxu0 0.0
        %3317 = vmatpush1.xpose.msra.mxu0 0.0
        %3318 = vmatprep.subr.mxu0 0.0
        %3319 = vmatpush1.xpose.msra.mxu0 0.0
        %3320 = vmatprep.subr.mxu0 0.0
        %3321 = vmatpush1.xpose.msra.mxu0 0.0
        %3322 = vmatprep.subr.mxu0 0.0
        %3323 = vmatpush1.xpose.msra.mxu0 0.0
        %3324 = vmatprep.subr.mxu0 0.0
        %3325 = vmatpush1.xpose.msra.mxu0 0.0
        %3326 = vmatprep.subr.mxu0 0.0
        %3327 = vmatpush1.xpose.msra.mxu0 0.0
        %3328 = vmatprep.subr.mxu0 0.0
        %3329 = vmatpush1.xpose.msra.mxu0 0.0
        %3330 = vmatprep.subr.mxu0 0.0
        %3331 = vmatpush1.xpose.msra.mxu0 0.0
        %3332 = vmatprep.subr.mxu0 0.0
        %3333 = vmatpush1.xpose.msra.mxu0 0.0
        %3334 = vmatprep.subr.mxu0 0.0
        %3335 = vmatpush1.xpose.msra.mxu0 0.0
        %3336 = vmatprep.subr.mxu0 0.0
        %3337 = vmatpush1.xpose.msra.mxu0 0.0
        %3338 = vmatprep.subr.mxu0 0.0
        %3339 = vmatpush1.xpose.msra.mxu0 0.0
        %3340 = vmatprep.subr.mxu0 0.0
        %3341 = vmatpush1.xpose.msra.mxu0 0.0
        %3342 = vmatprep.subr.mxu0 0.0
        %3343 = vmatpush1.xpose.msra.mxu0 0.0
        %3344 = vmatprep.subr.mxu0 0.0
        %3345 = vmatpush1.xpose.msra.mxu0 0.0
        %3346 = vmatprep.subr.mxu0 0.0
        %3347 = vmatpush1.xpose.msra.mxu0 0.0
        %3348 = vmatprep.subr.mxu0 0.0
        %3349 = vmatpush1.xpose.msra.mxu0 0.0
        %3350 = vmatprep.subr.mxu0 0.0
        %3351 = vmatpush1.xpose.msra.mxu0 0.0
        %3352 = vmatprep.subr.mxu0 0.0
        %3353 = vmatpush1.xpose.msra.mxu0 0.0
        %3354 = vmatprep.subr.mxu0 0.0
        %3355 = vmatpush1.xpose.msra.mxu0 0.0
        %3356 = vmatprep.subr.mxu0 0.0
        %3357 = vmatpush1.xpose.msra.mxu0 0.0
        %3358 = vmatprep.subr.mxu0 0.0
        %3359 = vmatpush1.xpose.msra.mxu0 0.0
        %3360 = vmatprep.subr.mxu0 0.0
        %3361 = vmatpush1.xpose.msra.mxu0 0.0
        %3362 = vmatprep.subr.mxu0 0.0
        %3363 = vmatpush1.xpose.msra.mxu0 0.0
        %3364 = vmatprep.subr.mxu0 0.0
        %3365 = vmatpush1.xpose.msra.mxu0 0.0
        %3366 = vmatprep.subr.mxu0 0.0
        %3367 = vmatpush1.xpose.msra.mxu0 0.0
        %3368 = vmatprep.subr.mxu0 0.0
        %3369 = vmatpush1.xpose.msra.mxu0 0.0
        %3370 = vmatprep.subr.mxu0 0.0
        %3371 = vmatpush1.xpose.msra.mxu0 0.0
        %3372 = vmatprep.subr.mxu0 0.0
        %3373 = vmatpush1.xpose.msra.mxu0 0.0
        %3374 = vmatprep.subr.mxu0 0.0
        %3375 = vmatpush1.xpose.msra.mxu0 0.0
        %3376 = vmatprep.mubr.f32.mxu0 0.0
        %3377 = vmatmul.mubr.f32.gmra.mrb[0].mxu0 %v3307
        %v3378 = vpop.f32.mrb[0].mxu0
        %v3379 = vadd.f32 0.0, %v3378
        %v3380 = vpop.f32.mrb[0].mxu0
        %3381 = vdwg.mxu0
        %v3383 = vsel %vm1674, %v3007, 0
        %v3386 = vsel %vm1674, %v3155, 0
        %3388 = vmatprep.subr.mxu0 0.0
        %3389 = vmatpush1.xpose.msra.mxu0 %v3386
        %3390 = vmatprep.subr.mxu0 0.0
        %3391 = vmatpush1.xpose.msra.mxu0 0.0
        %3392 = vmatprep.subr.mxu0 0.0
        %3393 = vmatpush1.xpose.msra.mxu0 0.0
        %3394 = vmatprep.subr.mxu0 0.0
        %3395 = vmatpush1.xpose.msra.mxu0 0.0
        %3396 = vmatprep.subr.mxu0 0.0
        %3397 = vmatpush1.xpose.msra.mxu0 0.0
        %3398 = vmatprep.subr.mxu0 0.0
        %3399 = vmatpush1.xpose.msra.mxu0 0.0
        %3400 = vmatprep.subr.mxu0 0.0
        %3401 = vmatpush1.xpose.msra.mxu0 0.0
        %3402 = vmatprep.subr.mxu0 0.0
        %3403 = vmatpush1.xpose.msra.mxu0 0.0
        %3404 = vmatprep.subr.mxu0 0.0
        %3405 = vmatpush1.xpose.msra.mxu0 0.0
        %3406 = vmatprep.subr.mxu0 0.0
        %3407 = vmatpush1.xpose.msra.mxu0 0.0
        %3408 = vmatprep.subr.mxu0 0.0
        %3409 = vmatpush1.xpose.msra.mxu0 0.0
        %3410 = vmatprep.subr.mxu0 0.0
        %3411 = vmatpush1.xpose.msra.mxu0 0.0
        %3412 = vmatprep.subr.mxu0 0.0
        %3413 = vmatpush1.xpose.msra.mxu0 0.0
        %3414 = vmatprep.subr.mxu0 0.0
        %3415 = vmatpush1.xpose.msra.mxu0 0.0
        %3416 = vmatprep.subr.mxu0 0.0
        %3417 = vmatpush1.xpose.msra.mxu0 0.0
        %3418 = vmatprep.subr.mxu0 0.0
        %3419 = vmatpush1.xpose.msra.mxu0 0.0
        %3420 = vmatprep.subr.mxu0 0.0
        %3421 = vmatpush1.xpose.msra.mxu0 0.0
        %3422 = vmatprep.subr.mxu0 0.0
        %3423 = vmatpush1.xpose.msra.mxu0 0.0
        %3424 = vmatprep.subr.mxu0 0.0
        %3425 = vmatpush1.xpose.msra.mxu0 0.0
        %3426 = vmatprep.subr.mxu0 0.0
        %3427 = vmatpush1.xpose.msra.mxu0 0.0
        %3428 = vmatprep.subr.mxu0 0.0
        %3429 = vmatpush1.xpose.msra.mxu0 0.0
        %3430 = vmatprep.subr.mxu0 0.0
        %3431 = vmatpush1.xpose.msra.mxu0 0.0
        %3432 = vmatprep.subr.mxu0 0.0
        %3433 = vmatpush1.xpose.msra.mxu0 0.0
        %3434 = vmatprep.subr.mxu0 0.0
        %3435 = vmatpush1.xpose.msra.mxu0 0.0
        %3436 = vmatprep.subr.mxu0 0.0
        %3437 = vmatpush1.xpose.msra.mxu0 0.0
        %3438 = vmatprep.subr.mxu0 0.0
        %3439 = vmatpush1.xpose.msra.mxu0 0.0
        %3440 = vmatprep.subr.mxu0 0.0
        %3441 = vmatpush1.xpose.msra.mxu0 0.0
        %3442 = vmatprep.subr.mxu0 0.0
        %3443 = vmatpush1.xpose.msra.mxu0 0.0
        %3444 = vmatprep.subr.mxu0 0.0
        %3445 = vmatpush1.xpose.msra.mxu0 0.0
        %3446 = vmatprep.subr.mxu0 0.0
        %3447 = vmatpush1.xpose.msra.mxu0 0.0
        %3448 = vmatprep.subr.mxu0 0.0
        %3449 = vmatpush1.xpose.msra.mxu0 0.0
        %3450 = vmatprep.subr.mxu0 0.0
        %3451 = vmatpush1.xpose.msra.mxu0 0.0
        %3452 = vmatprep.mubr.f32.mxu0 0.0
        %3453 = vmatmul.mubr.f32.gmra.mrb[0].mxu0 %v3383
        %v3454 = vpop.f32.mrb[0].mxu0
        %v3455 = vadd.f32 0.0, %v3454
        %v3456 = vpop.f32.mrb[0].mxu0
        %3457 = vdwg.mxu0
        %v3459 = vsel %vm1674, %v3008, 0
        %v3462 = vsel %vm1674, %v3156, 0
        %3464 = vmatprep.subr.mxu0 0.0
        %3465 = vmatpush1.xpose.msra.mxu0 %v3462
        %3466 = vmatprep.subr.mxu0 0.0
        %3467 = vmatpush1.xpose.msra.mxu0 0.0
        %3468 = vmatprep.subr.mxu0 0.0
        %3469 = vmatpush1.xpose.msra.mxu0 0.0
        %3470 = vmatprep.subr.mxu0 0.0
        %3471 = vmatpush1.xpose.msra.mxu0 0.0
        %3472 = vmatprep.subr.mxu0 0.0
        %3473 = vmatpush1.xpose.msra.mxu0 0.0
        %3474 = vmatprep.subr.mxu0 0.0
        %3475 = vmatpush1.xpose.msra.mxu0 0.0
        %3476 = vmatprep.subr.mxu0 0.0
        %3477 = vmatpush1.xpose.msra.mxu0 0.0
        %3478 = vmatprep.subr.mxu0 0.0
        %3479 = vmatpush1.xpose.msra.mxu0 0.0
        %3480 = vmatprep.subr.mxu0 0.0
        %3481 = vmatpush1.xpose.msra.mxu0 0.0
        %3482 = vmatprep.subr.mxu0 0.0
        %3483 = vmatpush1.xpose.msra.mxu0 0.0
        %3484 = vmatprep.subr.mxu0 0.0
        %3485 = vmatpush1.xpose.msra.mxu0 0.0
        %3486 = vmatprep.subr.mxu0 0.0
        %3487 = vmatpush1.xpose.msra.mxu0 0.0
        %3488 = vmatprep.subr.mxu0 0.0
        %3489 = vmatpush1.xpose.msra.mxu0 0.0
        %3490 = vmatprep.subr.mxu0 0.0
        %3491 = vmatpush1.xpose.msra.mxu0 0.0
        %3492 = vmatprep.subr.mxu0 0.0
        %3493 = vmatpush1.xpose.msra.mxu0 0.0
        %3494 = vmatprep.subr.mxu0 0.0
        %3495 = vmatpush1.xpose.msra.mxu0 0.0
        %3496 = vmatprep.subr.mxu0 0.0
        %3497 = vmatpush1.xpose.msra.mxu0 0.0
        %3498 = vmatprep.subr.mxu0 0.0
        %3499 = vmatpush1.xpose.msra.mxu0 0.0
        %3500 = vmatprep.subr.mxu0 0.0
        %3501 = vmatpush1.xpose.msra.mxu0 0.0
        %3502 = vmatprep.subr.mxu0 0.0
        %3503 = vmatpush1.xpose.msra.mxu0 0.0
        %3504 = vmatprep.subr.mxu0 0.0
        %3505 = vmatpush1.xpose.msra.mxu0 0.0
        %3506 = vmatprep.subr.mxu0 0.0
        %3507 = vmatpush1.xpose.msra.mxu0 0.0
        %3508 = vmatprep.subr.mxu0 0.0
        %3509 = vmatpush1.xpose.msra.mxu0 0.0
        %3510 = vmatprep.subr.mxu0 0.0
        %3511 = vmatpush1.xpose.msra.mxu0 0.0
        %3512 = vmatprep.subr.mxu0 0.0
        %3513 = vmatpush1.xpose.msra.mxu0 0.0
        %3514 = vmatprep.subr.mxu0 0.0
        %3515 = vmatpush1.xpose.msra.mxu0 0.0
        %3516 = vmatprep.subr.mxu0 0.0
        %3517 = vmatpush1.xpose.msra.mxu0 0.0
        %3518 = vmatprep.subr.mxu0 0.0
        %3519 = vmatpush1.xpose.msra.mxu0 0.0
        %3520 = vmatprep.subr.mxu0 0.0
        %3521 = vmatpush1.xpose.msra.mxu0 0.0
        %3522 = vmatprep.subr.mxu0 0.0
        %3523 = vmatpush1.xpose.msra.mxu0 0.0
        %3524 = vmatprep.subr.mxu0 0.0
        %3525 = vmatpush1.xpose.msra.mxu0 0.0
        %3526 = vmatprep.subr.mxu0 0.0
        %3527 = vmatpush1.xpose.msra.mxu0 0.0
        %3528 = vmatprep.mubr.f32.mxu0 0.0
        %3529 = vmatmul.mubr.f32.gmra.mrb[0].mxu0 %v3459
        %v3530 = vpop.f32.mrb[0].mxu0
        %v3531 = vadd.f32 0.0, %v3530
        %v3532 = vpop.f32.mrb[0].mxu0
        %3533 = vdwg.mxu0
        %v3535 = vsel %vm1674, %v3009, 0
        %v3538 = vsel %vm1674, %v3157, 0
        %3540 = vmatprep.subr.mxu0 0.0
        %3541 = vmatpush1.xpose.msra.mxu0 %v3538
        %3542 = vmatprep.subr.mxu0 0.0
        %3543 = vmatpush1.xpose.msra.mxu0 0.0
        %3544 = vmatprep.subr.mxu0 0.0
        %3545 = vmatpush1.xpose.msra.mxu0 0.0
        %3546 = vmatprep.subr.mxu0 0.0
        %3547 = vmatpush1.xpose.msra.mxu0 0.0
        %3548 = vmatprep.subr.mxu0 0.0
        %3549 = vmatpush1.xpose.msra.mxu0 0.0
        %3550 = vmatprep.subr.mxu0 0.0
        %3551 = vmatpush1.xpose.msra.mxu0 0.0
        %3552 = vmatprep.subr.mxu0 0.0
        %3553 = vmatpush1.xpose.msra.mxu0 0.0
        %3554 = vmatprep.subr.mxu0 0.0
        %3555 = vmatpush1.xpose.msra.mxu0 0.0
        %3556 = vmatprep.subr.mxu0 0.0
        %3557 = vmatpush1.xpose.msra.mxu0 0.0
        %3558 = vmatprep.subr.mxu0 0.0
        %3559 = vmatpush1.xpose.msra.mxu0 0.0
        %3560 = vmatprep.subr.mxu0 0.0
        %3561 = vmatpush1.xpose.msra.mxu0 0.0
        %3562 = vmatprep.subr.mxu0 0.0
        %3563 = vmatpush1.xpose.msra.mxu0 0.0
        %3564 = vmatprep.subr.mxu0 0.0
        %3565 = vmatpush1.xpose.msra.mxu0 0.0
        %3566 = vmatprep.subr.mxu0 0.0
        %3567 = vmatpush1.xpose.msra.mxu0 0.0
        %3568 = vmatprep.subr.mxu0 0.0
        %3569 = vmatpush1.xpose.msra.mxu0 0.0
        %3570 = vmatprep.subr.mxu0 0.0
        %3571 = vmatpush1.xpose.msra.mxu0 0.0
        %3572 = vmatprep.subr.mxu0 0.0
        %3573 = vmatpush1.xpose.msra.mxu0 0.0
        %3574 = vmatprep.subr.mxu0 0.0
        %3575 = vmatpush1.xpose.msra.mxu0 0.0
        %3576 = vmatprep.subr.mxu0 0.0
        %3577 = vmatpush1.xpose.msra.mxu0 0.0
        %3578 = vmatprep.subr.mxu0 0.0
        %3579 = vmatpush1.xpose.msra.mxu0 0.0
        %3580 = vmatprep.subr.mxu0 0.0
        %3581 = vmatpush1.xpose.msra.mxu0 0.0
        %3582 = vmatprep.subr.mxu0 0.0
        %3583 = vmatpush1.xpose.msra.mxu0 0.0
        %3584 = vmatprep.subr.mxu0 0.0
        %3585 = vmatpush1.xpose.msra.mxu0 0.0
        %3586 = vmatprep.subr.mxu0 0.0
        %3587 = vmatpush1.xpose.msra.mxu0 0.0
        %3588 = vmatprep.subr.mxu0 0.0
        %3589 = vmatpush1.xpose.msra.mxu0 0.0
        %3590 = vmatprep.subr.mxu0 0.0
        %3591 = vmatpush1.xpose.msra.mxu0 0.0
        %3592 = vmatprep.subr.mxu0 0.0
        %3593 = vmatpush1.xpose.msra.mxu0 0.0
        %3594 = vmatprep.subr.mxu0 0.0
        %3595 = vmatpush1.xpose.msra.mxu0 0.0
        %3596 = vmatprep.subr.mxu0 0.0
        %3597 = vmatpush1.xpose.msra.mxu0 0.0
        %3598 = vmatprep.subr.mxu0 0.0
        %3599 = vmatpush1.xpose.msra.mxu0 0.0
        %3600 = vmatprep.subr.mxu0 0.0
        %3601 = vmatpush1.xpose.msra.mxu0 0.0
        %3602 = vmatprep.subr.mxu0 0.0
        %3603 = vmatpush1.xpose.msra.mxu0 0.0
        %3604 = vmatprep.mubr.f32.mxu0 0.0
        %3605 = vmatmul.mubr.f32.gmra.mrb[0].mxu0 %v3535
        %v3606 = vpop.f32.mrb[0].mxu0
        %v3607 = vadd.f32 0.0, %v3606
        %v3608 = vpop.f32.mrb[0].mxu0
        %3609 = vdwg.mxu0
        %v3610 = vmul.f32 %v3379, 0.35355338
        %v3611 = vmul.f32 %v3455, 0.35355338
        %v3612 = vmul.f32 %v3531, 0.35355338
        %v3613 = vmul.f32 %v3607, 0.35355338
        %v3614 = vsel %vm1674, %v3610, -inf
        %3615 = vmax.xlane.f32.xlu0 %v3614
        %v3616 = vpop.xlane.xlu0 %3615
        %v3617 = vsel %vm1674, %v3611, -inf
        %3618 = vmax.xlane.f32.xlu0 %v3617
        %v3619 = vpop.xlane.xlu0 %3618
        %v3620 = vsel %vm1674, %v3612, -inf
        %3621 = vmax.xlane.f32.xlu0 %v3620
        %v3622 = vpop.xlane.xlu0 %3621
        %v3623 = vsel %vm1674, %v3613, -inf
        %3624 = vmax.xlane.f32.xlu0 %v3623
        %v3625 = vpop.xlane.xlu0 %3624
        %v3626 = vsub.f32 %v3610, %v3616
        %v3627 = vsub.f32 %v3611, %v3619
        %v3628 = vsub.f32 %v3612, %v3622
        %v3629 = vsub.f32 %v3613, %v3625
        %v3630 = vmul.f32 %v3626, 1.442695
        %v3631 = vpow.pop %v3630
        %v3632 = vmul.f32 %v3627, 1.442695
        %v3633 = vpow.pop %v3632
        %v3634 = vmul.f32 %v3628, 1.442695
        %v3635 = vpow.pop %v3634
        %v3636 = vmul.f32 %v3629, 1.442695
        %v3637 = vpow.pop %v3636
        %v3638 = vsel %vm1674, %v3631, 0.0
        %3639 = vadd.xlane.f32.xlu0 %v3638
        %v3640 = vpop.xlane.xlu0 %3639
        %v3641 = vsel %vm1674, %v3633, 0.0
        %3642 = vadd.xlane.f32.xlu0 %v3641
        %v3643 = vpop.xlane.xlu0 %3642
        %v3644 = vsel %vm1674, %v3635, 0.0
        %3645 = vadd.xlane.f32.xlu0 %v3644
        %v3646 = vpop.xlane.xlu0 %3645
        %v3647 = vsel %vm1674, %v3637, 0.0
        %3648 = vadd.xlane.f32.xlu0 %v3647
        %v3649 = vpop.xlane.xlu0 %3648
        %v3650 = vrcp.pop %v3640
        %v3651 = vrcp.pop %v3643
        %v3652 = vrcp.pop %v3646
        %v3653 = vrcp.pop %v3649
        %v3654 = vmul.f32 %v3631, %v3650
        %v3655 = vmul.f32 %v3633, %v3651
        %v3656 = vmul.f32 %v3635, %v3652
        %v3657 = vmul.f32 %v3637, %v3653
        %v3659 = vsel %vm1674, %v3654, 0
        %3661 = vmatprep.subr.mxu0 0.0
        %3662 = vmatpush1.msra.mxu0 %v3302
        %3663 = vmatprep.subr.mxu0 0.0
        %3664 = vmatpush1.msra.mxu0 0.0
        %3665 = vmatprep.subr.mxu0 0.0
        %3666 = vmatpush1.msra.mxu0 0.0
        %3667 = vmatprep.subr.mxu0 0.0
        %3668 = vmatpush1.msra.mxu0 0.0
        %3669 = vmatprep.subr.mxu0 0.0
        %3670 = vmatpush1.msra.mxu0 0.0
        %3671 = vmatprep.subr.mxu0 0.0
        %3672 = vmatpush1.msra.mxu0 0.0
        %3673 = vmatprep.subr.mxu0 0.0
        %3674 = vmatpush1.msra.mxu0 0.0
        %3675 = vmatprep.subr.mxu0 0.0
        %3676 = vmatpush1.msra.mxu0 0.0
        %3677 = vmatprep.subr.mxu0 0.0
        %3678 = vmatpush1.msra.mxu0 0.0
        %3679 = vmatprep.subr.mxu0 0.0
        %3680 = vmatpush1.msra.mxu0 0.0
        %3681 = vmatprep.subr.mxu0 0.0
        %3682 = vmatpush1.msra.mxu0 0.0
        %3683 = vmatprep.subr.mxu0 0.0
        %3684 = vmatpush1.msra.mxu0 0.0
        %3685 = vmatprep.subr.mxu0 0.0
        %3686 = vmatpush1.msra.mxu0 0.0
        %3687 = vmatprep.subr.mxu0 0.0
        %3688 = vmatpush1.msra.mxu0 0.0
        %3689 = vmatprep.subr.mxu0 0.0
        %3690 = vmatpush1.msra.mxu0 0.0
        %3691 = vmatprep.subr.mxu0 0.0
        %3692 = vmatpush1.msra.mxu0 0.0
        %3693 = vmatprep.subr.mxu0 0.0
        %3694 = vmatpush1.msra.mxu0 0.0
        %3695 = vmatprep.subr.mxu0 0.0
        %3696 = vmatpush1.msra.mxu0 0.0
        %3697 = vmatprep.subr.mxu0 0.0
        %3698 = vmatpush1.msra.mxu0 0.0
        %3699 = vmatprep.subr.mxu0 0.0
        %3700 = vmatpush1.msra.mxu0 0.0
        %3701 = vmatprep.subr.mxu0 0.0
        %3702 = vmatpush1.msra.mxu0 0.0
        %3703 = vmatprep.subr.mxu0 0.0
        %3704 = vmatpush1.msra.mxu0 0.0
        %3705 = vmatprep.subr.mxu0 0.0
        %3706 = vmatpush1.msra.mxu0 0.0
        %3707 = vmatprep.subr.mxu0 0.0
        %3708 = vmatpush1.msra.mxu0 0.0
        %3709 = vmatprep.subr.mxu0 0.0
        %3710 = vmatpush1.msra.mxu0 0.0
        %3711 = vmatprep.subr.mxu0 0.0
        %3712 = vmatpush1.msra.mxu0 0.0
        %3713 = vmatprep.subr.mxu0 0.0
        %3714 = vmatpush1.msra.mxu0 0.0
        %3715 = vmatprep.subr.mxu0 0.0
        %3716 = vmatpush1.msra.mxu0 0.0
        %3717 = vmatprep.subr.mxu0 0.0
        %3718 = vmatpush1.msra.mxu0 0.0
        %3719 = vmatprep.subr.mxu0 0.0
        %3720 = vmatpush1.msra.mxu0 0.0
        %3721 = vmatprep.subr.mxu0 0.0
        %3722 = vmatpush1.msra.mxu0 0.0
        %3723 = vmatprep.subr.mxu0 0.0
        %3724 = vmatpush1.msra.mxu0 0.0
        %3725 = vmatprep.mubr.f32.mxu0 0.0
        %3726 = vmatmul.mubr.f32.gmra.mrb[0].mxu0 %v3659
        %v3727 = vpop.f32.mrb[0].mxu0
        %v3728 = vadd.f32 0.0, %v3727
        %v3729 = vpop.f32.mrb[0].mxu0
        %3730 = vdwg.mxu0
        %v3732 = vsel %vm1674, %v3655, 0
        %3734 = vmatprep.subr.mxu0 0.0
        %3735 = vmatpush1.msra.mxu0 %v3303
        %3736 = vmatprep.subr.mxu0 0.0
        %3737 = vmatpush1.msra.mxu0 0.0
        %3738 = vmatprep.subr.mxu0 0.0
        %3739 = vmatpush1.msra.mxu0 0.0
        %3740 = vmatprep.subr.mxu0 0.0
        %3741 = vmatpush1.msra.mxu0 0.0
        %3742 = vmatprep.subr.mxu0 0.0
        %3743 = vmatpush1.msra.mxu0 0.0
        %3744 = vmatprep.subr.mxu0 0.0
        %3745 = vmatpush1.msra.mxu0 0.0
        %3746 = vmatprep.subr.mxu0 0.0
        %3747 = vmatpush1.msra.mxu0 0.0
        %3748 = vmatprep.subr.mxu0 0.0
        %3749 = vmatpush1.msra.mxu0 0.0
        %3750 = vmatprep.subr.mxu0 0.0
        %3751 = vmatpush1.msra.mxu0 0.0
        %3752 = vmatprep.subr.mxu0 0.0
        %3753 = vmatpush1.msra.mxu0 0.0
        %3754 = vmatprep.subr.mxu0 0.0
        %3755 = vmatpush1.msra.mxu0 0.0
        %3756 = vmatprep.subr.mxu0 0.0
        %3757 = vmatpush1.msra.mxu0 0.0
        %3758 = vmatprep.subr.mxu0 0.0
        %3759 = vmatpush1.msra.mxu0 0.0
        %3760 = vmatprep.subr.mxu0 0.0
        %3761 = vmatpush1.msra.mxu0 0.0
        %3762 = vmatprep.subr.mxu0 0.0
        %3763 = vmatpush1.msra.mxu0 0.0
        %3764 = vmatprep.subr.mxu0 0.0
        %3765 = vmatpush1.msra.mxu0 0.0
        %3766 = vmatprep.subr.mxu0 0.0
        %3767 = vmatpush1.msra.mxu0 0.0
        %3768 = vmatprep.subr.mxu0 0.0
        %3769 = vmatpush1.msra.mxu0 0.0
        %3770 = vmatprep.subr.mxu0 0.0
        %3771 = vmatpush1.msra.mxu0 0.0
        %3772 = vmatprep.subr.mxu0 0.0
        %3773 = vmatpush1.msra.mxu0 0.0
        %3774 = vmatprep.subr.mxu0 0.0
        %3775 = vmatpush1.msra.mxu0 0.0
        %3776 = vmatprep.subr.mxu0 0.0
        %3777 = vmatpush1.msra.mxu0 0.0
        %3778 = vmatprep.subr.mxu0 0.0
        %3779 = vmatpush1.msra.mxu0 0.0
        %3780 = vmatprep.subr.mxu0 0.0
        %3781 = vmatpush1.msra.mxu0 0.0
        %3782 = vmatprep.subr.mxu0 0.0
        %3783 = vmatpush1.msra.mxu0 0.0
        %3784 = vmatprep.subr.mxu0 0.0
        %3785 = vmatpush1.msra.mxu0 0.0
        %3786 = vmatprep.subr.mxu0 0.0
        %3787 = vmatpush1.msra.mxu0 0.0
        %3788 = vmatprep.subr.mxu0 0.0
        %3789 = vmatpush1.msra.mxu0 0.0
        %3790 = vmatprep.subr.mxu0 0.0
        %3791 = vmatpush1.msra.mxu0 0.0
        %3792 = vmatprep.subr.mxu0 0.0
        %3793 = vmatpush1.msra.mxu0 0.0
        %3794 = vmatprep.subr.mxu0 0.0
        %3795 = vmatpush1.msra.mxu0 0.0
        %3796 = vmatprep.subr.mxu0 0.0
        %3797 = vmatpush1.msra.mxu0 0.0
        %3798 = vmatprep.mubr.f32.mxu0 0.0
        %3799 = vmatmul.mubr.f32.gmra.mrb[0].mxu0 %v3732
        %v3800 = vpop.f32.mrb[0].mxu0
        %v3801 = vadd.f32 0.0, %v3800
        %v3802 = vpop.f32.mrb[0].mxu0
        %3803 = vdwg.mxu0
        %v3805 = vsel %vm1674, %v3656, 0
        %3807 = vmatprep.subr.mxu0 0.0
        %3808 = vmatpush1.msra.mxu0 %v3304
        %3809 = vmatprep.subr.mxu0 0.0
        %3810 = vmatpush1.msra.mxu0 0.0
        %3811 = vmatprep.subr.mxu0 0.0
        %3812 = vmatpush1.msra.mxu0 0.0
        %3813 = vmatprep.subr.mxu0 0.0
        %3814 = vmatpush1.msra.mxu0 0.0
        %3815 = vmatprep.subr.mxu0 0.0
        %3816 = vmatpush1.msra.mxu0 0.0
        %3817 = vmatprep.subr.mxu0 0.0
        %3818 = vmatpush1.msra.mxu0 0.0
        %3819 = vmatprep.subr.mxu0 0.0
        %3820 = vmatpush1.msra.mxu0 0.0
        %3821 = vmatprep.subr.mxu0 0.0
        %3822 = vmatpush1.msra.mxu0 0.0
        %3823 = vmatprep.subr.mxu0 0.0
        %3824 = vmatpush1.msra.mxu0 0.0
        %3825 = vmatprep.subr.mxu0 0.0
        %3826 = vmatpush1.msra.mxu0 0.0
        %3827 = vmatprep.subr.mxu0 0.0
        %3828 = vmatpush1.msra.mxu0 0.0
        %3829 = vmatprep.subr.mxu0 0.0
        %3830 = vmatpush1.msra.mxu0 0.0
        %3831 = vmatprep.subr.mxu0 0.0
        %3832 = vmatpush1.msra.mxu0 0.0
        %3833 = vmatprep.subr.mxu0 0.0
        %3834 = vmatpush1.msra.mxu0 0.0
        %3835 = vmatprep.subr.mxu0 0.0
        %3836 = vmatpush1.msra.mxu0 0.0
        %3837 = vmatprep.subr.mxu0 0.0
        %3838 = vmatpush1.msra.mxu0 0.0
        %3839 = vmatprep.subr.mxu0 0.0
        %3840 = vmatpush1.msra.mxu0 0.0
        %3841 = vmatprep.subr.mxu0 0.0
        %3842 = vmatpush1.msra.mxu0 0.0
        %3843 = vmatprep.subr.mxu0 0.0
        %3844 = vmatpush1.msra.mxu0 0.0
        %3845 = vmatprep.subr.mxu0 0.0
        %3846 = vmatpush1.msra.mxu0 0.0
        %3847 = vmatprep.subr.mxu0 0.0
        %3848 = vmatpush1.msra.mxu0 0.0
        %3849 = vmatprep.subr.mxu0 0.0
        %3850 = vmatpush1.msra.mxu0 0.0
        %3851 = vmatprep.subr.mxu0 0.0
        %3852 = vmatpush1.msra.mxu0 0.0
        %3853 = vmatprep.subr.mxu0 0.0
        %3854 = vmatpush1.msra.mxu0 0.0
        %3855 = vmatprep.subr.mxu0 0.0
        %3856 = vmatpush1.msra.mxu0 0.0
        %3857 = vmatprep.subr.mxu0 0.0
        %3858 = vmatpush1.msra.mxu0 0.0
        %3859 = vmatprep.subr.mxu0 0.0
        %3860 = vmatpush1.msra.mxu0 0.0
        %3861 = vmatprep.subr.mxu0 0.0
        %3862 = vmatpush1.msra.mxu0 0.0
        %3863 = vmatprep.subr.mxu0 0.0
        %3864 = vmatpush1.msra.mxu0 0.0
        %3865 = vmatprep.subr.mxu0 0.0
        %3866 = vmatpush1.msra.mxu0 0.0
        %3867 = vmatprep.subr.mxu0 0.0
        %3868 = vmatpush1.msra.mxu0 0.0
        %3869 = vmatprep.subr.mxu0 0.0
        %3870 = vmatpush1.msra.mxu0 0.0
        %3871 = vmatprep.mubr.f32.mxu0 0.0
        %3872 = vmatmul.mubr.f32.gmra.mrb[0].mxu0 %v3805
        %v3873 = vpop.f32.mrb[0].mxu0
        %v3874 = vadd.f32 0.0, %v3873
        %v3875 = vpop.f32.mrb[0].mxu0
        %3876 = vdwg.mxu0
        %v3878 = vsel %vm1674, %v3657, 0
        %3880 = vmatprep.subr.mxu0 0.0
        %3881 = vmatpush1.msra.mxu0 %v3305
        %3882 = vmatprep.subr.mxu0 0.0
        %3883 = vmatpush1.msra.mxu0 0.0
        %3884 = vmatprep.subr.mxu0 0.0
        %3885 = vmatpush1.msra.mxu0 0.0
        %3886 = vmatprep.subr.mxu0 0.0
        %3887 = vmatpush1.msra.mxu0 0.0
        %3888 = vmatprep.subr.mxu0 0.0
        %3889 = vmatpush1.msra.mxu0 0.0
        %3890 = vmatprep.subr.mxu0 0.0
        %3891 = vmatpush1.msra.mxu0 0.0
        %3892 = vmatprep.subr.mxu0 0.0
        %3893 = vmatpush1.msra.mxu0 0.0
        %3894 = vmatprep.subr.mxu0 0.0
        %3895 = vmatpush1.msra.mxu0 0.0
        %3896 = vmatprep.subr.mxu0 0.0
        %3897 = vmatpush1.msra.mxu0 0.0
        %3898 = vmatprep.subr.mxu0 0.0
        %3899 = vmatpush1.msra.mxu0 0.0
        %3900 = vmatprep.subr.mxu0 0.0
        %3901 = vmatpush1.msra.mxu0 0.0
        %3902 = vmatprep.subr.mxu0 0.0
        %3903 = vmatpush1.msra.mxu0 0.0
        %3904 = vmatprep.subr.mxu0 0.0
        %3905 = vmatpush1.msra.mxu0 0.0
        %3906 = vmatprep.subr.mxu0 0.0
        %3907 = vmatpush1.msra.mxu0 0.0
        %3908 = vmatprep.subr.mxu0 0.0
        %3909 = vmatpush1.msra.mxu0 0.0
        %3910 = vmatprep.subr.mxu0 0.0
        %3911 = vmatpush1.msra.mxu0 0.0
        %3912 = vmatprep.subr.mxu0 0.0
        %3913 = vmatpush1.msra.mxu0 0.0
        %3914 = vmatprep.subr.mxu0 0.0
        %3915 = vmatpush1.msra.mxu0 0.0
        %3916 = vmatprep.subr.mxu0 0.0
        %3917 = vmatpush1.msra.mxu0 0.0
        %3918 = vmatprep.subr.mxu0 0.0
        %3919 = vmatpush1.msra.mxu0 0.0
        %3920 = vmatprep.subr.mxu0 0.0
        %3921 = vmatpush1.msra.mxu0 0.0
        %3922 = vmatprep.subr.mxu0 0.0
        %3923 = vmatpush1.msra.mxu0 0.0
        %3924 = vmatprep.subr.mxu0 0.0
        %3925 = vmatpush1.msra.mxu0 0.0
        %3926 = vmatprep.subr.mxu0 0.0
        %3927 = vmatpush1.msra.mxu0 0.0
        %3928 = vmatprep.subr.mxu0 0.0
        %3929 = vmatpush1.msra.mxu0 0.0
        %3930 = vmatprep.subr.mxu0 0.0
        %3931 = vmatpush1.msra.mxu0 0.0
        %3932 = vmatprep.subr.mxu0 0.0
        %3933 = vmatpush1.msra.mxu0 0.0
        %3934 = vmatprep.subr.mxu0 0.0
        %3935 = vmatpush1.msra.mxu0 0.0
        %3936 = vmatprep.subr.mxu0 0.0
        %3937 = vmatpush1.msra.mxu0 0.0
        %3938 = vmatprep.subr.mxu0 0.0
        %3939 = vmatpush1.msra.mxu0 0.0
        %3940 = vmatprep.subr.mxu0 0.0
        %3941 = vmatpush1.msra.mxu0 0.0
        %3942 = vmatprep.subr.mxu0 0.0
        %3943 = vmatpush1.msra.mxu0 0.0
        %3944 = vmatprep.mubr.f32.mxu0 0.0
        %3945 = vmatmul.mubr.f32.gmra.mrb[0].mxu0 %v3878
        %v3946 = vpop.f32.mrb[0].mxu0
        %v3947 = vadd.f32 0.0, %v3946
        %v3948 = vpop.f32.mrb[0].mxu0
        %3949 = vdwg.mxu0
        %v3950 = vcombine.low %v3728, %v3874
        %v3951 = vcombine.high %v3728, %v3874
        %v3953 = vunpack.c.l.s4 1983009808
        %v3954 = vunpack.c.0.s8 %v3953
        %v3955 = vlaneseq
        %v3956 = vshrl.u32 %v3955, 7
        %v3957 = vsub.s32 %v3954, %v3956
        %v3958 = vrot.slane %v3950, %v3957
        %v3960 = vunpack.c.l.s4 1983009808
        %v3961 = vunpack.c.0.s8 %v3960
        %v3962 = vlaneseq
        %v3963 = vshrl.u32 %v3962, 7
        %v3964 = vsub.s32 %v3961, %v3963
        %v3965 = vrot.slane %v3951, %v3964
        %v3966 = vcombine.low %v3801, %v3947
        %v3967 = vcombine.high %v3801, %v3947
        %v3969 = vunpack.c.l.s4 1983009808
        %v3970 = vunpack.c.0.s8 %v3969
        %v3971 = vlaneseq
        %v3972 = vshrl.u32 %v3971, 7
        %v3973 = vsub.s32 %v3970, %v3972
        %v3974 = vrot.slane %v3966, %v3973
        %v3976 = vunpack.c.l.s4 1983009808
        %v3977 = vunpack.c.0.s8 %v3976
        %v3978 = vlaneseq
        %v3979 = vshrl.u32 %v3978, 7
        %v3980 = vsub.s32 %v3977, %v3979
        %v3981 = vrot.slane %v3967, %v3980
        %v3982 = vcombine.low %v3958, %v3974
        %v3983 = vcombine.high %v3958, %v3974
        %v3985 = vunpack.c.l.s4 1934713408
        %v3986 = vunpack.c.0.s8 %v3985
        %v3987 = vlaneseq
        %v3988 = vshrl.u32 %v3987, 7
        %v3989 = vsub.s32 %v3986, %v3988
        %v3990 = vrot.slane %v3982, %v3989
        %v3992 = vunpack.c.l.s4 1934713408
        %v3993 = vunpack.c.0.s8 %v3992
        %v3994 = vlaneseq
        %v3995 = vshrl.u32 %v3994, 7
        %v3996 = vsub.s32 %v3993, %v3995
        %v3997 = vrot.slane %v3983, %v3996
        %v3998 = vcombine.low %v3965, %v3981
        %v3999 = vcombine.high %v3965, %v3981
        %v4001 = vunpack.c.l.s4 1934713408
        %v4002 = vunpack.c.0.s8 %v4001
        %v4003 = vlaneseq
        %v4004 = vshrl.u32 %v4003, 7
        %v4005 = vsub.s32 %v4002, %v4004
        %v4006 = vrot.slane %v3998, %v4005
        %v4008 = vunpack.c.l.s4 1934713408
        %v4009 = vunpack.c.0.s8 %v4008
        %v4010 = vlaneseq
        %v4011 = vshrl.u32 %v4010, 7
        %v4012 = vsub.s32 %v4009, %v4011
        %v4013 = vrot.slane %v3999, %v4012
        %v4014 = vcombine.high %v3990, 0.0
        %v4015 = vcombine.high %v3997, 0.0
        %v4016 = vcombine.high %v4006, 0.0
        %v4017 = vcombine.high %v4013, 0.0
        %v4018 = vcombine.low %v3990, %v3997
        %v4020 = vunpack.c.l.s4 1983009808
        %v4021 = vunpack.c.0.s8 %v4020
        %v4022 = vlaneseq
        %v4023 = vshrl.u32 %v4022, 7
        %v4024 = vsub.s32 %v4021, %v4023
        %v4025 = vrot.slane %v4018, %v4024
        %v4026 = vcombine.low %v4014, %v4015
        %v4028 = vunpack.c.l.s4 1983009808
        %v4029 = vunpack.c.0.s8 %v4028
        %v4030 = vlaneseq
        %v4031 = vshrl.u32 %v4030, 7
        %v4032 = vsub.s32 %v4029, %v4031
        %v4033 = vrot.slane %v4026, %v4032
        %v4034 = vcombine.low %v4006, %v4013
        %v4036 = vunpack.c.l.s4 1983009808
        %v4037 = vunpack.c.0.s8 %v4036
        %v4038 = vlaneseq
        %v4039 = vshrl.u32 %v4038, 7
        %v4040 = vsub.s32 %v4037, %v4039
        %v4041 = vrot.slane %v4034, %v4040
        %v4042 = vcombine.low %v4016, %v4017
        %v4044 = vunpack.c.l.s4 1983009808
        %v4045 = vunpack.c.0.s8 %v4044
        %v4046 = vlaneseq
        %v4047 = vshrl.u32 %v4046, 7
        %v4048 = vsub.s32 %v4045, %v4047
        %v4049 = vrot.slane %v4042, %v4048
        %v4050 = vcombine.low %v4025, %v4033
        %v4051 = vcombine.high %v4025, %v4033
        %v4053 = vunpack.c.l.s4 1934713408
        %v4054 = vunpack.c.0.s8 %v4053
        %v4055 = vlaneseq
        %v4056 = vshrl.u32 %v4055, 7
        %v4057 = vsub.s32 %v4054, %v4056
        %v4058 = vrot.slane %v4050, %v4057
        %v4060 = vunpack.c.l.s4 1934713408
        %v4061 = vunpack.c.0.s8 %v4060
        %v4062 = vlaneseq
        %v4063 = vshrl.u32 %v4062, 7
        %v4064 = vsub.s32 %v4061, %v4063
        %v4065 = vrot.slane %v4051, %v4064
        %v4066 = vcombine.low %v4041, %v4049
        %v4067 = vcombine.high %v4041, %v4049
        %v4069 = vunpack.c.l.s4 1934713408
        %v4070 = vunpack.c.0.s8 %v4069
        %v4071 = vlaneseq
        %v4072 = vshrl.u32 %v4071, 7
        %v4073 = vsub.s32 %v4070, %v4072
        %v4074 = vrot.slane %v4066, %v4073
        %v4076 = vunpack.c.l.s4 1934713408
        %v4077 = vunpack.c.0.s8 %v4076
        %v4078 = vlaneseq
        %v4079 = vshrl.u32 %v4078, 7
        %v4080 = vsub.s32 %v4077, %v4079
        %v4081 = vrot.slane %v4067, %v4080
        %v4082 = vcombine.low %v4058, %v4074
        %v4083 = vcombine.high %v4058, %v4074
        %v4084 = vcombine.low %v4065, %v4081
        %v4085 = vcombine.high %v4065, %v4081
        %4087 = vrot.lane.b32.xlu0 %v4083, 8
        %v4088 = vpop.permute.xlu0 %4087
        %4091 = vrot.lane.b32.xlu0 %v4084, 16
        %v4092 = vpop.permute.xlu0 %4091
        %4095 = vrot.lane.b32.xlu0 %v4085, 24
        %v4096 = vpop.permute.xlu0 %4095
        %v4098 = vsel %vm1674, %v4082, %v4088
        %v4099 = vsel %vm2468, %v4098, %v4092
        %v4100 = vsel %vm2470, %v4099, %v4096
        %s4101 = scalar_lea.vmem [#allocation14], 32
        %v4102 = vld [vmem:[%s4101] sm:$0xff]
        %v4103 = vld [vmem:[%s4101 + $0x8] sm:$0xff]
        %v4104 = vld [vmem:[%s4101 + $0x10] sm:$0xff]
        %v4105 = vld [vmem:[%s4101 + $0x18] sm:$0xff]
        %v4106 = vlaneseq
        %v4107 = vshrl.u32 %v4106, 7
        %v4108 = vsub.s32 4, %v4107
        %v4109 = vrot.slane %v2754, %v4108
        %v4111 = vsel %vm804, %v4100, 0
        %4113 = vmatprep.subr.mxu0 0.0
        %4114 = vmatpush1.msra.mxu0 %v4102
        %4115 = vmatprep.subr.mxu0 0.0
        %4116 = vmatpush1.msra.mxu0 %v4103
        %4117 = vmatprep.subr.mxu0 0.0
        %4118 = vmatpush1.msra.mxu0 %v4104
        %4119 = vmatprep.subr.mxu0 0.0
        %4120 = vmatpush1.msra.mxu0 %v4105
        %4121 = vmatprep.subr.mxu0 0.0
        %4122 = vmatpush1.msra.mxu0 0.0
        %4123 = vmatprep.subr.mxu0 0.0
        %4124 = vmatpush1.msra.mxu0 0.0
        %4125 = vmatprep.subr.mxu0 0.0
        %4126 = vmatpush1.msra.mxu0 0.0
        %4127 = vmatprep.subr.mxu0 0.0
        %4128 = vmatpush1.msra.mxu0 0.0
        %4129 = vmatprep.subr.mxu0 0.0
        %4130 = vmatpush1.msra.mxu0 0.0
        %4131 = vmatprep.subr.mxu0 0.0
        %4132 = vmatpush1.msra.mxu0 0.0
        %4133 = vmatprep.subr.mxu0 0.0
        %4134 = vmatpush1.msra.mxu0 0.0
        %4135 = vmatprep.subr.mxu0 0.0
        %4136 = vmatpush1.msra.mxu0 0.0
        %4137 = vmatprep.subr.mxu0 0.0
        %4138 = vmatpush1.msra.mxu0 0.0
        %4139 = vmatprep.subr.mxu0 0.0
        %4140 = vmatpush1.msra.mxu0 0.0
        %4141 = vmatprep.subr.mxu0 0.0
        %4142 = vmatpush1.msra.mxu0 0.0
        %4143 = vmatprep.subr.mxu0 0.0
        %4144 = vmatpush1.msra.mxu0 0.0
        %4145 = vmatprep.subr.mxu0 0.0
        %4146 = vmatpush1.msra.mxu0 0.0
        %4147 = vmatprep.subr.mxu0 0.0
        %4148 = vmatpush1.msra.mxu0 0.0
        %4149 = vmatprep.subr.mxu0 0.0
        %4150 = vmatpush1.msra.mxu0 0.0
        %4151 = vmatprep.subr.mxu0 0.0
        %4152 = vmatpush1.msra.mxu0 0.0
        %4153 = vmatprep.subr.mxu0 0.0
        %4154 = vmatpush1.msra.mxu0 0.0
        %4155 = vmatprep.subr.mxu0 0.0
        %4156 = vmatpush1.msra.mxu0 0.0
        %4157 = vmatprep.subr.mxu0 0.0
        %4158 = vmatpush1.msra.mxu0 0.0
        %4159 = vmatprep.subr.mxu0 0.0
        %4160 = vmatpush1.msra.mxu0 0.0
        %4161 = vmatprep.subr.mxu0 0.0
        %4162 = vmatpush1.msra.mxu0 0.0
        %4163 = vmatprep.subr.mxu0 0.0
        %4164 = vmatpush1.msra.mxu0 0.0
        %4165 = vmatprep.subr.mxu0 0.0
        %4166 = vmatpush1.msra.mxu0 0.0
        %4167 = vmatprep.subr.mxu0 0.0
        %4168 = vmatpush1.msra.mxu0 0.0
        %4169 = vmatprep.subr.mxu0 0.0
        %4170 = vmatpush1.msra.mxu0 0.0
        %4171 = vmatprep.subr.mxu0 0.0
        %4172 = vmatpush1.msra.mxu0 0.0
        %4173 = vmatprep.subr.mxu0 0.0
        %4174 = vmatpush1.msra.mxu0 0.0
        %4175 = vmatprep.subr.mxu0 0.0
        %4176 = vmatpush1.msra.mxu0 0.0
        %4177 = vmatprep.mubr.f32.mxu0 0.0
        %4178 = vmatmul.mubr.f32.gmra.mrb[0].mxu0 %v4111
        %v4179 = vpop.f32.mrb[0].mxu0
        %v4180 = vadd.f32 %v4109, %v4179
        %v4181 = vpop.f32.mrb[0].mxu0
        %4182 = vdwg.mxu0
        %v4183 = vadd.f32 %v2752, %v4180
        %v4184 = vsel %vm804, %v4183, 0.0
        %4185 = vadd.xlane.f32.xlu0 %v4184
        %v4186 = vpop.xlane.xlu0 %4185
        %v4187 = vmul.f32 %v4186, %v1103
        %v4188 = vsub.f32 %v4183, %v4187
        %v4189 = vmul.f32 %v4188, %v4188
        %v4190 = vsel %vm804, %v4189, 0.0
        %4191 = vadd.xlane.f32.xlu0 %v4190
        %v4192 = vpop.xlane.xlu0 %4191
        %v4193 = vmul.f32 %v4192, %v1103
        %v4194 = vadd.f32 %v4193, 1e-12
        %v4195 = vrsqrt.pop %v4194
        %v4196 = vmul.f32 %v4188, %v4195
        %v4197 = vlaneseq
        %v4198 = vshrl.u32 %v4197, 7
        %v4199 = vsub.s32 2, %v4198
        %v4200 = vrot.slane %v2754, %v4199
        %v4201 = vmul.f32 %v4200, %v4196
        %v4202 = vlaneseq
        %v4203 = vshrl.u32 %v4202, 7
        %v4204 = vsub.s32 3, %v4203
        %v4205 = vrot.slane %v2754, %v4204
        %v4206 = vadd.f32 %v4201, %v4205
        %s4207 = scalar_lea.vmem [#allocation15], 32
        %v4208 = vld [vmem:[%s4207] sm:$0xff]
        %v4209 = vld [vmem:[%s4207 + $0x8] sm:$0xff]
        %v4210 = vld [vmem:[%s4207 + $0x10] sm:$0xff]
        %v4211 = vld [vmem:[%s4207 + $0x18] sm:$0xff]
        %s4212 = scalar_lea.vmem [#allocation17], 1
        %v4213 = vld [vmem:[%s4212] sm:$0x1]
        %v4215 = vlaneseq
        %v4216 = vshrl.u32 %v4215, 7
        %v4217 = vsub.s32 0, %v4216
        %v4218 = vrot.slane %v4213, %v4217
        %v4221 = vsel %vm804, %v4206, 0
        %4223 = vmatprep.subr.mxu0 0.0
        %4224 = vmatpush1.msra.mxu0 %v4208
        %4225 = vmatprep.subr.mxu0 0.0
        %4226 = vmatpush1.msra.mxu0 %v4209
        %4227 = vmatprep.subr.mxu0 0.0
        %4228 = vmatpush1.msra.mxu0 %v4210
        %4229 = vmatprep.subr.mxu0 0.0
        %4230 = vmatpush1.msra.mxu0 %v4211
        %4231 = vmatprep.subr.mxu0 0.0
        %4232 = vmatpush1.msra.mxu0 0.0
        %4233 = vmatprep.subr.mxu0 0.0
        %4234 = vmatpush1.msra.mxu0 0.0
        %4235 = vmatprep.subr.mxu0 0.0
        %4236 = vmatpush1.msra.mxu0 0.0
        %4237 = vmatprep.subr.mxu0 0.0
        %4238 = vmatpush1.msra.mxu0 0.0
        %4239 = vmatprep.subr.mxu0 0.0
        %4240 = vmatpush1.msra.mxu0 0.0
        %4241 = vmatprep.subr.mxu0 0.0
        %4242 = vmatpush1.msra.mxu0 0.0
        %4243 = vmatprep.subr.mxu0 0.0
        %4244 = vmatpush1.msra.mxu0 0.0
        %4245 = vmatprep.subr.mxu0 0.0
        %4246 = vmatpush1.msra.mxu0 0.0
        %4247 = vmatprep.subr.mxu0 0.0
        %4248 = vmatpush1.msra.mxu0 0.0
        %4249 = vmatprep.subr.mxu0 0.0
        %4250 = vmatpush1.msra.mxu0 0.0
        %4251 = vmatprep.subr.mxu0 0.0
        %4252 = vmatpush1.msra.mxu0 0.0
        %4253 = vmatprep.subr.mxu0 0.0
        %4254 = vmatpush1.msra.mxu0 0.0
        %4255 = vmatprep.subr.mxu0 0.0
        %4256 = vmatpush1.msra.mxu0 0.0
        %4257 = vmatprep.subr.mxu0 0.0
        %4258 = vmatpush1.msra.mxu0 0.0
        %4259 = vmatprep.subr.mxu0 0.0
        %4260 = vmatpush1.msra.mxu0 0.0
        %4261 = vmatprep.subr.mxu0 0.0
        %4262 = vmatpush1.msra.mxu0 0.0
        %4263 = vmatprep.subr.mxu0 0.0
        %4264 = vmatpush1.msra.mxu0 0.0
        %4265 = vmatprep.subr.mxu0 0.0
        %4266 = vmatpush1.msra.mxu0 0.0
        %4267 = vmatprep.subr.mxu0 0.0
        %4268 = vmatpush1.msra.mxu0 0.0
        %4269 = vmatprep.subr.mxu0 0.0
        %4270 = vmatpush1.msra.mxu0 0.0
        %4271 = vmatprep.subr.mxu0 0.0
        %4272 = vmatpush1.msra.mxu0 0.0
        %4273 = vmatprep.subr.mxu0 0.0
        %4274 = vmatpush1.msra.mxu0 0.0
        %4275 = vmatprep.subr.mxu0 0.0
        %4276 = vmatpush1.msra.mxu0 0.0
        %4277 = vmatprep.subr.mxu0 0.0
        %4278 = vmatpush1.msra.mxu0 0.0
        %4279 = vmatprep.subr.mxu0 0.0
        %4280 = vmatpush1.msra.mxu0 0.0
        %4281 = vmatprep.subr.mxu0 0.0
        %4282 = vmatpush1.msra.mxu0 0.0
        %4283 = vmatprep.subr.mxu0 0.0
        %4284 = vmatpush1.msra.mxu0 0.0
        %4285 = vmatprep.subr.mxu0 0.0
        %4286 = vmatpush1.msra.mxu0 0.0
        %4287 = vmatprep.mubr.f32.mxu0 0.0
        %4288 = vmatmul.mubr.f32.gmra.mrb[0].mxu0 %v4221
        %v4289 = vpop.f32.mrb[0].mxu0
        %v4290 = vadd.f32 %v4218, %v4289
        %v4291 = vpop.f32.mrb[0].mxu0
        %4292 = vdwg.mxu0
        %v4293 = vmul.f32 %v4290, 0.5
        %v4294 = vmul.f32 %v4290, %v879
        %v4295 = verf.f32.pop %v4294
        %v4296 = vadd.f32 %v4295, 1.0
        %v4297 = vmul.f32 %v4293, %v4296
        %s4298 = scalar_lea.vmem %s13, 64
        %v4299 = vld [vmem:[%s4298] sm:$0xff]
        %v4300 = vld [vmem:[%s4298 + $0x8] sm:$0xff]
        %v4301 = vld [vmem:[%s4298 + $0x10] sm:$0xff]
        %v4302 = vld [vmem:[%s4298 + $0x18] sm:$0xff]
        %v4303 = vld [vmem:[%s4298 + $0x20] sm:$0xff]
        %v4304 = vld [vmem:[%s4298 + $0x28] sm:$0xff]
        %v4305 = vld [vmem:[%s4298 + $0x30] sm:$0xff]
        %v4306 = vld [vmem:[%s4298 + $0x38] sm:$0xff]
        %v4307 = vlaneseq
        %v4308 = vshrl.u32 %v4307, 7
        %v4309 = vsub.s32 5, %v4308
        %v4310 = vrot.slane %v2754, %v4309
        %v4312 = vsel %vm2678, %v4297, 0
        %4314 = vmatprep.subr.mxu0 0.0
        %4315 = vmatpush1.msra.mxu0 %v4299
        %4316 = vmatprep.subr.mxu0 0.0
        %4317 = vmatpush1.msra.mxu0 %v4300
        %4318 = vmatprep.subr.mxu0 0.0
        %4319 = vmatpush1.msra.mxu0 %v4301
        %4320 = vmatprep.subr.mxu0 0.0
        %4321 = vmatpush1.msra.mxu0 %v4302
        %4322 = vmatprep.subr.mxu0 0.0
        %4323 = vmatpush1.msra.mxu0 %v4303
        %4324 = vmatprep.subr.mxu0 0.0
        %4325 = vmatpush1.msra.mxu0 %v4304
        %4326 = vmatprep.subr.mxu0 0.0
        %4327 = vmatpush1.msra.mxu0 %v4305
        %4328 = vmatprep.subr.mxu0 0.0
        %4329 = vmatpush1.msra.mxu0 %v4306
        %4330 = vmatprep.subr.mxu0 0.0
        %4331 = vmatpush1.msra.mxu0 0.0
        %4332 = vmatprep.subr.mxu0 0.0
        %4333 = vmatpush1.msra.mxu0 0.0
        %4334 = vmatprep.subr.mxu0 0.0
        %4335 = vmatpush1.msra.mxu0 0.0
        %4336 = vmatprep.subr.mxu0 0.0
        %4337 = vmatpush1.msra.mxu0 0.0
        %4338 = vmatprep.subr.mxu0 0.0
        %4339 = vmatpush1.msra.mxu0 0.0
        %4340 = vmatprep.subr.mxu0 0.0
        %4341 = vmatpush1.msra.mxu0 0.0
        %4342 = vmatprep.subr.mxu0 0.0
        %4343 = vmatpush1.msra.mxu0 0.0
        %4344 = vmatprep.subr.mxu0 0.0
        %4345 = vmatpush1.msra.mxu0 0.0
        %4346 = vmatprep.subr.mxu0 0.0
        %4347 = vmatpush1.msra.mxu0 0.0
        %4348 = vmatprep.subr.mxu0 0.0
        %4349 = vmatpush1.msra.mxu0 0.0
        %4350 = vmatprep.subr.mxu0 0.0
        %4351 = vmatpush1.msra.mxu0 0.0
        %4352 = vmatprep.subr.mxu0 0.0
        %4353 = vmatpush1.msra.mxu0 0.0
        %4354 = vmatprep.subr.mxu0 0.0
        %4355 = vmatpush1.msra.mxu0 0.0
        %4356 = vmatprep.subr.mxu0 0.0
        %4357 = vmatpush1.msra.mxu0 0.0
        %4358 = vmatprep.subr.mxu0 0.0
        %4359 = vmatpush1.msra.mxu0 0.0
        %4360 = vmatprep.subr.mxu0 0.0
        %4361 = vmatpush1.msra.mxu0 0.0
        %4362 = vmatprep.subr.mxu0 0.0
        %4363 = vmatpush1.msra.mxu0 0.0
        %4364 = vmatprep.subr.mxu0 0.0
        %4365 = vmatpush1.msra.mxu0 0.0
        %4366 = vmatprep.subr.mxu0 0.0
        %4367 = vmatpush1.msra.mxu0 0.0
        %4368 = vmatprep.subr.mxu0 0.0
        %4369 = vmatpush1.msra.mxu0 0.0
        %4370 = vmatprep.subr.mxu0 0.0
        %4371 = vmatpush1.msra.mxu0 0.0
        %4372 = vmatprep.subr.mxu0 0.0
        %4373 = vmatpush1.msra.mxu0 0.0
        %4374 = vmatprep.subr.mxu0 0.0
        %4375 = vmatpush1.msra.mxu0 0.0
        %4376 = vmatprep.subr.mxu0 0.0
        %4377 = vmatpush1.msra.mxu0 0.0
        %4378 = vmatprep.mubr.f32.mxu0 0.0
        %4379 = vmatmul.mubr.f32.gmra.mrb[0].mxu0 %v4312
        %v4380 = vpop.f32.mrb[0].mxu0
        %v4381 = vadd.f32 %v4310, %v4380
        %v4382 = vpop.f32.mrb[0].mxu0
        %4383 = vdwg.mxu0
        %v4384 = vadd.f32 %v4183, %v4381
        %v4385 = vld [vmem:[%s15] sm:$0x1]
        %v4386 = vld [vmem:[%s15 + $0x1] sm:$0x1]
        %v4387 = vsel %vm804, %v4384, 0.0
        %4388 = vadd.xlane.f32.xlu0 %v4387
        %v4389 = vpop.xlane.xlu0 %4388
        %v4390 = vmul.f32 %v4389, %v1103
        %v4391 = vsub.f32 %v4384, %v4390
        %v4392 = vmul.f32 %v4391, %v4391
        %v4393 = vsel %vm804, %v4392, 0.0
        %4394 = vadd.xlane.f32.xlu0 %v4393
        %v4395 = vpop.xlane.xlu0 %4394
        %v4396 = vmul.f32 %v4395, %v1103
        %v4397 = vadd.f32 %v4396, 1e-12
        %v4398 = vrsqrt.pop %v4397
        %v4399 = vmul.f32 %v4391, %v4398
        %v4400 = vlaneseq
        %v4401 = vshrl.u32 %v4400, 7
        %v4402 = vsub.s32 0, %v4401
        %v4403 = vrot.slane %v4385, %v4402
        %v4404 = vmul.f32 %v4403, %v4399
        %v4405 = vlaneseq
        %v4406 = vshrl.u32 %v4405, 7
        %v4407 = vsub.s32 0, %v4406
        %v4408 = vrot.slane %v4386, %v4407
        %v4409 = vadd.f32 %v4404, %v4408
        %v4410 = vsel %vm804, %v4409, -inf
        %v4411 = vrot.slane %v4410, 4
        %v4412 = vmax.f32 %v4410, %v4411
        %v4413 = vrot.slane %v4412, 2
        %v4414 = vmax.f32 %v4412, %v4413
        %v4415 = vrot.slane %v4414, 1
        %v4416 = vmax.f32 %v4414, %v4415
        %v4417 = vsel %vm804, %v4409, 0.0
        %v4418 = vrot.slane %v4417, 4
        %v4419 = vadd.f32 %v4417, %v4418
        %v4420 = vrot.slane %v4419, 2
        %v4421 = vadd.f32 %v4419, %v4420
        %v4422 = vrot.slane %v4421, 1
        %v4423 = vadd.f32 %v4421, %v4422
        %v4424 = vrcp.pop 8.0
        %v4425 = vmul.f32 %v4423, %v4424
        %4427 = vrot.lane.b32.xlu0 %v4416, 32
        %v4428 = vpop.permute.xlu0 %4427
        %4431 = vrot.lane.b32.xlu0 %v4425, 64
        %v4432 = vpop.permute.xlu0 %4431
        %v4434 = vsel %vm804, %v4409, %v4428
        %v4435 = vsel %vm2678, %v4434, %v4432
        %v4436 = vld [vmem:[%s16] sm:$0xff]
        %v4437 = vld [vmem:[%s16 + $0x8] sm:$0xff]
        %v4438 = vld [vmem:[%s16 + $0x10] sm:$0xff]
        %v4439 = vld [vmem:[%s16 + $0x18] sm:$0xff]
        %v4440 = vld [vmem:[%s16 + $0x20] sm:$0xff]
        %v4441 = vld [vmem:[%s16 + $0x28] sm:$0xff]
        %v4442 = vld [vmem:[%s16 + $0x30] sm:$0xff]
        %v4443 = vld [vmem:[%s16 + $0x38] sm:$0xff]
        %v4444 = vld [vmem:[%s16 + $0x40] sm:$0xff]
        %v4445 = vld [vmem:[%s16 + $0x48] sm:$0xff]
        %v4446 = vld [vmem:[%s16 + $0x50] sm:$0xff]
        %v4447 = vld [vmem:[%s16 + $0x58] sm:$0xff]
        %v4448 = vld [vmem:[%s17] sm:$0x1]
        %vm4449 = vcmask 785408
        %v4451 = vsel %vm4449, %v4435, 0
        %4453 = vmatprep.subr.mxu0 0.0
        %4454 = vmatpush1.msra.mxu0 %v4436
        %4455 = vmatprep.subr.mxu0 0.0
        %4456 = vmatpush1.msra.mxu0 %v4437
        %4457 = vmatprep.subr.mxu0 0.0
        %4458 = vmatpush1.msra.mxu0 %v4438
        %4459 = vmatprep.subr.mxu0 0.0
        %4460 = vmatpush1.msra.mxu0 %v4439
        %4461 = vmatprep.subr.mxu0 0.0
        %4462 = vmatpush1.msra.mxu0 %v4440
        %4463 = vmatprep.subr.mxu0 0.0
        %4464 = vmatpush1.msra.mxu0 %v4441
        %4465 = vmatprep.subr.mxu0 0.0
        %4466 = vmatpush1.msra.mxu0 %v4442
        %4467 = vmatprep.subr.mxu0 0.0
        %4468 = vmatpush1.msra.mxu0 %v4443
        %4469 = vmatprep.subr.mxu0 0.0
        %4470 = vmatpush1.msra.mxu0 %v4444
        %4471 = vmatprep.subr.mxu0 0.0
        %4472 = vmatpush1.msra.mxu0 %v4445
        %4473 = vmatprep.subr.mxu0 0.0
        %4474 = vmatpush1.msra.mxu0 %v4446
        %4475 = vmatprep.subr.mxu0 0.0
        %4476 = vmatpush1.msra.mxu0 %v4447
        %4477 = vmatprep.subr.mxu0 0.0
        %4478 = vmatpush1.msra.mxu0 0.0
        %4479 = vmatprep.subr.mxu0 0.0
        %4480 = vmatpush1.msra.mxu0 0.0
        %4481 = vmatprep.subr.mxu0 0.0
        %4482 = vmatpush1.msra.mxu0 0.0
        %4483 = vmatprep.subr.mxu0 0.0
        %4484 = vmatpush1.msra.mxu0 0.0
        %4485 = vmatprep.subr.mxu0 0.0
        %4486 = vmatpush1.msra.mxu0 0.0
        %4487 = vmatprep.subr.mxu0 0.0
        %4488 = vmatpush1.msra.mxu0 0.0
        %4489 = vmatprep.subr.mxu0 0.0
        %4490 = vmatpush1.msra.mxu0 0.0
        %4491 = vmatprep.subr.mxu0 0.0
        %4492 = vmatpush1.msra.mxu0 0.0
        %4493 = vmatprep.subr.mxu0 0.0
        %4494 = vmatpush1.msra.mxu0 0.0
        %4495 = vmatprep.subr.mxu0 0.0
        %4496 = vmatpush1.msra.mxu0 0.0
        %4497 = vmatprep.subr.mxu0 0.0
        %4498 = vmatpush1.msra.mxu0 0.0
        %4499 = vmatprep.subr.mxu0 0.0
        %4500 = vmatpush1.msra.mxu0 0.0
        %4501 = vmatprep.subr.mxu0 0.0
        %4502 = vmatpush1.msra.mxu0 0.0
        %4503 = vmatprep.subr.mxu0 0.0
        %4504 = vmatpush1.msra.mxu0 0.0
        %4505 = vmatprep.subr.mxu0 0.0
        %4506 = vmatpush1.msra.mxu0 0.0
        %4507 = vmatprep.subr.mxu0 0.0
        %4508 = vmatpush1.msra.mxu0 0.0
        %4509 = vmatprep.subr.mxu0 0.0
        %4510 = vmatpush1.msra.mxu0 0.0
        %4511 = vmatprep.subr.mxu0 0.0
        %4512 = vmatpush1.msra.mxu0 0.0
        %4513 = vmatprep.subr.mxu0 0.0
        %4514 = vmatpush1.msra.mxu0 0.0
        %4515 = vmatprep.subr.mxu0 0.0
        %4516 = vmatpush1.msra.mxu0 0.0
        %4517 = vmatprep.mubr.f32.mxu0 0.0
        %4518 = vmatmul.mubr.f32.gmra.mrb[0].mxu0 %v4451
        %v4519 = vpop.f32.mrb[0].mxu0
        %v4520 = vadd.f32 %v4448, %v4519
        %v4521 = vpop.f32.mrb[0].mxu0
        %4522 = vdwg.mxu0
        %v4523 = vtanh.pop %v4520
        %v4524 = vld [vmem:[%s18] sm:$0xff]
        %v4525 = vld [vmem:[%s18 + $0x8] sm:$0xff]
        %v4526 = vld [vmem:[%s18 + $0x10] sm:$0xff]
        %v4527 = vld [vmem:[%s18 + $0x18] sm:$0xff]
        %v4528 = vld [vmem:[%s18 + $0x20] sm:$0xff]
        %v4529 = vld [vmem:[%s18 + $0x28] sm:$0xff]
        %v4530 = vld [vmem:[%s18 + $0x30] sm:$0xff]
        %v4531 = vld [vmem:[%s18 + $0x38] sm:$0xff]
        %v4532 = vld [vmem:[%s18 + $0x40] sm:$0xff]
        %v4533 = vld [vmem:[%s18 + $0x48] sm:$0xff]
        %v4534 = vld [vmem:[%s18 + $0x50] sm:$0xff]
        %v4535 = vld [vmem:[%s18 + $0x58] sm:$0xff]
        %v4536 = vld [vmem:[%s19] sm:$0x1]
        %v4538 = vsel %vm4449, %v4523, 0
        %4540 = vmatprep.subr.mxu0 0.0
        %4541 = vmatpush1.msra.mxu0 %v4524
        %4542 = vmatprep.subr.mxu0 0.0
        %4543 = vmatpush1.msra.mxu0 %v4525
        %4544 = vmatprep.subr.mxu0 0.0
        %4545 = vmatpush1.msra.mxu0 %v4526
        %4546 = vmatprep.subr.mxu0 0.0
        %4547 = vmatpush1.msra.mxu0 %v4527
        %4548 = vmatprep.subr.mxu0 0.0
        %4549 = vmatpush1.msra.mxu0 %v4528
        %4550 = vmatprep.subr.mxu0 0.0
        %4551 = vmatpush1.msra.mxu0 %v4529
        %4552 = vmatprep.subr.mxu0 0.0
        %4553 = vmatpush1.msra.mxu0 %v4530
        %4554 = vmatprep.subr.mxu0 0.0
        %4555 = vmatpush1.msra.mxu0 %v4531
        %4556 = vmatprep.subr.mxu0 0.0
        %4557 = vmatpush1.msra.mxu0 %v4532
        %4558 = vmatprep.subr.mxu0 0.0
        %4559 = vmatpush1.msra.mxu0 %v4533
        %4560 = vmatprep.subr.mxu0 0.0
        %4561 = vmatpush1.msra.mxu0 %v4534
        %4562 = vmatprep.subr.mxu0 0.0
        %4563 = vmatpush1.msra.mxu0 %v4535
        %4564 = vmatprep.subr.mxu0 0.0
        %4565 = vmatpush1.msra.mxu0 0.0
        %4566 = vmatprep.subr.mxu0 0.0
        %4567 = vmatpush1.msra.mxu0 0.0
        %4568 = vmatprep.subr.mxu0 0.0
        %4569 = vmatpush1.msra.mxu0 0.0
        %4570 = vmatprep.subr.mxu0 0.0
        %4571 = vmatpush1.msra.mxu0 0.0
        %4572 = vmatprep.subr.mxu0 0.0
        %4573 = vmatpush1.msra.mxu0 0.0
        %4574 = vmatprep.subr.mxu0 0.0
        %4575 = vmatpush1.msra.mxu0 0.0
        %4576 = vmatprep.subr.mxu0 0.0
        %4577 = vmatpush1.msra.mxu0 0.0
        %4578 = vmatprep.subr.mxu0 0.0
        %4579 = vmatpush1.msra.mxu0 0.0
        %4580 = vmatprep.subr.mxu0 0.0
        %4581 = vmatpush1.msra.mxu0 0.0
        %4582 = vmatprep.subr.mxu0 0.0
        %4583 = vmatpush1.msra.mxu0 0.0
        %4584 = vmatprep.subr.mxu0 0.0
        %4585 = vmatpush1.msra.mxu0 0.0
        %4586 = vmatprep.subr.mxu0 0.0
        %4587 = vmatpush1.msra.mxu0 0.0
        %4588 = vmatprep.subr.mxu0 0.0
        %4589 = vmatpush1.msra.mxu0 0.0
        %4590 = vmatprep.subr.mxu0 0.0
        %4591 = vmatpush1.msra.mxu0 0.0
        %4592 = vmatprep.subr.mxu0 0.0
        %4593 = vmatpush1.msra.mxu0 0.0
        %4594 = vmatprep.subr.mxu0 0.0
        %4595 = vmatpush1.msra.mxu0 0.0
        %4596 = vmatprep.subr.mxu0 0.0
        %4597 = vmatpush1.msra.mxu0 0.0
        %4598 = vmatprep.subr.mxu0 0.0
        %4599 = vmatpush1.msra.mxu0 0.0
        %4600 = vmatprep.subr.mxu0 0.0
        %4601 = vmatpush1.msra.mxu0 0.0
        %4602 = vmatprep.subr.mxu0 0.0
        %4603 = vmatpush1.msra.mxu0 0.0
        %4604 = vmatprep.mubr.f32.mxu0 0.0
        %4605 = vmatmul.mubr.f32.gmra.mrb[0].mxu0 %v4538
        %v4606 = vpop.f32.mrb[0].mxu0
        %v4607 = vadd.f32 %v4536, %v4606
        %v4608 = vpop.f32.mrb[0].mxu0
        %4609 = vdwg.mxu0
        %4610 = vst [vmem:[%s791] sm:$0x1] %v4607
        %s4611 = sand.u32 %s479, 1
        %s4612 = scalar_lea.sflag [#allocation4], %s4611
        %s4613 = sand.u32 %s479, 1
        %s4614 = scalar_lea.vmem [#allocation18], %s4613
        // Predicated region
        $region141: #{tpu_custom_call.1} parent=99 // pred_check
          %p4615 = pneg %p489
        $region142: #{tpu_custom_call.1} parent=99 // pred_check_branch
          %4617 = sbr.rel (%p4615) target = $region144
        $region143: #{tpu_custom_call.1} parent=99 // pred_region
          %s4619 = ssub.s32 16, 16
          %4620 = vsyncadd %s4612, %s4619
          %s4621 = smul.addr %s41, 16
          %s4622 = scalar_lea.hbm %s20, %s4621
          %s4624 = sshll.u32 %s4614, 4
          %s4625 = int_to_ptr.vmem [resolvable:$true] %s4624
          %4627 = dma.vmem_to_hbm [thread:$0]  %s4625, 16, %s4622, %s4612
        $region144: #{tpu_custom_call.1} parent=99 // pred_fallthru
          _
      $region100: #{tpu_custom_call.1} parent=5 // pred_fallthru
        _
      %p4628 = scmp.le.s32.totalorder 2, %s36
      // Predicated region
      $region145: #{tpu_custom_call.1} parent=5 // pred_check
        %p4629 = pneg %p4628
      $region146: #{tpu_custom_call.1} parent=5 // pred_check_branch
        %4631 = sbr.rel (%p4629) target = $region148
      $region147: #{tpu_custom_call.1} parent=5 // pred_region
        %s4632 = ssub.s32 %s36, 2
        // Predicated region
        $region149: #{tpu_custom_call.1} parent=147 // pred_check
          %p4633 = pneg %p495
        $region150: #{tpu_custom_call.1} parent=147 // pred_check_branch
          %4635 = sbr.rel (%p4633) target = $region152
        $region151: #{tpu_custom_call.1} parent=147 // pred_region
          %s4636 = sand.u32 %s480, 1
          %s4637 = scalar_lea.sflag [#allocation4], %s4636
          %s4638 = sand.u32 %s480, 1
          %s4639 = scalar_lea.vmem [#allocation18], %s4638
          %4640 = dma.done %s4637, 16
        $region152: #{tpu_custom_call.1} parent=147 // pred_fallthru
          _
      $region148: #{tpu_custom_call.1} parent=5 // pred_fallthru
        _
    $region6: #{tpu_custom_call.1} parent=1 // loop_footer
      %s40 = sadd.s32 1, %s36
    $region7: #{tpu_custom_call.1} parent=1 // loop_footer_branch
      %35 = sbr.rel target = $region3
    $region8: #{tpu_custom_call.1} parent=1 // loop_exit
      _
    %4641 = vsyncpa [#allocation3], 1
    %s4642 = scalar_lea.sflag [#allocation3], 1
    %4643 = vsyncpa %s4642, 1
    %4644 = vsyncpa [#allocation6], 1
    %4645 = vsyncpa [#allocation10], 1
    %4646 = vsyncpa [#allocation13], 1
    %4647 = vsyncpa [#allocation16], 1
    %4648 = vsyncpa [#allocation4], 1
    %s4649 = scalar_lea.sflag [#allocation4], 1
    %4650 = vsyncpa %s4649, 1

</llo_original>
